<compile_context>
chip_gen: v7x
topology: tpu7x:2x2x1
jax: 0.10.0
libtpu: 0.0.40
codegen_flags: <defaults>
</compile_context>

<pallas_src>
import functools

import numpy as np

import jax
import jax.numpy as jnp
from jax.experimental import pallas as pl
from jax.experimental.pallas import tpu as pltpu


# Lane-dense padded widths.
_CP = 128     # conv channels 12 / 24 -> 128
_F1P = 256    # fc1 out 200 -> 256
_F2P = 128    # fc2 out 100 -> 128
_OUTP = 128   # fc3 out 4 -> 128

_TAPS = ((0, 0), (0, 1), (1, 0), (1, 1))   # (dy, dx), t = dy*2 + dx


# ---------------------------------------------------------------------------
# Fused Pallas kernel: conv1 -> pool1 -> conv2 -> pool2 -> fc1 -> fc2 -> fc3
# ---------------------------------------------------------------------------

def _pigs_fused_kernel(p1_ref, w1_ref, b1_ref,
                       gp1_ref, gc2_ref, w2_ref, b2_ref, gp2_ref,
                       gfl_ref, wf1_ref, bf1_ref, wf2_ref, bf2_ref,
                       wf3_ref, bf3_ref, out_ref, *, n_flat):
    f32 = jnp.float32

    # conv1 (im2col matmul) + bias + ReLU                    -> (M1, 128)
    c1 = jnp.dot(p1_ref[...], w1_ref[...], preferred_element_type=f32)
    c1 = jnp.maximum(c1 + b1_ref[...], 0.0)

    # 2x2 max-pool #1: max over 4 one-hot gather matmuls     -> (Mp1, 128)
    pool1 = jnp.dot(gp1_ref[0], c1, preferred_element_type=f32)
    for t in range(1, 4):
        pool1 = jnp.maximum(
            pool1, jnp.dot(gp1_ref[t], c1, preferred_element_type=f32))

    # conv2: sum over taps of (gather @ pool1) @ W2_tap      -> (M2, 128)
    c2 = jnp.dot(jnp.dot(gc2_ref[0], pool1, preferred_element_type=f32),
                 w2_ref[0], preferred_element_type=f32)
    for t in range(1, 4):
        patch = jnp.dot(gc2_ref[t], pool1, preferred_element_type=f32)
        c2 = c2 + jnp.dot(patch, w2_ref[t], preferred_element_type=f32)
    c2 = jnp.maximum(c2 + b2_ref[...], 0.0)

    # 2x2 max-pool #2                                        -> (Mp2, 128)
    pool2 = jnp.dot(gp2_ref[0], c2, preferred_element_type=f32)
    for t in range(1, 4):
        pool2 = jnp.maximum(
            pool2, jnp.dot(gp2_ref[t], c2, preferred_element_type=f32))

    # flatten (PyTorch (C,H,W) order folded into per-position fc1 weight
    # slices) + fc1 + ReLU                                   -> (N, 256)
    h1 = jnp.dot(jnp.dot(gfl_ref[0], pool2, preferred_element_type=f32),
                 wf1_ref[0], preferred_element_type=f32)
    for s in range(1, n_flat):
        row = jnp.dot(gfl_ref[s], pool2, preferred_element_type=f32)
        h1 = h1 + jnp.dot(row, wf1_ref[s], preferred_element_type=f32)
    h1 = jnp.maximum(h1 + bf1_ref[...], 0.0)
    # TODO(synk): dropout(0.3) skipped (inference identity).

    # fc2 + ReLU                                             -> (N, 128)
    h2 = jnp.maximum(
        jnp.dot(h1, wf2_ref[...], preferred_element_type=f32) + bf2_ref[...],
        0.0)

    # fc3 (real logits live in columns [0:4])                -> (N, 128)
    out_ref[...] = (jnp.dot(h2, wf3_ref[...], preferred_element_type=f32)
                    + bf3_ref[...]).astype(out_ref.dtype)


def _full_spec(shape):
    nd = len(shape)
    return pl.BlockSpec(shape, lambda *_, _nd=nd: (0,) * _nd)


def pigs_forward(x_nchw, packed):
    """Fused forward pass.  x_nchw: (N, 3, H, W) f32 -> (N, 4) f32 logits."""
    N, Cin, H, W = x_nchw.shape
    Ho, Wo = H - 1, W - 1

    # conv1 im2col stays in the (tiny) wrapper; everything downstream is fused.
    x = jnp.transpose(x_nchw, (0, 2, 3, 1))                 # NHWC
    patches = jnp.stack(
        [x[:, dy:dy + Ho, dx:dx + Wo, :] for dy, dx in _TAPS], axis=3)
    patches = patches.reshape(N * Ho * Wo, 4 * Cin).astype(jnp.float32)

    ins = (patches, packed["w1"], packed["b1"],
           packed["gp1"], packed["gc2"], packed["w2"], packed["b2"],
           packed["gp2"], packed["gfl"], packed["wf1"], packed["bf1"],
           packed["wf2"], packed["bf2"], packed["wf3"], packed["bf3"])

    kernel = functools.partial(_pigs_fused_kernel,
                               n_flat=packed["gfl"].shape[0])
    out = pl.pallas_call(
        kernel,
        out_shape=jax.ShapeDtypeStruct((N, _OUTP), jnp.float32),
        grid=(1,),
        in_specs=[_full_spec(a.shape) for a in ins],
        out_specs=_full_spec((N, _OUTP)),
        compiler_params=pltpu.CompilerParams(
            dimension_semantics=("arbitrary",)),
    )(*ins)
    return out[:, :4]


# ---------------------------------------------------------------------------
# One-time parameter packing (padding, pre-transposes, gather matrices)
# ---------------------------------------------------------------------------

def _pool_gathers(N, Hc, Wc):
    """4 one-hot (N*Hp*Wp, N*Hc*Wc) tap matrices for 2x2 / stride-2 max-pool."""
    Hp, Wp = Hc // 2, Wc // 2
    mats = np.zeros((4, N * Hp * Wp, N * Hc * Wc), np.float32)
    for n in range(N):
        for pi in range(Hp):
            for pj in range(Wp):
                d = (n * Hp + pi) * Wp + pj
                for t, (dy, dx) in enumerate(_TAPS):
                    s = (n * Hc + 2 * pi + dy) * Wc + 2 * pj + dx
                    mats[t, d, s] = 1.0
    return jnp.asarray(mats)


def _conv_patch_gathers(N, Hi, Wi):
    """4 one-hot (N*Ho*Wo, N*Hi*Wi) im2col tap matrices for a 2x2 / stride-1 conv."""
    Ho, Wo = Hi - 1, Wi - 1
    mats = np.zeros((4, N * Ho * Wo, N * Hi * Wi), np.float32)
    for n in range(N):
        for i in range(Ho):
            for j in range(Wo):
                d = (n * Ho + i) * Wo + j
                for t, (dy, dx) in enumerate(_TAPS):
                    s = (n * Hi + i + dy) * Wi + j + dx
                    mats[t, d, s] = 1.0
    return jnp.asarray(mats)


def _flatten_selectors(N, S):
    """(S, N, N*S) one-hot selectors: pick spatial position s of image n."""
    mats = np.zeros((S, N, N * S), np.float32)
    for s in range(S):
        for n in range(N):
            mats[s, n, n * S + s] = 1.0
    return jnp.asarray(mats)


def pack_params(params, N, H, W):
    """Pad / pre-transpose all weights and build the constant gather matrices
    for a fixed input geometry.  Runs once (not per forward pass)."""
    C1, Cin = params["w1"].shape[0], params["w1"].shape[1]
    C2 = params["w2"].shape[0]
    F1 = params["wfc1"].shape[0]
    F2 = params["wfc2"].shape[0]
    NC = params["wfc3"].shape[0]

    H1, W1 = H - 1, W - 1             # conv1 out
    Hp1, Wp1 = H1 // 2, W1 // 2       # pool1 out
    H2, W2 = Hp1 - 1, Wp1 - 1         # conv2 out
    Hp2, Wp2 = H2 // 2, W2 // 2       # pool2 out
    S = Hp2 * Wp2
    assert params["wfc1"].shape[1] == C2 * S

    # conv1: (C1, Cin, kh, kw) -> (kh, kw, Cin, C1) -> (4*Cin, C1), pad cols.
    w1 = jnp.transpose(params["w1"], (2, 3, 1, 0)).reshape(4 * Cin, C1)
    w1 = jnp.pad(w1, ((0, 0), (0, _CP - C1)))
    b1 = jnp.pad(params["b1"], (0, _CP - C1)).reshape(1, _CP)

    # conv2: per-tap (Cin_pad, Cout_pad).
    w2 = jnp.transpose(params["w2"], (2, 3, 1, 0)).reshape(4, C1, C2)
    w2 = jnp.pad(w2, ((0, 0), (0, _CP - C1), (0, _CP - C2)))
    b2 = jnp.pad(params["b2"], (0, _CP - C2)).reshape(1, _CP)

    # fc1: feature k = c*S + s  ->  per-s weight slice (C_pad, F1_pad).
    wf1 = jnp.transpose(params["wfc1"].reshape(F1, C2, S), (2, 1, 0))
    wf1 = jnp.pad(wf1, ((0, 0), (0, _CP - C2), (0, _F1P - F1)))
    bf1 = jnp.pad(params["bfc1"], (0, _F1P - F1)).reshape(1, _F1P)

    wf2 = jnp.pad(params["wfc2"].T, ((0, _F1P - F1), (0, _F2P - F2)))
    bf2 = jnp.pad(params["bfc2"], (0, _F2P - F2)).reshape(1, _F2P)

    wf3 = jnp.pad(params["wfc3"].T, ((0, _F2P - F2), (0, _OUTP - NC)))
    bf3 = jnp.pad(params["bfc3"], (0, _OUTP - NC)).reshape(1, _OUTP)

    return {
        "w1": w1, "b1": b1, "w2": w2, "b2": b2,
        "wf1": wf1, "bf1": bf1, "wf2": wf2, "bf2": bf2,
        "wf3": wf3, "bf3": bf3,
        "gp1": _pool_gathers(N, H1, W1),
        "gc2": _conv_patch_gathers(N, Hp1, Wp1),
        "gp2": _pool_gathers(N, H2, W2),
        "gfl": _flatten_selectors(N, S),
    }


# ---------------------------------------------------------------------------
# Pure-JAX reference (independent of the packing path) and init
# ---------------------------------------------------------------------------

def reference_forward(x_nchw, params):
    x = jnp.transpose(x_nchw, (0, 2, 3, 1))

    def conv_relu(x, w, b):
        N, H, W, Cin = x.shape
        Ho, Wo = H - 1, W - 1
        Cout = w.shape[0]
        patches = jnp.stack(
            [x[:, dy:dy + Ho, dx:dx + Wo, :] for dy, dx in _TAPS], axis=3)
        patches = patches.reshape(N * Ho * Wo, 4 * Cin)
        wmat = jnp.transpose(w, (2, 3, 1, 0)).reshape(4 * Cin, Cout)
        return jnp.maximum(patches @ wmat + b, 0.0).reshape(N, Ho, Wo, Cout)

    def pool(x):
        N, H, W, C = x.shape
        x = x[:, :2 * (H // 2), :2 * (W // 2), :]
        taps = [x[:, dy::2, dx::2, :] for dy, dx in _TAPS]
        return functools.reduce(jnp.maximum, taps)

    x = pool(conv_relu(x, params["w1"], params["b1"]))
    x = pool(conv_relu(x, params["w2"], params["b2"]))
    N = x.shape[0]
    feat = jnp.transpose(x, (0, 3, 1, 2)).reshape(N, -1)   # (C, H, W) order
    h1 = jnp.maximum(feat @ params["wfc1"].T + params["bfc1"], 0.0)
    h2 = jnp.maximum(h1 @ params["wfc2"].T + params["bfc2"], 0.0)
    return h2 @ params["wfc3"].T + params["bfc3"]


def init_params(key, to_linear):
    ks = jax.random.split(key, 10)

    def rn(k, shape, scale):
        return scale * jax.random.normal(k, shape, dtype=jnp.float32)

    return {
        "w1": rn(ks[0], (12, 3, 2, 2), 0.25),   # conv1 (3 -> 12, k=2)
        "b1": rn(ks[1], (12,), 0.10),
        "w2": rn(ks[2], (24, 12, 2, 2), 0.12),  # conv2 (12 -> 24, k=2)
        "b2": rn(ks[3], (24,), 0.10),
        "wfc1": rn(ks[4], (200, to_linear), 0.06),
        "bfc1": rn(ks[5], (200,), 0.05),
        "wfc2": rn(ks[6], (100, 200), 0.07),
        "bfc2": rn(ks[7], (100,), 0.05),
        "wfc3": rn(ks[8], (4, 100), 0.10),
        "bfc3": rn(ks[9], (4,), 0.05),
    }


if __name__ == "__main__":
    key = jax.random.PRNGKey(0)
    kx, kp = jax.random.split(key)

    # Small shapes consistent with the module (batch=2, 3 channels, 16x16).
    N, Cin, H, W = 2, 3, 16, 16
    x = jax.random.normal(kx, (N, Cin, H, W), dtype=jnp.float32)

    # _to_linear derived exactly the way Pigs.__init__ does from the input
    # size: conv(k=2) -> pool(2) -> conv(k=2) -> pool(2)  =>  24*3*3 = 216.
    hp1, wp1 = (H - 1) // 2, (W - 1) // 2
    hp2, wp2 = (hp1 - 1) // 2, (wp1 - 1) // 2
    to_linear = 24 * hp2 * wp2

    params = init_params(kp, to_linear)
    packed = pack_params(params, N, H, W)

    fwd = jax.jit(pigs_forward)
    out = jax.block_until_ready(fwd(x, packed))
    assert out.shape == (N, 4) and out.dtype == jnp.float32
    assert bool(jnp.all(jnp.isfinite(out)))

    ref = jax.block_until_ready(reference_forward(x, params))
    diff = jnp.abs(out - ref)
    tol = 2e-2 + 2e-2 * jnp.abs(ref)
    assert bool(jnp.all(diff <= tol)), f"max diff {float(jnp.max(diff)):.3e}"

    print("KERNEL_OK")
</pallas_src>

<mosaic_0001>
module attributes {stable_mosaic.version = 11 : i64} {
  func.func @_pigs_fused_kernel(%arg0: i32, %arg1: memref<450x12xf32, #tpu.memory_space<vmem>>, %arg2: memref<12x128xf32, #tpu.memory_space<vmem>>, %arg3: memref<1x128xf32, #tpu.memory_space<vmem>>, %arg4: memref<4x98x450xf32, #tpu.memory_space<vmem>>, %arg5: memref<4x72x98xf32, #tpu.memory_space<vmem>>, %arg6: memref<4x128x128xf32, #tpu.memory_space<vmem>>, %arg7: memref<1x128xf32, #tpu.memory_space<vmem>>, %arg8: memref<4x18x72xf32, #tpu.memory_space<vmem>>, %arg9: memref<9x2x18xf32, #tpu.memory_space<vmem>>, %arg10: memref<9x128x256xf32, #tpu.memory_space<vmem>>, %arg11: memref<1x256xf32, #tpu.memory_space<vmem>>, %arg12: memref<256x128xf32, #tpu.memory_space<vmem>>, %arg13: memref<1x128xf32, #tpu.memory_space<vmem>>, %arg14: memref<128x128xf32, #tpu.memory_space<vmem>>, %arg15: memref<1x128xf32, #tpu.memory_space<vmem>>, %arg16: memref<2x128xf32, #tpu.memory_space<vmem>>) attributes {dimension_semantics = [#tpu.dimension_semantics<arbitrary>], iteration_bounds = array<i64: 1>, scalar_prefetch = 0 : i64, scratch_operands = 0 : i64, tpu.core_type = #tpu.core_type<tc>, window_params = [{pipeline_mode = #tpu.pipeline_mode<synchronous>, transform_indices = @transform_0, window_bounds = array<i64: 450, 12>}, {pipeline_mode = #tpu.pipeline_mode<synchronous>, transform_indices = @transform_1, window_bounds = array<i64: 12, 128>}, {pipeline_mode = #tpu.pipeline_mode<synchronous>, transform_indices = @transform_2, window_bounds = array<i64: 1, 128>}, {pipeline_mode = #tpu.pipeline_mode<synchronous>, transform_indices = @transform_3, window_bounds = array<i64: 4, 98, 450>}, {pipeline_mode = #tpu.pipeline_mode<synchronous>, transform_indices = @transform_4, window_bounds = array<i64: 4, 72, 98>}, {pipeline_mode = #tpu.pipeline_mode<synchronous>, transform_indices = @transform_5, window_bounds = array<i64: 4, 128, 128>}, {pipeline_mode = #tpu.pipeline_mode<synchronous>, transform_indices = @transform_6, window_bounds = array<i64: 1, 128>}, {pipeline_mode = #tpu.pipeline_mode<synchronous>, transform_indices = @transform_7, window_bounds = array<i64: 4, 18, 72>}, {pipeline_mode = #tpu.pipeline_mode<synchronous>, transform_indices = @transform_8, window_bounds = array<i64: 9, 2, 18>}, {pipeline_mode = #tpu.pipeline_mode<synchronous>, transform_indices = @transform_9, window_bounds = array<i64: 9, 128, 256>}, {pipeline_mode = #tpu.pipeline_mode<synchronous>, transform_indices = @transform_10, window_bounds = array<i64: 1, 256>}, {pipeline_mode = #tpu.pipeline_mode<synchronous>, transform_indices = @transform_11, window_bounds = array<i64: 256, 128>}, {pipeline_mode = #tpu.pipeline_mode<synchronous>, transform_indices = @transform_12, window_bounds = array<i64: 1, 128>}, {pipeline_mode = #tpu.pipeline_mode<synchronous>, transform_indices = @transform_13, window_bounds = array<i64: 128, 128>}, {pipeline_mode = #tpu.pipeline_mode<synchronous>, transform_indices = @transform_14, window_bounds = array<i64: 1, 128>}, {pipeline_mode = #tpu.pipeline_mode<synchronous>, transform_indices = @transform_15, window_bounds = array<i64: 2, 128>}]} {
    %c0 = arith.constant 0 : index
    %c0_0 = arith.constant 0 : index
    %0 = vector.load %arg1[%c0, %c0_0] : memref<450x12xf32, #tpu.memory_space<vmem>>, vector<450x12xf32>
    %c0_1 = arith.constant 0 : index
    %c0_2 = arith.constant 0 : index
    %1 = vector.load %arg2[%c0_1, %c0_2] : memref<12x128xf32, #tpu.memory_space<vmem>>, vector<12x128xf32>
    %cst = arith.constant dense<0.000000e+00> : vector<450x128xf32>
    %2 = tpu.matmul %0, %1, %cst {dimension_numbers = #tpu.dot_dimension_numbers<[1], [0], [0], [1], [0, 0, 1, 1], [], []>} : vector<450x12xf32>, vector<12x128xf32>, vector<450x128xf32> -> vector<450x128xf32>
    %c0_3 = arith.constant 0 : index
    %c0_4 = arith.constant 0 : index
    %3 = vector.load %arg3[%c0_3, %c0_4] : memref<1x128xf32, #tpu.memory_space<vmem>>, vector<1x128xf32>
    %4 = vector.broadcast %3 : vector<1x128xf32> to vector<450x128xf32>
    %5 = arith.addf %2, %4 : vector<450x128xf32>
    %cst_5 = arith.constant 0.000000e+00 : f32
    %6 = vector.broadcast %cst_5 : f32 to vector<450x128xf32>
    %7 = arith.maximumf %5, %6 : vector<450x128xf32>
    %c0_6 = arith.constant 0 : index
    %c0_7 = arith.constant 0 : index
    %c0_8 = arith.constant 0 : index
    %8 = vector.load %arg4[%c0_6, %c0_7, %c0_8] : memref<4x98x450xf32, #tpu.memory_space<vmem>>, vector<1x98x450xf32>
    %9 = vector.shape_cast %8 : vector<1x98x450xf32> to vector<98x450xf32>
    %cst_9 = arith.constant dense<0.000000e+00> : vector<98x128xf32>
    %10 = tpu.matmul %9, %7, %cst_9 {dimension_numbers = #tpu.dot_dimension_numbers<[1], [0], [0], [1], [0, 0, 1, 1], [], []>} : vector<98x450xf32>, vector<450x128xf32>, vector<98x128xf32> -> vector<98x128xf32>
    %c1 = arith.constant 1 : index
    %c0_10 = arith.constant 0 : index
    %c0_11 = arith.constant 0 : index
    %11 = vector.load %arg4[%c1, %c0_10, %c0_11] : memref<4x98x450xf32, #tpu.memory_space<vmem>>, vector<1x98x450xf32>
    %12 = vector.shape_cast %11 : vector<1x98x450xf32> to vector<98x450xf32>
    %cst_12 = arith.constant dense<0.000000e+00> : vector<98x128xf32>
    %13 = tpu.matmul %12, %7, %cst_12 {dimension_numbers = #tpu.dot_dimension_numbers<[1], [0], [0], [1], [0, 0, 1, 1], [], []>} : vector<98x450xf32>, vector<450x128xf32>, vector<98x128xf32> -> vector<98x128xf32>
    %14 = arith.maximumf %10, %13 : vector<98x128xf32>
    %c2 = arith.constant 2 : index
    %c0_13 = arith.constant 0 : index
    %c0_14 = arith.constant 0 : index
    %15 = vector.load %arg4[%c2, %c0_13, %c0_14] : memref<4x98x450xf32, #tpu.memory_space<vmem>>, vector<1x98x450xf32>
    %16 = vector.shape_cast %15 : vector<1x98x450xf32> to vector<98x450xf32>
    %cst_15 = arith.constant dense<0.000000e+00> : vector<98x128xf32>
    %17 = tpu.matmul %16, %7, %cst_15 {dimension_numbers = #tpu.dot_dimension_numbers<[1], [0], [0], [1], [0, 0, 1, 1], [], []>} : vector<98x450xf32>, vector<450x128xf32>, vector<98x128xf32> -> vector<98x128xf32>
    %18 = arith.maximumf %14, %17 : vector<98x128xf32>
    %c3 = arith.constant 3 : index
    %c0_16 = arith.constant 0 : index
    %c0_17 = arith.constant 0 : index
    %19 = vector.load %arg4[%c3, %c0_16, %c0_17] : memref<4x98x450xf32, #tpu.memory_space<vmem>>, vector<1x98x450xf32>
    %20 = vector.shape_cast %19 : vector<1x98x450xf32> to vector<98x450xf32>
    %cst_18 = arith.constant dense<0.000000e+00> : vector<98x128xf32>
    %21 = tpu.matmul %20, %7, %cst_18 {dimension_numbers = #tpu.dot_dimension_numbers<[1], [0], [0], [1], [0, 0, 1, 1], [], []>} : vector<98x450xf32>, vector<450x128xf32>, vector<98x128xf32> -> vector<98x128xf32>
    %22 = arith.maximumf %18, %21 : vector<98x128xf32>
    %c0_19 = arith.constant 0 : index
    %c0_20 = arith.constant 0 : index
    %c0_21 = arith.constant 0 : index
    %23 = vector.load %arg5[%c0_19, %c0_20, %c0_21] : memref<4x72x98xf32, #tpu.memory_space<vmem>>, vector<1x72x98xf32>
    %24 = vector.shape_cast %23 : vector<1x72x98xf32> to vector<72x98xf32>
    %cst_22 = arith.constant dense<0.000000e+00> : vector<72x128xf32>
    %25 = tpu.matmul %24, %22, %cst_22 {dimension_numbers = #tpu.dot_dimension_numbers<[1], [0], [0], [1], [0, 0, 1, 1], [], []>} : vector<72x98xf32>, vector<98x128xf32>, vector<72x128xf32> -> vector<72x128xf32>
    %c0_23 = arith.constant 0 : index
    %c0_24 = arith.constant 0 : index
    %c0_25 = arith.constant 0 : index
    %26 = vector.load %arg6[%c0_23, %c0_24, %c0_25] : memref<4x128x128xf32, #tpu.memory_space<vmem>>, vector<1x128x128xf32>
    %27 = vector.shape_cast %26 : vector<1x128x128xf32> to vector<128x128xf32>
    %cst_26 = arith.constant dense<0.000000e+00> : vector<72x128xf32>
    %28 = tpu.matmul %25, %27, %cst_26 {dimension_numbers = #tpu.dot_dimension_numbers<[1], [0], [0], [1], [0, 0, 1, 1], [], []>} : vector<72x128xf32>, vector<128x128xf32>, vector<72x128xf32> -> vector<72x128xf32>
    %c1_27 = arith.constant 1 : index
    %c0_28 = arith.constant 0 : index
    %c0_29 = arith.constant 0 : index
    %29 = vector.load %arg5[%c1_27, %c0_28, %c0_29] : memref<4x72x98xf32, #tpu.memory_space<vmem>>, vector<1x72x98xf32>
    %30 = vector.shape_cast %29 : vector<1x72x98xf32> to vector<72x98xf32>
    %cst_30 = arith.constant dense<0.000000e+00> : vector<72x128xf32>
    %31 = tpu.matmul %30, %22, %cst_30 {dimension_numbers = #tpu.dot_dimension_numbers<[1], [0], [0], [1], [0, 0, 1, 1], [], []>} : vector<72x98xf32>, vector<98x128xf32>, vector<72x128xf32> -> vector<72x128xf32>
    %c1_31 = arith.constant 1 : index
    %c0_32 = arith.constant 0 : index
    %c0_33 = arith.constant 0 : index
    %32 = vector.load %arg6[%c1_31, %c0_32, %c0_33] : memref<4x128x128xf32, #tpu.memory_space<vmem>>, vector<1x128x128xf32>
    %33 = vector.shape_cast %32 : vector<1x128x128xf32> to vector<128x128xf32>
    %cst_34 = arith.constant dense<0.000000e+00> : vector<72x128xf32>
    %34 = tpu.matmul %31, %33, %cst_34 {dimension_numbers = #tpu.dot_dimension_numbers<[1], [0], [0], [1], [0, 0, 1, 1], [], []>} : vector<72x128xf32>, vector<128x128xf32>, vector<72x128xf32> -> vector<72x128xf32>
    %35 = arith.addf %28, %34 : vector<72x128xf32>
    %c2_35 = arith.constant 2 : index
    %c0_36 = arith.constant 0 : index
    %c0_37 = arith.constant 0 : index
    %36 = vector.load %arg5[%c2_35, %c0_36, %c0_37] : memref<4x72x98xf32, #tpu.memory_space<vmem>>, vector<1x72x98xf32>
    %37 = vector.shape_cast %36 : vector<1x72x98xf32> to vector<72x98xf32>
    %cst_38 = arith.constant dense<0.000000e+00> : vector<72x128xf32>
    %38 = tpu.matmul %37, %22, %cst_38 {dimension_numbers = #tpu.dot_dimension_numbers<[1], [0], [0], [1], [0, 0, 1, 1], [], []>} : vector<72x98xf32>, vector<98x128xf32>, vector<72x128xf32> -> vector<72x128xf32>
    %c2_39 = arith.constant 2 : index
    %c0_40 = arith.constant 0 : index
    %c0_41 = arith.constant 0 : index
    %39 = vector.load %arg6[%c2_39, %c0_40, %c0_41] : memref<4x128x128xf32, #tpu.memory_space<vmem>>, vector<1x128x128xf32>
    %40 = vector.shape_cast %39 : vector<1x128x128xf32> to vector<128x128xf32>
    %cst_42 = arith.constant dense<0.000000e+00> : vector<72x128xf32>
    %41 = tpu.matmul %38, %40, %cst_42 {dimension_numbers = #tpu.dot_dimension_numbers<[1], [0], [0], [1], [0, 0, 1, 1], [], []>} : vector<72x128xf32>, vector<128x128xf32>, vector<72x128xf32> -> vector<72x128xf32>
    %42 = arith.addf %35, %41 : vector<72x128xf32>
    %c3_43 = arith.constant 3 : index
    %c0_44 = arith.constant 0 : index
    %c0_45 = arith.constant 0 : index
    %43 = vector.load %arg5[%c3_43, %c0_44, %c0_45] : memref<4x72x98xf32, #tpu.memory_space<vmem>>, vector<1x72x98xf32>
    %44 = vector.shape_cast %43 : vector<1x72x98xf32> to vector<72x98xf32>
    %cst_46 = arith.constant dense<0.000000e+00> : vector<72x128xf32>
    %45 = tpu.matmul %44, %22, %cst_46 {dimension_numbers = #tpu.dot_dimension_numbers<[1], [0], [0], [1], [0, 0, 1, 1], [], []>} : vector<72x98xf32>, vector<98x128xf32>, vector<72x128xf32> -> vector<72x128xf32>
    %c3_47 = arith.constant 3 : index
    %c0_48 = arith.constant 0 : index
    %c0_49 = arith.constant 0 : index
    %46 = vector.load %arg6[%c3_47, %c0_48, %c0_49] : memref<4x128x128xf32, #tpu.memory_space<vmem>>, vector<1x128x128xf32>
    %47 = vector.shape_cast %46 : vector<1x128x128xf32> to vector<128x128xf32>
    %cst_50 = arith.constant dense<0.000000e+00> : vector<72x128xf32>
    %48 = tpu.matmul %45, %47, %cst_50 {dimension_numbers = #tpu.dot_dimension_numbers<[1], [0], [0], [1], [0, 0, 1, 1], [], []>} : vector<72x128xf32>, vector<128x128xf32>, vector<72x128xf32> -> vector<72x128xf32>
    %49 = arith.addf %42, %48 : vector<72x128xf32>
    %c0_51 = arith.constant 0 : index
    %c0_52 = arith.constant 0 : index
    %50 = vector.load %arg7[%c0_51, %c0_52] : memref<1x128xf32, #tpu.memory_space<vmem>>, vector<1x128xf32>
    %51 = vector.broadcast %50 : vector<1x128xf32> to vector<72x128xf32>
    %52 = arith.addf %49, %51 : vector<72x128xf32>
    %cst_53 = arith.constant 0.000000e+00 : f32
    %53 = vector.broadcast %cst_53 : f32 to vector<72x128xf32>
    %54 = arith.maximumf %52, %53 : vector<72x128xf32>
    %c0_54 = arith.constant 0 : index
    %c0_55 = arith.constant 0 : index
    %c0_56 = arith.constant 0 : index
    %55 = vector.load %arg8[%c0_54, %c0_55, %c0_56] : memref<4x18x72xf32, #tpu.memory_space<vmem>>, vector<1x18x72xf32>
    %56 = vector.shape_cast %55 : vector<1x18x72xf32> to vector<18x72xf32>
    %cst_57 = arith.constant dense<0.000000e+00> : vector<18x128xf32>
    %57 = tpu.matmul %56, %54, %cst_57 {dimension_numbers = #tpu.dot_dimension_numbers<[1], [0], [0], [1], [0, 0, 1, 1], [], []>} : vector<18x72xf32>, vector<72x128xf32>, vector<18x128xf32> -> vector<18x128xf32>
    %c1_58 = arith.constant 1 : index
    %c0_59 = arith.constant 0 : index
    %c0_60 = arith.constant 0 : index
    %58 = vector.load %arg8[%c1_58, %c0_59, %c0_60] : memref<4x18x72xf32, #tpu.memory_space<vmem>>, vector<1x18x72xf32>
    %59 = vector.shape_cast %58 : vector<1x18x72xf32> to vector<18x72xf32>
    %cst_61 = arith.constant dense<0.000000e+00> : vector<18x128xf32>
    %60 = tpu.matmul %59, %54, %cst_61 {dimension_numbers = #tpu.dot_dimension_numbers<[1], [0], [0], [1], [0, 0, 1, 1], [], []>} : vector<18x72xf32>, vector<72x128xf32>, vector<18x128xf32> -> vector<18x128xf32>
    %61 = arith.maximumf %57, %60 : vector<18x128xf32>
    %c2_62 = arith.constant 2 : index
    %c0_63 = arith.constant 0 : index
    %c0_64 = arith.constant 0 : index
    %62 = vector.load %arg8[%c2_62, %c0_63, %c0_64] : memref<4x18x72xf32, #tpu.memory_space<vmem>>, vector<1x18x72xf32>
    %63 = vector.shape_cast %62 : vector<1x18x72xf32> to vector<18x72xf32>
    %cst_65 = arith.constant dense<0.000000e+00> : vector<18x128xf32>
    %64 = tpu.matmul %63, %54, %cst_65 {dimension_numbers = #tpu.dot_dimension_numbers<[1], [0], [0], [1], [0, 0, 1, 1], [], []>} : vector<18x72xf32>, vector<72x128xf32>, vector<18x128xf32> -> vector<18x128xf32>
    %65 = arith.maximumf %61, %64 : vector<18x128xf32>
    %c3_66 = arith.constant 3 : index
    %c0_67 = arith.constant 0 : index
    %c0_68 = arith.constant 0 : index
    %66 = vector.load %arg8[%c3_66, %c0_67, %c0_68] : memref<4x18x72xf32, #tpu.memory_space<vmem>>, vector<1x18x72xf32>
    %67 = vector.shape_cast %66 : vector<1x18x72xf32> to vector<18x72xf32>
    %cst_69 = arith.constant dense<0.000000e+00> : vector<18x128xf32>
    %68 = tpu.matmul %67, %54, %cst_69 {dimension_numbers = #tpu.dot_dimension_numbers<[1], [0], [0], [1], [0, 0, 1, 1], [], []>} : vector<18x72xf32>, vector<72x128xf32>, vector<18x128xf32> -> vector<18x128xf32>
    %69 = arith.maximumf %65, %68 : vector<18x128xf32>
    %c0_70 = arith.constant 0 : index
    %c0_71 = arith.constant 0 : index
    %c0_72 = arith.constant 0 : index
    %70 = vector.load %arg9[%c0_70, %c0_71, %c0_72] : memref<9x2x18xf32, #tpu.memory_space<vmem>>, vector<1x2x18xf32>
    %71 = vector.shape_cast %70 : vector<1x2x18xf32> to vector<2x18xf32>
    %cst_73 = arith.constant dense<0.000000e+00> : vector<2x128xf32>
    %72 = tpu.matmul %71, %69, %cst_73 {dimension_numbers = #tpu.dot_dimension_numbers<[1], [0], [0], [1], [0, 0, 1, 1], [], []>} : vector<2x18xf32>, vector<18x128xf32>, vector<2x128xf32> -> vector<2x128xf32>
    %c0_74 = arith.constant 0 : index
    %c0_75 = arith.constant 0 : index
    %c0_76 = arith.constant 0 : index
    %73 = vector.load %arg10[%c0_74, %c0_75, %c0_76] : memref<9x128x256xf32, #tpu.memory_space<vmem>>, vector<1x128x256xf32>
    %74 = vector.shape_cast %73 : vector<1x128x256xf32> to vector<128x256xf32>
    %cst_77 = arith.constant dense<0.000000e+00> : vector<2x256xf32>
    %75 = tpu.matmul %72, %74, %cst_77 {dimension_numbers = #tpu.dot_dimension_numbers<[1], [0], [0], [1], [0, 0, 1, 1], [], []>} : vector<2x128xf32>, vector<128x256xf32>, vector<2x256xf32> -> vector<2x256xf32>
    %c1_78 = arith.constant 1 : index
    %c0_79 = arith.constant 0 : index
    %c0_80 = arith.constant 0 : index
    %76 = vector.load %arg9[%c1_78, %c0_79, %c0_80] : memref<9x2x18xf32, #tpu.memory_space<vmem>>, vector<1x2x18xf32>
    %77 = vector.shape_cast %76 : vector<1x2x18xf32> to vector<2x18xf32>
    %cst_81 = arith.constant dense<0.000000e+00> : vector<2x128xf32>
    %78 = tpu.matmul %77, %69, %cst_81 {dimension_numbers = #tpu.dot_dimension_numbers<[1], [0], [0], [1], [0, 0, 1, 1], [], []>} : vector<2x18xf32>, vector<18x128xf32>, vector<2x128xf32> -> vector<2x128xf32>
    %c1_82 = arith.constant 1 : index
    %c0_83 = arith.constant 0 : index
    %c0_84 = arith.constant 0 : index
    %79 = vector.load %arg10[%c1_82, %c0_83, %c0_84] : memref<9x128x256xf32, #tpu.memory_space<vmem>>, vector<1x128x256xf32>
    %80 = vector.shape_cast %79 : vector<1x128x256xf32> to vector<128x256xf32>
    %cst_85 = arith.constant dense<0.000000e+00> : vector<2x256xf32>
    %81 = tpu.matmul %78, %80, %cst_85 {dimension_numbers = #tpu.dot_dimension_numbers<[1], [0], [0], [1], [0, 0, 1, 1], [], []>} : vector<2x128xf32>, vector<128x256xf32>, vector<2x256xf32> -> vector<2x256xf32>
    %82 = arith.addf %75, %81 : vector<2x256xf32>
    %c2_86 = arith.constant 2 : index
    %c0_87 = arith.constant 0 : index
    %c0_88 = arith.constant 0 : index
    %83 = vector.load %arg9[%c2_86, %c0_87, %c0_88] : memref<9x2x18xf32, #tpu.memory_space<vmem>>, vector<1x2x18xf32>
    %84 = vector.shape_cast %83 : vector<1x2x18xf32> to vector<2x18xf32>
    %cst_89 = arith.constant dense<0.000000e+00> : vector<2x128xf32>
    %85 = tpu.matmul %84, %69, %cst_89 {dimension_numbers = #tpu.dot_dimension_numbers<[1], [0], [0], [1], [0, 0, 1, 1], [], []>} : vector<2x18xf32>, vector<18x128xf32>, vector<2x128xf32> -> vector<2x128xf32>
    %c2_90 = arith.constant 2 : index
    %c0_91 = arith.constant 0 : index
    %c0_92 = arith.constant 0 : index
    %86 = vector.load %arg10[%c2_90, %c0_91, %c0_92] : memref<9x128x256xf32, #tpu.memory_space<vmem>>, vector<1x128x256xf32>
    %87 = vector.shape_cast %86 : vector<1x128x256xf32> to vector<128x256xf32>
    %cst_93 = arith.constant dense<0.000000e+00> : vector<2x256xf32>
    %88 = tpu.matmul %85, %87, %cst_93 {dimension_numbers = #tpu.dot_dimension_numbers<[1], [0], [0], [1], [0, 0, 1, 1], [], []>} : vector<2x128xf32>, vector<128x256xf32>, vector<2x256xf32> -> vector<2x256xf32>
    %89 = arith.addf %82, %88 : vector<2x256xf32>
    %c3_94 = arith.constant 3 : index
    %c0_95 = arith.constant 0 : index
    %c0_96 = arith.constant 0 : index
    %90 = vector.load %arg9[%c3_94, %c0_95, %c0_96] : memref<9x2x18xf32, #tpu.memory_space<vmem>>, vector<1x2x18xf32>
    %91 = vector.shape_cast %90 : vector<1x2x18xf32> to vector<2x18xf32>
    %cst_97 = arith.constant dense<0.000000e+00> : vector<2x128xf32>
    %92 = tpu.matmul %91, %69, %cst_97 {dimension_numbers = #tpu.dot_dimension_numbers<[1], [0], [0], [1], [0, 0, 1, 1], [], []>} : vector<2x18xf32>, vector<18x128xf32>, vector<2x128xf32> -> vector<2x128xf32>
    %c3_98 = arith.constant 3 : index
    %c0_99 = arith.constant 0 : index
    %c0_100 = arith.constant 0 : index
    %93 = vector.load %arg10[%c3_98, %c0_99, %c0_100] : memref<9x128x256xf32, #tpu.memory_space<vmem>>, vector<1x128x256xf32>
    %94 = vector.shape_cast %93 : vector<1x128x256xf32> to vector<128x256xf32>
    %cst_101 = arith.constant dense<0.000000e+00> : vector<2x256xf32>
    %95 = tpu.matmul %92, %94, %cst_101 {dimension_numbers = #tpu.dot_dimension_numbers<[1], [0], [0], [1], [0, 0, 1, 1], [], []>} : vector<2x128xf32>, vector<128x256xf32>, vector<2x256xf32> -> vector<2x256xf32>
    %96 = arith.addf %89, %95 : vector<2x256xf32>
    %c4 = arith.constant 4 : index
    %c0_102 = arith.constant 0 : index
    %c0_103 = arith.constant 0 : index
    %97 = vector.load %arg9[%c4, %c0_102, %c0_103] : memref<9x2x18xf32, #tpu.memory_space<vmem>>, vector<1x2x18xf32>
    %98 = vector.shape_cast %97 : vector<1x2x18xf32> to vector<2x18xf32>
    %cst_104 = arith.constant dense<0.000000e+00> : vector<2x128xf32>
    %99 = tpu.matmul %98, %69, %cst_104 {dimension_numbers = #tpu.dot_dimension_numbers<[1], [0], [0], [1], [0, 0, 1, 1], [], []>} : vector<2x18xf32>, vector<18x128xf32>, vector<2x128xf32> -> vector<2x128xf32>
    %c4_105 = arith.constant 4 : index
    %c0_106 = arith.constant 0 : index
    %c0_107 = arith.constant 0 : index
    %100 = vector.load %arg10[%c4_105, %c0_106, %c0_107] : memref<9x128x256xf32, #tpu.memory_space<vmem>>, vector<1x128x256xf32>
    %101 = vector.shape_cast %100 : vector<1x128x256xf32> to vector<128x256xf32>
    %cst_108 = arith.constant dense<0.000000e+00> : vector<2x256xf32>
    %102 = tpu.matmul %99, %101, %cst_108 {dimension_numbers = #tpu.dot_dimension_numbers<[1], [0], [0], [1], [0, 0, 1, 1], [], []>} : vector<2x128xf32>, vector<128x256xf32>, vector<2x256xf32> -> vector<2x256xf32>
    %103 = arith.addf %96, %102 : vector<2x256xf32>
    %c5 = arith.constant 5 : index
    %c0_109 = arith.constant 0 : index
    %c0_110 = arith.constant 0 : index
    %104 = vector.load %arg9[%c5, %c0_109, %c0_110] : memref<9x2x18xf32, #tpu.memory_space<vmem>>, vector<1x2x18xf32>
    %105 = vector.shape_cast %104 : vector<1x2x18xf32> to vector<2x18xf32>
    %cst_111 = arith.constant dense<0.000000e+00> : vector<2x128xf32>
    %106 = tpu.matmul %105, %69, %cst_111 {dimension_numbers = #tpu.dot_dimension_numbers<[1], [0], [0], [1], [0, 0, 1, 1], [], []>} : vector<2x18xf32>, vector<18x128xf32>, vector<2x128xf32> -> vector<2x128xf32>
    %c5_112 = arith.constant 5 : index
    %c0_113 = arith.constant 0 : index
    %c0_114 = arith.constant 0 : index
    %107 = vector.load %arg10[%c5_112, %c0_113, %c0_114] : memref<9x128x256xf32, #tpu.memory_space<vmem>>, vector<1x128x256xf32>
    %108 = vector.shape_cast %107 : vector<1x128x256xf32> to vector<128x256xf32>
    %cst_115 = arith.constant dense<0.000000e+00> : vector<2x256xf32>
    %109 = tpu.matmul %106, %108, %cst_115 {dimension_numbers = #tpu.dot_dimension_numbers<[1], [0], [0], [1], [0, 0, 1, 1], [], []>} : vector<2x128xf32>, vector<128x256xf32>, vector<2x256xf32> -> vector<2x256xf32>
    %110 = arith.addf %103, %109 : vector<2x256xf32>
    %c6 = arith.constant 6 : index
    %c0_116 = arith.constant 0 : index
    %c0_117 = arith.constant 0 : index
    %111 = vector.load %arg9[%c6, %c0_116, %c0_117] : memref<9x2x18xf32, #tpu.memory_space<vmem>>, vector<1x2x18xf32>
    %112 = vector.shape_cast %111 : vector<1x2x18xf32> to vector<2x18xf32>
    %cst_118 = arith.constant dense<0.000000e+00> : vector<2x128xf32>
    %113 = tpu.matmul %112, %69, %cst_118 {dimension_numbers = #tpu.dot_dimension_numbers<[1], [0], [0], [1], [0, 0, 1, 1], [], []>} : vector<2x18xf32>, vector<18x128xf32>, vector<2x128xf32> -> vector<2x128xf32>
    %c6_119 = arith.constant 6 : index
    %c0_120 = arith.constant 0 : index
    %c0_121 = arith.constant 0 : index
    %114 = vector.load %arg10[%c6_119, %c0_120, %c0_121] : memref<9x128x256xf32, #tpu.memory_space<vmem>>, vector<1x128x256xf32>
    %115 = vector.shape_cast %114 : vector<1x128x256xf32> to vector<128x256xf32>
    %cst_122 = arith.constant dense<0.000000e+00> : vector<2x256xf32>
    %116 = tpu.matmul %113, %115, %cst_122 {dimension_numbers = #tpu.dot_dimension_numbers<[1], [0], [0], [1], [0, 0, 1, 1], [], []>} : vector<2x128xf32>, vector<128x256xf32>, vector<2x256xf32> -> vector<2x256xf32>
    %117 = arith.addf %110, %116 : vector<2x256xf32>
    %c7 = arith.constant 7 : index
    %c0_123 = arith.constant 0 : index
    %c0_124 = arith.constant 0 : index
    %118 = vector.load %arg9[%c7, %c0_123, %c0_124] : memref<9x2x18xf32, #tpu.memory_space<vmem>>, vector<1x2x18xf32>
    %119 = vector.shape_cast %118 : vector<1x2x18xf32> to vector<2x18xf32>
    %cst_125 = arith.constant dense<0.000000e+00> : vector<2x128xf32>
    %120 = tpu.matmul %119, %69, %cst_125 {dimension_numbers = #tpu.dot_dimension_numbers<[1], [0], [0], [1], [0, 0, 1, 1], [], []>} : vector<2x18xf32>, vector<18x128xf32>, vector<2x128xf32> -> vector<2x128xf32>
    %c7_126 = arith.constant 7 : index
    %c0_127 = arith.constant 0 : index
    %c0_128 = arith.constant 0 : index
    %121 = vector.load %arg10[%c7_126, %c0_127, %c0_128] : memref<9x128x256xf32, #tpu.memory_space<vmem>>, vector<1x128x256xf32>
    %122 = vector.shape_cast %121 : vector<1x128x256xf32> to vector<128x256xf32>
    %cst_129 = arith.constant dense<0.000000e+00> : vector<2x256xf32>
    %123 = tpu.matmul %120, %122, %cst_129 {dimension_numbers = #tpu.dot_dimension_numbers<[1], [0], [0], [1], [0, 0, 1, 1], [], []>} : vector<2x128xf32>, vector<128x256xf32>, vector<2x256xf32> -> vector<2x256xf32>
    %124 = arith.addf %117, %123 : vector<2x256xf32>
    %c8 = arith.constant 8 : index
    %c0_130 = arith.constant 0 : index
    %c0_131 = arith.constant 0 : index
    %125 = vector.load %arg9[%c8, %c0_130, %c0_131] : memref<9x2x18xf32, #tpu.memory_space<vmem>>, vector<1x2x18xf32>
    %126 = vector.shape_cast %125 : vector<1x2x18xf32> to vector<2x18xf32>
    %cst_132 = arith.constant dense<0.000000e+00> : vector<2x128xf32>
    %127 = tpu.matmul %126, %69, %cst_132 {dimension_numbers = #tpu.dot_dimension_numbers<[1], [0], [0], [1], [0, 0, 1, 1], [], []>} : vector<2x18xf32>, vector<18x128xf32>, vector<2x128xf32> -> vector<2x128xf32>
    %c8_133 = arith.constant 8 : index
    %c0_134 = arith.constant 0 : index
    %c0_135 = arith.constant 0 : index
    %128 = vector.load %arg10[%c8_133, %c0_134, %c0_135] : memref<9x128x256xf32, #tpu.memory_space<vmem>>, vector<1x128x256xf32>
    %129 = vector.shape_cast %128 : vector<1x128x256xf32> to vector<128x256xf32>
    %cst_136 = arith.constant dense<0.000000e+00> : vector<2x256xf32>
    %130 = tpu.matmul %127, %129, %cst_136 {dimension_numbers = #tpu.dot_dimension_numbers<[1], [0], [0], [1], [0, 0, 1, 1], [], []>} : vector<2x128xf32>, vector<128x256xf32>, vector<2x256xf32> -> vector<2x256xf32>
    %131 = arith.addf %124, %130 : vector<2x256xf32>
    %c0_137 = arith.constant 0 : index
    %c0_138 = arith.constant 0 : index
    %132 = vector.load %arg11[%c0_137, %c0_138] : memref<1x256xf32, #tpu.memory_space<vmem>>, vector<1x256xf32>
    %133 = vector.broadcast %132 : vector<1x256xf32> to vector<2x256xf32>
    %134 = arith.addf %131, %133 : vector<2x256xf32>
    %cst_139 = arith.constant 0.000000e+00 : f32
    %135 = vector.broadcast %cst_139 : f32 to vector<2x256xf32>
    %136 = arith.maximumf %134, %135 : vector<2x256xf32>
    %c0_140 = arith.constant 0 : index
    %c0_141 = arith.constant 0 : index
    %137 = vector.load %arg12[%c0_140, %c0_141] : memref<256x128xf32, #tpu.memory_space<vmem>>, vector<256x128xf32>
    %cst_142 = arith.constant dense<0.000000e+00> : vector<2x128xf32>
    %138 = tpu.matmul %136, %137, %cst_142 {dimension_numbers = #tpu.dot_dimension_numbers<[1], [0], [0], [1], [0, 0, 1, 1], [], []>} : vector<2x256xf32>, vector<256x128xf32>, vector<2x128xf32> -> vector<2x128xf32>
    %c0_143 = arith.constant 0 : index
    %c0_144 = arith.constant 0 : index
    %139 = vector.load %arg13[%c0_143, %c0_144] : memref<1x128xf32, #tpu.memory_space<vmem>>, vector<1x128xf32>
    %140 = vector.broadcast %139 : vector<1x128xf32> to vector<2x128xf32>
    %141 = arith.addf %138, %140 : vector<2x128xf32>
    %cst_145 = arith.constant 0.000000e+00 : f32
    %142 = vector.broadcast %cst_145 : f32 to vector<2x128xf32>
    %143 = arith.maximumf %141, %142 : vector<2x128xf32>
    %c0_146 = arith.constant 0 : index
    %c0_147 = arith.constant 0 : index
    %144 = vector.load %arg14[%c0_146, %c0_147] : memref<128x128xf32, #tpu.memory_space<vmem>>, vector<128x128xf32>
    %cst_148 = arith.constant dense<0.000000e+00> : vector<2x128xf32>
    %145 = tpu.matmul %143, %144, %cst_148 {dimension_numbers = #tpu.dot_dimension_numbers<[1], [0], [0], [1], [0, 0, 1, 1], [], []>} : vector<2x128xf32>, vector<128x128xf32>, vector<2x128xf32> -> vector<2x128xf32>
    %c0_149 = arith.constant 0 : index
    %c0_150 = arith.constant 0 : index
    %146 = vector.load %arg15[%c0_149, %c0_150] : memref<1x128xf32, #tpu.memory_space<vmem>>, vector<1x128xf32>
    %147 = vector.broadcast %146 : vector<1x128xf32> to vector<2x128xf32>
    %148 = arith.addf %145, %147 : vector<2x128xf32>
    %c0_151 = arith.constant 0 : index
    %c0_152 = arith.constant 0 : index
    %149 = vector.load %arg16[%c0_151, %c0_152] : memref<2x128xf32, #tpu.memory_space<vmem>>, vector<2x128xf32>
    tpu.vector_store %arg16[%c0_151, %c0_152], %148 {strides = array<i32>} : memref<2x128xf32, #tpu.memory_space<vmem>>, vector<2x128xf32>,
    return
  }
  func.func @transform_0(%arg0: i32) -> (i32, i32) {
    %c0_i32 = arith.constant 0 : i32
    %c0_i32_0 = arith.constant 0 : i32
    %c0_i32_1 = arith.constant 0 : i32
    return %c0_i32, %c0_i32_0 : i32, i32
  }
  func.func @transform_1(%arg0: i32) -> (i32, i32) {
    %c0_i32 = arith.constant 0 : i32
    %c0_i32_0 = arith.constant 0 : i32
    %c0_i32_1 = arith.constant 0 : i32
    return %c0_i32, %c0_i32_0 : i32, i32
  }
  func.func @transform_2(%arg0: i32) -> (i32, i32) {
    %c0_i32 = arith.constant 0 : i32
    %c0_i32_0 = arith.constant 0 : i32
    %c0_i32_1 = arith.constant 0 : i32
    return %c0_i32, %c0_i32_0 : i32, i32
  }
  func.func @transform_3(%arg0: i32) -> (i32, i32, i32) {
    %c0_i32 = arith.constant 0 : i32
    %c0_i32_0 = arith.constant 0 : i32
    %c0_i32_1 = arith.constant 0 : i32
    %c0_i32_2 = arith.constant 0 : i32
    return %c0_i32, %c0_i32_0, %c0_i32_1 : i32, i32, i32
  }
  func.func @transform_4(%arg0: i32) -> (i32, i32, i32) {
    %c0_i32 = arith.constant 0 : i32
    %c0_i32_0 = arith.constant 0 : i32
    %c0_i32_1 = arith.constant 0 : i32
    %c0_i32_2 = arith.constant 0 : i32
    return %c0_i32, %c0_i32_0, %c0_i32_1 : i32, i32, i32
  }
  func.func @transform_5(%arg0: i32) -> (i32, i32, i32) {
    %c0_i32 = arith.constant 0 : i32
    %c0_i32_0 = arith.constant 0 : i32
    %c0_i32_1 = arith.constant 0 : i32
    %c0_i32_2 = arith.constant 0 : i32
    return %c0_i32, %c0_i32_0, %c0_i32_1 : i32, i32, i32
  }
  func.func @transform_6(%arg0: i32) -> (i32, i32) {
    %c0_i32 = arith.constant 0 : i32
    %c0_i32_0 = arith.constant 0 : i32
    %c0_i32_1 = arith.constant 0 : i32
    return %c0_i32, %c0_i32_0 : i32, i32
  }
  func.func @transform_7(%arg0: i32) -> (i32, i32, i32) {
    %c0_i32 = arith.constant 0 : i32
    %c0_i32_0 = arith.constant 0 : i32
    %c0_i32_1 = arith.constant 0 : i32
    %c0_i32_2 = arith.constant 0 : i32
    return %c0_i32, %c0_i32_0, %c0_i32_1 : i32, i32, i32
  }
  func.func @transform_8(%arg0: i32) -> (i32, i32, i32) {
    %c0_i32 = arith.constant 0 : i32
    %c0_i32_0 = arith.constant 0 : i32
    %c0_i32_1 = arith.constant 0 : i32
    %c0_i32_2 = arith.constant 0 : i32
    return %c0_i32, %c0_i32_0, %c0_i32_1 : i32, i32, i32
  }
  func.func @transform_9(%arg0: i32) -> (i32, i32, i32) {
    %c0_i32 = arith.constant 0 : i32
    %c0_i32_0 = arith.constant 0 : i32
    %c0_i32_1 = arith.constant 0 : i32
    %c0_i32_2 = arith.constant 0 : i32
    return %c0_i32, %c0_i32_0, %c0_i32_1 : i32, i32, i32
  }
  func.func @transform_10(%arg0: i32) -> (i32, i32) {
    %c0_i32 = arith.constant 0 : i32
    %c0_i32_0 = arith.constant 0 : i32
    %c0_i32_1 = arith.constant 0 : i32
    return %c0_i32, %c0_i32_0 : i32, i32
  }
  func.func @transform_11(%arg0: i32) -> (i32, i32) {
    %c0_i32 = arith.constant 0 : i32
    %c0_i32_0 = arith.constant 0 : i32
    %c0_i32_1 = arith.constant 0 : i32
    return %c0_i32, %c0_i32_0 : i32, i32
  }
  func.func @transform_12(%arg0: i32) -> (i32, i32) {
    %c0_i32 = arith.constant 0 : i32
    %c0_i32_0 = arith.constant 0 : i32
    %c0_i32_1 = arith.constant 0 : i32
    return %c0_i32, %c0_i32_0 : i32, i32
  }
  func.func @transform_13(%arg0: i32) -> (i32, i32) {
    %c0_i32 = arith.constant 0 : i32
    %c0_i32_0 = arith.constant 0 : i32
    %c0_i32_1 = arith.constant 0 : i32
    return %c0_i32, %c0_i32_0 : i32, i32
  }
  func.func @transform_14(%arg0: i32) -> (i32, i32) {
    %c0_i32 = arith.constant 0 : i32
    %c0_i32_0 = arith.constant 0 : i32
    %c0_i32_1 = arith.constant 0 : i32
    return %c0_i32, %c0_i32_0 : i32, i32
  }
  func.func @transform_15(%arg0: i32) -> (i32, i32) {
    %c0_i32 = arith.constant 0 : i32
    %c0_i32_0 = arith.constant 0 : i32
    %c0_i32_1 = arith.constant 0 : i32
    return %c0_i32, %c0_i32_0 : i32, i32
  }
}

</mosaic_0001>

<llo_original>
// kernel: pigs_forward.1
$region0: #{pigs_forward.1}
  #allocation0 [shape = 'u32[]', space=smem, size = 0x4, offset = 0x4, fixed_abs, tag = 'smem constant byte address 0x4 - core index']
  #allocation1 [shape = 'u32[144,128]{1,0:T(1,128)}', space=vmem, size = 0x12000, scoped, tag = 'internal scratch']
  %s0 = inlined_call_operand.vmem [shape: f32[450,12], index: 0, kind: input, shape index: {}]
  %s1 = inlined_call_operand.vmem [shape: f32[12,128], index: 1, kind: input, shape index: {}]
  %s2 = inlined_call_operand.vmem [shape: f32[1,128], index: 2, kind: input, shape index: {}]
  %s3 = inlined_call_operand.vmem [shape: f32[4,98,450], index: 3, kind: input, shape index: {}]
  %s4 = inlined_call_operand.vmem [shape: f32[4,72,98], index: 4, kind: input, shape index: {}]
  %s5 = inlined_call_operand.vmem [shape: f32[4,128,128], index: 5, kind: input, shape index: {}]
  %s6 = inlined_call_operand.vmem [shape: f32[1,128], index: 6, kind: input, shape index: {}]
  %s7 = inlined_call_operand.vmem [shape: f32[4,18,72], index: 7, kind: input, shape index: {}]
  %s8 = inlined_call_operand.vmem [shape: f32[9,2,18], index: 8, kind: input, shape index: {}]
  %s9 = inlined_call_operand.vmem [shape: f32[9,128,256], index: 9, kind: input, shape index: {}]
  %s10 = inlined_call_operand.vmem [shape: f32[1,256], index: 10, kind: input, shape index: {}]
  %s11 = inlined_call_operand.vmem [shape: f32[256,128], index: 11, kind: input, shape index: {}]
  %s12 = inlined_call_operand.vmem [shape: f32[1,128], index: 12, kind: input, shape index: {}]
  %s13 = inlined_call_operand.vmem [shape: f32[128,128], index: 13, kind: input, shape index: {}]
  %s14 = inlined_call_operand.vmem [shape: f32[1,128], index: 14, kind: input, shape index: {}]
  %s15 = inlined_call_operand.hbm [shape: f32[2,128], index: 15, kind: output, shape index: {}]
  %s16 = sld [smem:[#allocation0]]
  $region70: #{pigs_forward.1} parent=0
    _
  %s18 = ssub.s32 1, %s16
  %s19 = scalar_select 0, %s18, %s16
  $region1: #{pigs_forward.1} parent=0
    #allocation2 [shape = 'u8[1024]{0}', space=vmem, size = 0x400, scoped, tag = 'output window, operand 0, single buffered']
    #allocation3 [shape = 's32[1]{0}', space=sflag, size = 0x4, scoped, tag = 'scoped memory for pigs_forward.1']
    %20 = vsyncpa [#allocation3], 0
    // Predicated region
    $region2: #{pigs_forward.1} parent=1 // pred_check
      _
    $region3: #{pigs_forward.1} parent=1 // pred_check_branch
      %22 = sbr.rel (0) target = $region5
    $region4: #{pigs_forward.1} parent=1 // pred_region
      _
    $region5: #{pigs_forward.1} parent=1 // pred_fallthru
      _
    // Predicated region
    $region6: #{pigs_forward.1} parent=1 // pred_check
      _
    $region7: #{pigs_forward.1} parent=1 // pred_check_branch
      %24 = sbr.rel (0) target = $region9
    $region8: #{pigs_forward.1} parent=1 // pred_region
      _
    $region9: #{pigs_forward.1} parent=1 // pred_fallthru
      _
    // Predicated region
    $region10: #{pigs_forward.1} parent=1 // pred_check
      _
    $region11: #{pigs_forward.1} parent=1 // pred_check_branch
      %26 = sbr.rel (0) target = $region13
    $region12: #{pigs_forward.1} parent=1 // pred_region
      _
    $region13: #{pigs_forward.1} parent=1 // pred_fallthru
      _
    // Predicated region
    $region14: #{pigs_forward.1} parent=1 // pred_check
      _
    $region15: #{pigs_forward.1} parent=1 // pred_check_branch
      %28 = sbr.rel (0) target = $region17
    $region16: #{pigs_forward.1} parent=1 // pred_region
      _
    $region17: #{pigs_forward.1} parent=1 // pred_fallthru
      _
    // Predicated region
    $region18: #{pigs_forward.1} parent=1 // pred_check
      _
    $region19: #{pigs_forward.1} parent=1 // pred_check_branch
      %30 = sbr.rel (0) target = $region21
    $region20: #{pigs_forward.1} parent=1 // pred_region
      _
    $region21: #{pigs_forward.1} parent=1 // pred_fallthru
      _
    // Predicated region
    $region22: #{pigs_forward.1} parent=1 // pred_check
      _
    $region23: #{pigs_forward.1} parent=1 // pred_check_branch
      %32 = sbr.rel (0) target = $region25
    $region24: #{pigs_forward.1} parent=1 // pred_region
      _
    $region25: #{pigs_forward.1} parent=1 // pred_fallthru
      _
    // Predicated region
    $region26: #{pigs_forward.1} parent=1 // pred_check
      _
    $region27: #{pigs_forward.1} parent=1 // pred_check_branch
      %34 = sbr.rel (0) target = $region29
    $region28: #{pigs_forward.1} parent=1 // pred_region
      _
    $region29: #{pigs_forward.1} parent=1 // pred_fallthru
      _
    // Predicated region
    $region30: #{pigs_forward.1} parent=1 // pred_check
      _
    $region31: #{pigs_forward.1} parent=1 // pred_check_branch
      %36 = sbr.rel (0) target = $region33
    $region32: #{pigs_forward.1} parent=1 // pred_region
      _
    $region33: #{pigs_forward.1} parent=1 // pred_fallthru
      _
    // Predicated region
    $region34: #{pigs_forward.1} parent=1 // pred_check
      _
    $region35: #{pigs_forward.1} parent=1 // pred_check_branch
      %38 = sbr.rel (0) target = $region37
    $region36: #{pigs_forward.1} parent=1 // pred_region
      _
    $region37: #{pigs_forward.1} parent=1 // pred_fallthru
      _
    // Predicated region
    $region38: #{pigs_forward.1} parent=1 // pred_check
      _
    $region39: #{pigs_forward.1} parent=1 // pred_check_branch
      %40 = sbr.rel (0) target = $region41
    $region40: #{pigs_forward.1} parent=1 // pred_region
      _
    $region41: #{pigs_forward.1} parent=1 // pred_fallthru
      _
    // Predicated region
    $region42: #{pigs_forward.1} parent=1 // pred_check
      _
    $region43: #{pigs_forward.1} parent=1 // pred_check_branch
      %42 = sbr.rel (0) target = $region45
    $region44: #{pigs_forward.1} parent=1 // pred_region
      _
    $region45: #{pigs_forward.1} parent=1 // pred_fallthru
      _
    // Predicated region
    $region46: #{pigs_forward.1} parent=1 // pred_check
      _
    $region47: #{pigs_forward.1} parent=1 // pred_check_branch
      %44 = sbr.rel (0) target = $region49
    $region48: #{pigs_forward.1} parent=1 // pred_region
      _
    $region49: #{pigs_forward.1} parent=1 // pred_fallthru
      _
    // Predicated region
    $region50: #{pigs_forward.1} parent=1 // pred_check
      _
    $region51: #{pigs_forward.1} parent=1 // pred_check_branch
      %46 = sbr.rel (0) target = $region53
    $region52: #{pigs_forward.1} parent=1 // pred_region
      _
    $region53: #{pigs_forward.1} parent=1 // pred_fallthru
      _
    // Predicated region
    $region54: #{pigs_forward.1} parent=1 // pred_check
      _
    $region55: #{pigs_forward.1} parent=1 // pred_check_branch
      %48 = sbr.rel (0) target = $region57
    $region56: #{pigs_forward.1} parent=1 // pred_region
      _
    $region57: #{pigs_forward.1} parent=1 // pred_fallthru
      _
    // Predicated region
    $region58: #{pigs_forward.1} parent=1 // pred_check
      _
    $region59: #{pigs_forward.1} parent=1 // pred_check_branch
      %50 = sbr.rel (0) target = $region61
    $region60: #{pigs_forward.1} parent=1 // pred_region
      _
    $region61: #{pigs_forward.1} parent=1 // pred_fallthru
      _
    %v51 = vld [vmem:[%s0] sm:$0xff]
    %v52 = vld [vmem:[%s0 + $0x8] sm:$0xff]
    %v53 = vld [vmem:[%s0 + $0x10] sm:$0xff]
    %v54 = vld [vmem:[%s0 + $0x18] sm:$0xff]
    %v55 = vld [vmem:[%s0 + $0x20] sm:$0xff]
    %v56 = vld [vmem:[%s0 + $0x28] sm:$0xff]
    %v57 = vld [vmem:[%s0 + $0x30] sm:$0xff]
    %v58 = vld [vmem:[%s0 + $0x38] sm:$0xff]
    %v59 = vld [vmem:[%s0 + $0x40] sm:$0xff]
    %v60 = vld [vmem:[%s0 + $0x48] sm:$0xff]
    %v61 = vld [vmem:[%s0 + $0x50] sm:$0xff]
    %v62 = vld [vmem:[%s0 + $0x58] sm:$0xff]
    %v63 = vld [vmem:[%s0 + $0x60] sm:$0xff]
    %v64 = vld [vmem:[%s0 + $0x68] sm:$0xff]
    %v65 = vld [vmem:[%s0 + $0x70] sm:$0xff]
    %v66 = vld [vmem:[%s0 + $0x78] sm:$0xff]
    %v67 = vld [vmem:[%s0 + $0x80] sm:$0xff]
    %v68 = vld [vmem:[%s0 + $0x88] sm:$0xff]
    %v69 = vld [vmem:[%s0 + $0x90] sm:$0xff]
    %v70 = vld [vmem:[%s0 + $0x98] sm:$0xff]
    %v71 = vld [vmem:[%s0 + $0xa0] sm:$0xff]
    %v72 = vld [vmem:[%s0 + $0xa8] sm:$0xff]
    %v73 = vld [vmem:[%s0 + $0xb0] sm:$0xff]
    %v74 = vld [vmem:[%s0 + $0xb8] sm:$0xff]
    %v75 = vld [vmem:[%s0 + $0xc0] sm:$0xff]
    %v76 = vld [vmem:[%s0 + $0xc8] sm:$0xff]
    %v77 = vld [vmem:[%s0 + $0xd0] sm:$0xff]
    %v78 = vld [vmem:[%s0 + $0xd8] sm:$0xff]
    %v79 = vld [vmem:[%s0 + $0xe0] sm:$0xff]
    %v80 = vld [vmem:[%s0 + $0xe8] sm:$0xff]
    %v81 = vld [vmem:[%s0 + $0xf0] sm:$0xff]
    %v82 = vld [vmem:[%s0 + $0xf8] sm:$0xff]
    %v83 = vld [vmem:[%s0 + $0x100] sm:$0xff]
    %v84 = vld [vmem:[%s0 + $0x108] sm:$0xff]
    %v85 = vld [vmem:[%s0 + $0x110] sm:$0xff]
    %v86 = vld [vmem:[%s0 + $0x118] sm:$0xff]
    %v87 = vld [vmem:[%s0 + $0x120] sm:$0xff]
    %v88 = vld [vmem:[%s0 + $0x128] sm:$0xff]
    %v89 = vld [vmem:[%s0 + $0x130] sm:$0xff]
    %v90 = vld [vmem:[%s0 + $0x138] sm:$0xff]
    %v91 = vld [vmem:[%s0 + $0x140] sm:$0xff]
    %v92 = vld [vmem:[%s0 + $0x148] sm:$0xff]
    %v93 = vld [vmem:[%s0 + $0x150] sm:$0xff]
    %v94 = vld [vmem:[%s0 + $0x158] sm:$0xff]
    %v95 = vld [vmem:[%s0 + $0x160] sm:$0xff]
    %v96 = vld [vmem:[%s0 + $0x168] sm:$0xff]
    %v97 = vld [vmem:[%s0 + $0x170] sm:$0xff]
    %v98 = vld [vmem:[%s0 + $0x178] sm:$0xff]
    %v99 = vld [vmem:[%s0 + $0x180] sm:$0xff]
    %v100 = vld [vmem:[%s0 + $0x188] sm:$0xff]
    %v101 = vld [vmem:[%s0 + $0x190] sm:$0xff]
    %v102 = vld [vmem:[%s0 + $0x198] sm:$0xff]
    %v103 = vld [vmem:[%s0 + $0x1a0] sm:$0xff]
    %v104 = vld [vmem:[%s0 + $0x1a8] sm:$0xff]
    %v105 = vld [vmem:[%s0 + $0x1b0] sm:$0xff]
    %v106 = vld [vmem:[%s0 + $0x1b8] sm:$0xff]
    %v107 = vld [vmem:[%s0 + $0x1c0] sm:$0x3]
    %v108 = vld [vmem:[%s1] sm:$0xff]
    %v109 = vld [vmem:[%s1 + $0x8] sm:$0xf]
    %v110 = vld [vmem:[%s2] sm:$0x1]
    %v112 = vlaneseq
    %v113 = vshrl.u32 %v112, 7
    %v114 = vsub.s32 0, %v113
    %v115 = vrot.slane %v110, %v114
    %vm117 = vcmask 97280
    %v119 = vsel %vm117, %v51, 0
    %v122 = vsel %vm117, %v52, 0
    %v125 = vsel %vm117, %v53, 0
    %v128 = vsel %vm117, %v54, 0
    %v131 = vsel %vm117, %v55, 0
    %v134 = vsel %vm117, %v56, 0
    %v137 = vsel %vm117, %v57, 0
    %v140 = vsel %vm117, %v58, 0
    %v143 = vsel %vm117, %v59, 0
    %v146 = vsel %vm117, %v60, 0
    %v149 = vsel %vm117, %v61, 0
    %v152 = vsel %vm117, %v62, 0
    %v155 = vsel %vm117, %v63, 0
    %v158 = vsel %vm117, %v64, 0
    %v161 = vsel %vm117, %v65, 0
    %v164 = vsel %vm117, %v66, 0
    %v167 = vsel %vm117, %v67, 0
    %v170 = vsel %vm117, %v68, 0
    %v173 = vsel %vm117, %v69, 0
    %v176 = vsel %vm117, %v70, 0
    %v179 = vsel %vm117, %v71, 0
    %v182 = vsel %vm117, %v72, 0
    %v185 = vsel %vm117, %v73, 0
    %v188 = vsel %vm117, %v74, 0
    %v191 = vsel %vm117, %v75, 0
    %v194 = vsel %vm117, %v76, 0
    %v197 = vsel %vm117, %v77, 0
    %v200 = vsel %vm117, %v78, 0
    %v203 = vsel %vm117, %v79, 0
    %v206 = vsel %vm117, %v80, 0
    %v209 = vsel %vm117, %v81, 0
    %v212 = vsel %vm117, %v82, 0
    %v215 = vsel %vm117, %v83, 0
    %v218 = vsel %vm117, %v84, 0
    %v221 = vsel %vm117, %v85, 0
    %v224 = vsel %vm117, %v86, 0
    %v227 = vsel %vm117, %v87, 0
    %v230 = vsel %vm117, %v88, 0
    %v233 = vsel %vm117, %v89, 0
    %v236 = vsel %vm117, %v90, 0
    %v239 = vsel %vm117, %v91, 0
    %v242 = vsel %vm117, %v92, 0
    %v245 = vsel %vm117, %v93, 0
    %v248 = vsel %vm117, %v94, 0
    %v251 = vsel %vm117, %v95, 0
    %v254 = vsel %vm117, %v96, 0
    %v257 = vsel %vm117, %v97, 0
    %v260 = vsel %vm117, %v98, 0
    %v263 = vsel %vm117, %v99, 0
    %v266 = vsel %vm117, %v100, 0
    %v269 = vsel %vm117, %v101, 0
    %v272 = vsel %vm117, %v102, 0
    %v275 = vsel %vm117, %v103, 0
    %v278 = vsel %vm117, %v104, 0
    %v281 = vsel %vm117, %v105, 0
    %v284 = vsel %vm117, %v106, 0
    %v287 = vsel %vm117, %v107, 0
    %vm289 = vcmask 1043456
    %v291 = vsel %vm289, %v109, 0
    %293 = vmatprep.subr.mxu0 0.0
    %294 = vmatpush1.msra.mxu0 %v108
    %295 = vmatprep.subr.mxu0 0.0
    %296 = vmatpush1.msra.mxu0 %v291
    %297 = vmatprep.subr.mxu0 0.0
    %298 = vmatpush1.msra.mxu0 0.0
    %299 = vmatprep.subr.mxu0 0.0
    %300 = vmatpush1.msra.mxu0 0.0
    %301 = vmatprep.subr.mxu0 0.0
    %302 = vmatpush1.msra.mxu0 0.0
    %303 = vmatprep.subr.mxu0 0.0
    %304 = vmatpush1.msra.mxu0 0.0
    %305 = vmatprep.subr.mxu0 0.0
    %306 = vmatpush1.msra.mxu0 0.0
    %307 = vmatprep.subr.mxu0 0.0
    %308 = vmatpush1.msra.mxu0 0.0
    %309 = vmatprep.subr.mxu0 0.0
    %310 = vmatpush1.msra.mxu0 0.0
    %311 = vmatprep.subr.mxu0 0.0
    %312 = vmatpush1.msra.mxu0 0.0
    %313 = vmatprep.subr.mxu0 0.0
    %314 = vmatpush1.msra.mxu0 0.0
    %315 = vmatprep.subr.mxu0 0.0
    %316 = vmatpush1.msra.mxu0 0.0
    %317 = vmatprep.subr.mxu0 0.0
    %318 = vmatpush1.msra.mxu0 0.0
    %319 = vmatprep.subr.mxu0 0.0
    %320 = vmatpush1.msra.mxu0 0.0
    %321 = vmatprep.subr.mxu0 0.0
    %322 = vmatpush1.msra.mxu0 0.0
    %323 = vmatprep.subr.mxu0 0.0
    %324 = vmatpush1.msra.mxu0 0.0
    %325 = vmatprep.subr.mxu0 0.0
    %326 = vmatpush1.msra.mxu0 0.0
    %327 = vmatprep.subr.mxu0 0.0
    %328 = vmatpush1.msra.mxu0 0.0
    %329 = vmatprep.subr.mxu0 0.0
    %330 = vmatpush1.msra.mxu0 0.0
    %331 = vmatprep.subr.mxu0 0.0
    %332 = vmatpush1.msra.mxu0 0.0
    %333 = vmatprep.subr.mxu0 0.0
    %334 = vmatpush1.msra.mxu0 0.0
    %335 = vmatprep.subr.mxu0 0.0
    %336 = vmatpush1.msra.mxu0 0.0
    %337 = vmatprep.subr.mxu0 0.0
    %338 = vmatpush1.msra.mxu0 0.0
    %339 = vmatprep.subr.mxu0 0.0
    %340 = vmatpush1.msra.mxu0 0.0
    %341 = vmatprep.subr.mxu0 0.0
    %342 = vmatpush1.msra.mxu0 0.0
    %343 = vmatprep.subr.mxu0 0.0
    %344 = vmatpush1.msra.mxu0 0.0
    %345 = vmatprep.subr.mxu0 0.0
    %346 = vmatpush1.msra.mxu0 0.0
    %347 = vmatprep.subr.mxu0 0.0
    %348 = vmatpush1.msra.mxu0 0.0
    %349 = vmatprep.subr.mxu0 0.0
    %350 = vmatpush1.msra.mxu0 0.0
    %351 = vmatprep.subr.mxu0 0.0
    %352 = vmatpush1.msra.mxu0 0.0
    %353 = vmatprep.subr.mxu0 0.0
    %354 = vmatpush1.msra.mxu0 0.0
    %355 = vmatprep.subr.mxu0 0.0
    %356 = vmatpush1.msra.mxu0 0.0
    %357 = vmatprep.mubr.f32.mxu0 0.0
    %358 = vmatmul.mubr.f32.gmra.mrb[0].mxu0 %v119
    %v359 = vpop.f32.mrb[0].mxu0
    %v360 = vadd.f32 %v115, %v359
    %v361 = vpop.f32.mrb[0].mxu0
    %362 = vmatprep.mubr.f32.mxu0 0.0
    %363 = vmatmul.mubr.f32.gmra.mrb[0].mxu0 %v122
    %v364 = vpop.f32.mrb[0].mxu0
    %v365 = vadd.f32 %v115, %v364
    %v366 = vpop.f32.mrb[0].mxu0
    %367 = vmatprep.mubr.f32.mxu0 0.0
    %368 = vmatmul.mubr.f32.gmra.mrb[0].mxu0 %v125
    %v369 = vpop.f32.mrb[0].mxu0
    %v370 = vadd.f32 %v115, %v369
    %v371 = vpop.f32.mrb[0].mxu0
    %372 = vmatprep.mubr.f32.mxu0 0.0
    %373 = vmatmul.mubr.f32.gmra.mrb[0].mxu0 %v128
    %v374 = vpop.f32.mrb[0].mxu0
    %v375 = vadd.f32 %v115, %v374
    %v376 = vpop.f32.mrb[0].mxu0
    %377 = vmatprep.mubr.f32.mxu0 0.0
    %378 = vmatmul.mubr.f32.gmra.mrb[0].mxu0 %v131
    %v379 = vpop.f32.mrb[0].mxu0
    %v380 = vadd.f32 %v115, %v379
    %v381 = vpop.f32.mrb[0].mxu0
    %382 = vmatprep.mubr.f32.mxu0 0.0
    %383 = vmatmul.mubr.f32.gmra.mrb[0].mxu0 %v134
    %v384 = vpop.f32.mrb[0].mxu0
    %v385 = vadd.f32 %v115, %v384
    %v386 = vpop.f32.mrb[0].mxu0
    %387 = vmatprep.mubr.f32.mxu0 0.0
    %388 = vmatmul.mubr.f32.gmra.mrb[0].mxu0 %v137
    %v389 = vpop.f32.mrb[0].mxu0
    %v390 = vadd.f32 %v115, %v389
    %v391 = vpop.f32.mrb[0].mxu0
    %392 = vmatprep.mubr.f32.mxu0 0.0
    %393 = vmatmul.mubr.f32.gmra.mrb[0].mxu0 %v140
    %v394 = vpop.f32.mrb[0].mxu0
    %v395 = vadd.f32 %v115, %v394
    %v396 = vpop.f32.mrb[0].mxu0
    %397 = vmatprep.mubr.f32.mxu0 0.0
    %398 = vmatmul.mubr.f32.gmra.mrb[0].mxu0 %v143
    %v399 = vpop.f32.mrb[0].mxu0
    %v400 = vadd.f32 %v115, %v399
    %v401 = vpop.f32.mrb[0].mxu0
    %402 = vmatprep.mubr.f32.mxu0 0.0
    %403 = vmatmul.mubr.f32.gmra.mrb[0].mxu0 %v146
    %v404 = vpop.f32.mrb[0].mxu0
    %v405 = vadd.f32 %v115, %v404
    %v406 = vpop.f32.mrb[0].mxu0
    %407 = vmatprep.mubr.f32.mxu0 0.0
    %408 = vmatmul.mubr.f32.gmra.mrb[0].mxu0 %v149
    %v409 = vpop.f32.mrb[0].mxu0
    %v410 = vadd.f32 %v115, %v409
    %v411 = vpop.f32.mrb[0].mxu0
    %412 = vmatprep.mubr.f32.mxu0 0.0
    %413 = vmatmul.mubr.f32.gmra.mrb[0].mxu0 %v152
    %v414 = vpop.f32.mrb[0].mxu0
    %v415 = vadd.f32 %v115, %v414
    %v416 = vpop.f32.mrb[0].mxu0
    %417 = vmatprep.mubr.f32.mxu0 0.0
    %418 = vmatmul.mubr.f32.gmra.mrb[0].mxu0 %v155
    %v419 = vpop.f32.mrb[0].mxu0
    %v420 = vadd.f32 %v115, %v419
    %v421 = vpop.f32.mrb[0].mxu0
    %422 = vmatprep.mubr.f32.mxu0 0.0
    %423 = vmatmul.mubr.f32.gmra.mrb[0].mxu0 %v158
    %v424 = vpop.f32.mrb[0].mxu0
    %v425 = vadd.f32 %v115, %v424
    %v426 = vpop.f32.mrb[0].mxu0
    %427 = vmatprep.mubr.f32.mxu0 0.0
    %428 = vmatmul.mubr.f32.gmra.mrb[0].mxu0 %v161
    %v429 = vpop.f32.mrb[0].mxu0
    %v430 = vadd.f32 %v115, %v429
    %v431 = vpop.f32.mrb[0].mxu0
    %432 = vmatprep.mubr.f32.mxu0 0.0
    %433 = vmatmul.mubr.f32.gmra.mrb[0].mxu0 %v164
    %v434 = vpop.f32.mrb[0].mxu0
    %v435 = vadd.f32 %v115, %v434
    %v436 = vpop.f32.mrb[0].mxu0
    %437 = vmatprep.mubr.f32.mxu0 0.0
    %438 = vmatmul.mubr.f32.gmra.mrb[0].mxu0 %v167
    %v439 = vpop.f32.mrb[0].mxu0
    %v440 = vadd.f32 %v115, %v439
    %v441 = vpop.f32.mrb[0].mxu0
    %442 = vmatprep.mubr.f32.mxu0 0.0
    %443 = vmatmul.mubr.f32.gmra.mrb[0].mxu0 %v170
    %v444 = vpop.f32.mrb[0].mxu0
    %v445 = vadd.f32 %v115, %v444
    %v446 = vpop.f32.mrb[0].mxu0
    %447 = vmatprep.mubr.f32.mxu0 0.0
    %448 = vmatmul.mubr.f32.gmra.mrb[0].mxu0 %v173
    %v449 = vpop.f32.mrb[0].mxu0
    %v450 = vadd.f32 %v115, %v449
    %v451 = vpop.f32.mrb[0].mxu0
    %452 = vmatprep.mubr.f32.mxu0 0.0
    %453 = vmatmul.mubr.f32.gmra.mrb[0].mxu0 %v176
    %v454 = vpop.f32.mrb[0].mxu0
    %v455 = vadd.f32 %v115, %v454
    %v456 = vpop.f32.mrb[0].mxu0
    %457 = vmatprep.mubr.f32.mxu0 0.0
    %458 = vmatmul.mubr.f32.gmra.mrb[0].mxu0 %v179
    %v459 = vpop.f32.mrb[0].mxu0
    %v460 = vadd.f32 %v115, %v459
    %v461 = vpop.f32.mrb[0].mxu0
    %462 = vmatprep.mubr.f32.mxu0 0.0
    %463 = vmatmul.mubr.f32.gmra.mrb[0].mxu0 %v182
    %v464 = vpop.f32.mrb[0].mxu0
    %v465 = vadd.f32 %v115, %v464
    %v466 = vpop.f32.mrb[0].mxu0
    %467 = vmatprep.mubr.f32.mxu0 0.0
    %468 = vmatmul.mubr.f32.gmra.mrb[0].mxu0 %v185
    %v469 = vpop.f32.mrb[0].mxu0
    %v470 = vadd.f32 %v115, %v469
    %v471 = vpop.f32.mrb[0].mxu0
    %472 = vmatprep.mubr.f32.mxu0 0.0
    %473 = vmatmul.mubr.f32.gmra.mrb[0].mxu0 %v188
    %v474 = vpop.f32.mrb[0].mxu0
    %v475 = vadd.f32 %v115, %v474
    %v476 = vpop.f32.mrb[0].mxu0
    %477 = vmatprep.mubr.f32.mxu0 0.0
    %478 = vmatmul.mubr.f32.gmra.mrb[0].mxu0 %v191
    %v479 = vpop.f32.mrb[0].mxu0
    %v480 = vadd.f32 %v115, %v479
    %v481 = vpop.f32.mrb[0].mxu0
    %482 = vmatprep.mubr.f32.mxu0 0.0
    %483 = vmatmul.mubr.f32.gmra.mrb[0].mxu0 %v194
    %v484 = vpop.f32.mrb[0].mxu0
    %v485 = vadd.f32 %v115, %v484
    %v486 = vpop.f32.mrb[0].mxu0
    %487 = vmatprep.mubr.f32.mxu0 0.0
    %488 = vmatmul.mubr.f32.gmra.mrb[0].mxu0 %v197
    %v489 = vpop.f32.mrb[0].mxu0
    %v490 = vadd.f32 %v115, %v489
    %v491 = vpop.f32.mrb[0].mxu0
    %492 = vmatprep.mubr.f32.mxu0 0.0
    %493 = vmatmul.mubr.f32.gmra.mrb[0].mxu0 %v200
    %v494 = vpop.f32.mrb[0].mxu0
    %v495 = vadd.f32 %v115, %v494
    %v496 = vpop.f32.mrb[0].mxu0
    %497 = vmatprep.mubr.f32.mxu0 0.0
    %498 = vmatmul.mubr.f32.gmra.mrb[0].mxu0 %v203
    %v499 = vpop.f32.mrb[0].mxu0
    %v500 = vadd.f32 %v115, %v499
    %v501 = vpop.f32.mrb[0].mxu0
    %502 = vmatprep.mubr.f32.mxu0 0.0
    %503 = vmatmul.mubr.f32.gmra.mrb[0].mxu0 %v206
    %v504 = vpop.f32.mrb[0].mxu0
    %v505 = vadd.f32 %v115, %v504
    %v506 = vpop.f32.mrb[0].mxu0
    %507 = vmatprep.mubr.f32.mxu0 0.0
    %508 = vmatmul.mubr.f32.gmra.mrb[0].mxu0 %v209
    %v509 = vpop.f32.mrb[0].mxu0
    %v510 = vadd.f32 %v115, %v509
    %v511 = vpop.f32.mrb[0].mxu0
    %512 = vmatprep.mubr.f32.mxu0 0.0
    %513 = vmatmul.mubr.f32.gmra.mrb[0].mxu0 %v212
    %v514 = vpop.f32.mrb[0].mxu0
    %v515 = vadd.f32 %v115, %v514
    %v516 = vpop.f32.mrb[0].mxu0
    %517 = vmatprep.mubr.f32.mxu0 0.0
    %518 = vmatmul.mubr.f32.gmra.mrb[0].mxu0 %v215
    %v519 = vpop.f32.mrb[0].mxu0
    %v520 = vadd.f32 %v115, %v519
    %v521 = vpop.f32.mrb[0].mxu0
    %522 = vmatprep.mubr.f32.mxu0 0.0
    %523 = vmatmul.mubr.f32.gmra.mrb[0].mxu0 %v218
    %v524 = vpop.f32.mrb[0].mxu0
    %v525 = vadd.f32 %v115, %v524
    %v526 = vpop.f32.mrb[0].mxu0
    %527 = vmatprep.mubr.f32.mxu0 0.0
    %528 = vmatmul.mubr.f32.gmra.mrb[0].mxu0 %v221
    %v529 = vpop.f32.mrb[0].mxu0
    %v530 = vadd.f32 %v115, %v529
    %v531 = vpop.f32.mrb[0].mxu0
    %532 = vmatprep.mubr.f32.mxu0 0.0
    %533 = vmatmul.mubr.f32.gmra.mrb[0].mxu0 %v224
    %v534 = vpop.f32.mrb[0].mxu0
    %v535 = vadd.f32 %v115, %v534
    %v536 = vpop.f32.mrb[0].mxu0
    %537 = vmatprep.mubr.f32.mxu0 0.0
    %538 = vmatmul.mubr.f32.gmra.mrb[0].mxu0 %v227
    %v539 = vpop.f32.mrb[0].mxu0
    %v540 = vadd.f32 %v115, %v539
    %v541 = vpop.f32.mrb[0].mxu0
    %542 = vmatprep.mubr.f32.mxu0 0.0
    %543 = vmatmul.mubr.f32.gmra.mrb[0].mxu0 %v230
    %v544 = vpop.f32.mrb[0].mxu0
    %v545 = vadd.f32 %v115, %v544
    %v546 = vpop.f32.mrb[0].mxu0
    %547 = vmatprep.mubr.f32.mxu0 0.0
    %548 = vmatmul.mubr.f32.gmra.mrb[0].mxu0 %v233
    %v549 = vpop.f32.mrb[0].mxu0
    %v550 = vadd.f32 %v115, %v549
    %v551 = vpop.f32.mrb[0].mxu0
    %552 = vmatprep.mubr.f32.mxu0 0.0
    %553 = vmatmul.mubr.f32.gmra.mrb[0].mxu0 %v236
    %v554 = vpop.f32.mrb[0].mxu0
    %v555 = vadd.f32 %v115, %v554
    %v556 = vpop.f32.mrb[0].mxu0
    %557 = vmatprep.mubr.f32.mxu0 0.0
    %558 = vmatmul.mubr.f32.gmra.mrb[0].mxu0 %v239
    %v559 = vpop.f32.mrb[0].mxu0
    %v560 = vadd.f32 %v115, %v559
    %v561 = vpop.f32.mrb[0].mxu0
    %562 = vmatprep.mubr.f32.mxu0 0.0
    %563 = vmatmul.mubr.f32.gmra.mrb[0].mxu0 %v242
    %v564 = vpop.f32.mrb[0].mxu0
    %v565 = vadd.f32 %v115, %v564
    %v566 = vpop.f32.mrb[0].mxu0
    %567 = vmatprep.mubr.f32.mxu0 0.0
    %568 = vmatmul.mubr.f32.gmra.mrb[0].mxu0 %v245
    %v569 = vpop.f32.mrb[0].mxu0
    %v570 = vadd.f32 %v115, %v569
    %v571 = vpop.f32.mrb[0].mxu0
    %572 = vmatprep.mubr.f32.mxu0 0.0
    %573 = vmatmul.mubr.f32.gmra.mrb[0].mxu0 %v248
    %v574 = vpop.f32.mrb[0].mxu0
    %v575 = vadd.f32 %v115, %v574
    %v576 = vpop.f32.mrb[0].mxu0
    %577 = vmatprep.mubr.f32.mxu0 0.0
    %578 = vmatmul.mubr.f32.gmra.mrb[0].mxu0 %v251
    %v579 = vpop.f32.mrb[0].mxu0
    %v580 = vadd.f32 %v115, %v579
    %v581 = vpop.f32.mrb[0].mxu0
    %582 = vmatprep.mubr.f32.mxu0 0.0
    %583 = vmatmul.mubr.f32.gmra.mrb[0].mxu0 %v254
    %v584 = vpop.f32.mrb[0].mxu0
    %v585 = vadd.f32 %v115, %v584
    %v586 = vpop.f32.mrb[0].mxu0
    %587 = vmatprep.mubr.f32.mxu0 0.0
    %588 = vmatmul.mubr.f32.gmra.mrb[0].mxu0 %v257
    %v589 = vpop.f32.mrb[0].mxu0
    %v590 = vadd.f32 %v115, %v589
    %v591 = vpop.f32.mrb[0].mxu0
    %592 = vmatprep.mubr.f32.mxu0 0.0
    %593 = vmatmul.mubr.f32.gmra.mrb[0].mxu0 %v260
    %v594 = vpop.f32.mrb[0].mxu0
    %v595 = vadd.f32 %v115, %v594
    %v596 = vpop.f32.mrb[0].mxu0
    %597 = vmatprep.mubr.f32.mxu0 0.0
    %598 = vmatmul.mubr.f32.gmra.mrb[0].mxu0 %v263
    %v599 = vpop.f32.mrb[0].mxu0
    %v600 = vadd.f32 %v115, %v599
    %v601 = vpop.f32.mrb[0].mxu0
    %602 = vmatprep.mubr.f32.mxu0 0.0
    %603 = vmatmul.mubr.f32.gmra.mrb[0].mxu0 %v266
    %v604 = vpop.f32.mrb[0].mxu0
    %v605 = vadd.f32 %v115, %v604
    %v606 = vpop.f32.mrb[0].mxu0
    %607 = vmatprep.mubr.f32.mxu0 0.0
    %608 = vmatmul.mubr.f32.gmra.mrb[0].mxu0 %v269
    %v609 = vpop.f32.mrb[0].mxu0
    %v610 = vadd.f32 %v115, %v609
    %v611 = vpop.f32.mrb[0].mxu0
    %612 = vmatprep.mubr.f32.mxu0 0.0
    %613 = vmatmul.mubr.f32.gmra.mrb[0].mxu0 %v272
    %v614 = vpop.f32.mrb[0].mxu0
    %v615 = vadd.f32 %v115, %v614
    %v616 = vpop.f32.mrb[0].mxu0
    %617 = vmatprep.mubr.f32.mxu0 0.0
    %618 = vmatmul.mubr.f32.gmra.mrb[0].mxu0 %v275
    %v619 = vpop.f32.mrb[0].mxu0
    %v620 = vadd.f32 %v115, %v619
    %v621 = vpop.f32.mrb[0].mxu0
    %622 = vmatprep.mubr.f32.mxu0 0.0
    %623 = vmatmul.mubr.f32.gmra.mrb[0].mxu0 %v278
    %v624 = vpop.f32.mrb[0].mxu0
    %v625 = vadd.f32 %v115, %v624
    %v626 = vpop.f32.mrb[0].mxu0
    %627 = vmatprep.mubr.f32.mxu0 0.0
    %628 = vmatmul.mubr.f32.gmra.mrb[0].mxu0 %v281
    %v629 = vpop.f32.mrb[0].mxu0
    %v630 = vadd.f32 %v115, %v629
    %v631 = vpop.f32.mrb[0].mxu0
    %632 = vmatprep.mubr.f32.mxu0 0.0
    %633 = vmatmul.mubr.f32.gmra.mrb[0].mxu0 %v284
    %v634 = vpop.f32.mrb[0].mxu0
    %v635 = vadd.f32 %v115, %v634
    %v636 = vpop.f32.mrb[0].mxu0
    %637 = vmatprep.mubr.f32.mxu0 0.0
    %638 = vmatmul.mubr.f32.gmra.mrb[0].mxu0 %v287
    %v639 = vpop.f32.mrb[0].mxu0
    %v640 = vadd.f32 %v115, %v639
    %v641 = vpop.f32.mrb[0].mxu0
    %642 = vdwg.mxu0
    %v643 = vmax.f32 %v360, 0.0
    %v644 = vmax.f32 %v365, 0.0
    %v645 = vmax.f32 %v370, 0.0
    %v646 = vmax.f32 %v375, 0.0
    %v647 = vmax.f32 %v380, 0.0
    %v648 = vmax.f32 %v385, 0.0
    %v649 = vmax.f32 %v390, 0.0
    %v650 = vmax.f32 %v395, 0.0
    %v651 = vmax.f32 %v400, 0.0
    %v652 = vmax.f32 %v405, 0.0
    %v653 = vmax.f32 %v410, 0.0
    %v654 = vmax.f32 %v415, 0.0
    %v655 = vmax.f32 %v420, 0.0
    %v656 = vmax.f32 %v425, 0.0
    %v657 = vmax.f32 %v430, 0.0
    %v658 = vmax.f32 %v435, 0.0
    %v659 = vmax.f32 %v440, 0.0
    %v660 = vmax.f32 %v445, 0.0
    %v661 = vmax.f32 %v450, 0.0
    %v662 = vmax.f32 %v455, 0.0
    %v663 = vmax.f32 %v460, 0.0
    %v664 = vmax.f32 %v465, 0.0
    %v665 = vmax.f32 %v470, 0.0
    %v666 = vmax.f32 %v475, 0.0
    %v667 = vmax.f32 %v480, 0.0
    %v668 = vmax.f32 %v485, 0.0
    %v669 = vmax.f32 %v490, 0.0
    %v670 = vmax.f32 %v495, 0.0
    %v671 = vmax.f32 %v500, 0.0
    %v672 = vmax.f32 %v505, 0.0
    %v673 = vmax.f32 %v510, 0.0
    %v674 = vmax.f32 %v515, 0.0
    %v675 = vmax.f32 %v520, 0.0
    %v676 = vmax.f32 %v525, 0.0
    %v677 = vmax.f32 %v530, 0.0
    %v678 = vmax.f32 %v535, 0.0
    %v679 = vmax.f32 %v540, 0.0
    %v680 = vmax.f32 %v545, 0.0
    %v681 = vmax.f32 %v550, 0.0
    %v682 = vmax.f32 %v555, 0.0
    %v683 = vmax.f32 %v560, 0.0
    %v684 = vmax.f32 %v565, 0.0
    %v685 = vmax.f32 %v570, 0.0
    %v686 = vmax.f32 %v575, 0.0
    %v687 = vmax.f32 %v580, 0.0
    %v688 = vmax.f32 %v585, 0.0
    %v689 = vmax.f32 %v590, 0.0
    %v690 = vmax.f32 %v595, 0.0
    %v691 = vmax.f32 %v600, 0.0
    %v692 = vmax.f32 %v605, 0.0
    %v693 = vmax.f32 %v610, 0.0
    %v694 = vmax.f32 %v615, 0.0
    %v695 = vmax.f32 %v620, 0.0
    %v696 = vmax.f32 %v625, 0.0
    %v697 = vmax.f32 %v630, 0.0
    %v698 = vmax.f32 %v635, 0.0
    %v699 = vmax.f32 %v640, 0.0
    %v700 = vld [vmem:[%s3] sm:$0xff]
    %v701 = vld [vmem:[%s3 + $0x8] sm:$0xff]
    %v702 = vld [vmem:[%s3 + $0x10] sm:$0xff]
    %v703 = vld [vmem:[%s3 + $0x18] sm:$0xff]
    %v704 = vld [vmem:[%s3 + $0x20] sm:$0xff]
    %v705 = vld [vmem:[%s3 + $0x28] sm:$0xff]
    %v706 = vld [vmem:[%s3 + $0x30] sm:$0xff]
    %v707 = vld [vmem:[%s3 + $0x38] sm:$0xff]
    %v708 = vld [vmem:[%s3 + $0x40] sm:$0xff]
    %v709 = vld [vmem:[%s3 + $0x48] sm:$0xff]
    %v710 = vld [vmem:[%s3 + $0x50] sm:$0xff]
    %v711 = vld [vmem:[%s3 + $0x58] sm:$0xff]
    %v712 = vld [vmem:[%s3 + $0x60] sm:$0xff]
    %v713 = vld [vmem:[%s3 + $0x68] sm:$0xff]
    %v714 = vld [vmem:[%s3 + $0x70] sm:$0xff]
    %v715 = vld [vmem:[%s3 + $0x78] sm:$0xff]
    %v716 = vld [vmem:[%s3 + $0x80] sm:$0xff]
    %v717 = vld [vmem:[%s3 + $0x88] sm:$0xff]
    %v718 = vld [vmem:[%s3 + $0x90] sm:$0xff]
    %v719 = vld [vmem:[%s3 + $0x98] sm:$0xff]
    %v720 = vld [vmem:[%s3 + $0xa0] sm:$0xff]
    %v721 = vld [vmem:[%s3 + $0xa8] sm:$0xff]
    %v722 = vld [vmem:[%s3 + $0xb0] sm:$0xff]
    %v723 = vld [vmem:[%s3 + $0xb8] sm:$0xff]
    %v724 = vld [vmem:[%s3 + $0xc0] sm:$0xff]
    %v725 = vld [vmem:[%s3 + $0xc8] sm:$0xff]
    %v726 = vld [vmem:[%s3 + $0xd0] sm:$0xff]
    %v727 = vld [vmem:[%s3 + $0xd8] sm:$0xff]
    %v728 = vld [vmem:[%s3 + $0xe0] sm:$0xff]
    %v729 = vld [vmem:[%s3 + $0xe8] sm:$0xff]
    %v730 = vld [vmem:[%s3 + $0xf0] sm:$0xff]
    %v731 = vld [vmem:[%s3 + $0xf8] sm:$0xff]
    %v732 = vld [vmem:[%s3 + $0x100] sm:$0xff]
    %v733 = vld [vmem:[%s3 + $0x108] sm:$0xff]
    %v734 = vld [vmem:[%s3 + $0x110] sm:$0xff]
    %v735 = vld [vmem:[%s3 + $0x118] sm:$0xff]
    %v736 = vld [vmem:[%s3 + $0x120] sm:$0xff]
    %v737 = vld [vmem:[%s3 + $0x128] sm:$0xff]
    %v738 = vld [vmem:[%s3 + $0x130] sm:$0xff]
    %v739 = vld [vmem:[%s3 + $0x138] sm:$0xff]
    %v740 = vld [vmem:[%s3 + $0x140] sm:$0xff]
    %v741 = vld [vmem:[%s3 + $0x148] sm:$0xff]
    %v742 = vld [vmem:[%s3 + $0x150] sm:$0xff]
    %v743 = vld [vmem:[%s3 + $0x158] sm:$0xff]
    %v744 = vld [vmem:[%s3 + $0x160] sm:$0xff]
    %v745 = vld [vmem:[%s3 + $0x168] sm:$0xff]
    %v746 = vld [vmem:[%s3 + $0x170] sm:$0xff]
    %v747 = vld [vmem:[%s3 + $0x178] sm:$0xff]
    %v748 = vld [vmem:[%s3 + $0x180] sm:$0x3]
    %v749 = vld [vmem:[%s3 + $0x188] sm:$0x3]
    %v750 = vld [vmem:[%s3 + $0x190] sm:$0x3]
    %v751 = vld [vmem:[%s3 + $0x198] sm:$0x3]
    %vm752 = vcmask 539648
    %v754 = vsel %vm752, %v703, 0
    %v757 = vsel %vm752, %v707, 0
    %v760 = vsel %vm752, %v711, 0
    %v763 = vsel %vm752, %v715, 0
    %v766 = vsel %vm752, %v719, 0
    %v769 = vsel %vm752, %v723, 0
    %v772 = vsel %vm752, %v727, 0
    %v775 = vsel %vm752, %v731, 0
    %v778 = vsel %vm752, %v735, 0
    %v781 = vsel %vm752, %v739, 0
    %v784 = vsel %vm752, %v743, 0
    %v787 = vsel %vm752, %v747, 0
    %v790 = vsel %vm752, %v751, 0
    %vm792 = vcmask 1041408
    %v794 = vsel %vm792, %v699, 0
    %796 = vmatprep.subr.mxu0 0.0
    %797 = vmatpush1.msra.mxu0 %v643
    %798 = vmatprep.subr.mxu0 0.0
    %799 = vmatpush1.msra.mxu0 %v644
    %800 = vmatprep.subr.mxu0 0.0
    %801 = vmatpush1.msra.mxu0 %v645
    %802 = vmatprep.subr.mxu0 0.0
    %803 = vmatpush1.msra.mxu0 %v646
    %804 = vmatprep.subr.mxu0 0.0
    %805 = vmatpush1.msra.mxu0 %v647
    %806 = vmatprep.subr.mxu0 0.0
    %807 = vmatpush1.msra.mxu0 %v648
    %808 = vmatprep.subr.mxu0 0.0
    %809 = vmatpush1.msra.mxu0 %v649
    %810 = vmatprep.subr.mxu0 0.0
    %811 = vmatpush1.msra.mxu0 %v650
    %812 = vmatprep.subr.mxu0 0.0
    %813 = vmatpush1.msra.mxu0 %v651
    %814 = vmatprep.subr.mxu0 0.0
    %815 = vmatpush1.msra.mxu0 %v652
    %816 = vmatprep.subr.mxu0 0.0
    %817 = vmatpush1.msra.mxu0 %v653
    %818 = vmatprep.subr.mxu0 0.0
    %819 = vmatpush1.msra.mxu0 %v654
    %820 = vmatprep.subr.mxu0 0.0
    %821 = vmatpush1.msra.mxu0 %v655
    %822 = vmatprep.subr.mxu0 0.0
    %823 = vmatpush1.msra.mxu0 %v656
    %824 = vmatprep.subr.mxu0 0.0
    %825 = vmatpush1.msra.mxu0 %v657
    %826 = vmatprep.subr.mxu0 0.0
    %827 = vmatpush1.msra.mxu0 %v658
    %828 = vmatprep.subr.mxu0 0.0
    %829 = vmatpush1.msra.mxu0 %v659
    %830 = vmatprep.subr.mxu0 0.0
    %831 = vmatpush1.msra.mxu0 %v660
    %832 = vmatprep.subr.mxu0 0.0
    %833 = vmatpush1.msra.mxu0 %v661
    %834 = vmatprep.subr.mxu0 0.0
    %835 = vmatpush1.msra.mxu0 %v662
    %836 = vmatprep.subr.mxu0 0.0
    %837 = vmatpush1.msra.mxu0 %v663
    %838 = vmatprep.subr.mxu0 0.0
    %839 = vmatpush1.msra.mxu0 %v664
    %840 = vmatprep.subr.mxu0 0.0
    %841 = vmatpush1.msra.mxu0 %v665
    %842 = vmatprep.subr.mxu0 0.0
    %843 = vmatpush1.msra.mxu0 %v666
    %844 = vmatprep.subr.mxu0 0.0
    %845 = vmatpush1.msra.mxu0 %v667
    %846 = vmatprep.subr.mxu0 0.0
    %847 = vmatpush1.msra.mxu0 %v668
    %848 = vmatprep.subr.mxu0 0.0
    %849 = vmatpush1.msra.mxu0 %v669
    %850 = vmatprep.subr.mxu0 0.0
    %851 = vmatpush1.msra.mxu0 %v670
    %852 = vmatprep.subr.mxu0 0.0
    %853 = vmatpush1.msra.mxu0 %v671
    %854 = vmatprep.subr.mxu0 0.0
    %855 = vmatpush1.msra.mxu0 %v672
    %856 = vmatprep.subr.mxu0 0.0
    %857 = vmatpush1.msra.mxu0 %v673
    %858 = vmatprep.subr.mxu0 0.0
    %859 = vmatpush1.msra.mxu0 %v674
    %860 = vmatprep.mubr.f32.mxu0 %v701
    %861 = vmatmul.mubr.f32.gmra.mrb[0].mxu0 %v700
    %v862 = vpop.f32.mrb[0].mxu0
    %v863 = vadd.f32 0.0, %v862
    %v864 = vpop.f32.mrb[0].mxu0
    %865 = vmatprep.mubr.f32.mxu0 %v705
    %866 = vmatmul.mubr.f32.gmra.mrb[0].mxu0 %v704
    %v867 = vpop.f32.mrb[0].mxu0
    %v868 = vadd.f32 0.0, %v867
    %v869 = vpop.f32.mrb[0].mxu0
    %870 = vmatprep.mubr.f32.mxu0 %v709
    %871 = vmatmul.mubr.f32.gmra.mrb[0].mxu0 %v708
    %v872 = vpop.f32.mrb[0].mxu0
    %v873 = vadd.f32 0.0, %v872
    %v874 = vpop.f32.mrb[0].mxu0
    %875 = vmatprep.mubr.f32.mxu0 %v713
    %876 = vmatmul.mubr.f32.gmra.mrb[0].mxu0 %v712
    %v877 = vpop.f32.mrb[0].mxu0
    %v878 = vadd.f32 0.0, %v877
    %v879 = vpop.f32.mrb[0].mxu0
    %880 = vmatprep.mubr.f32.mxu0 %v717
    %881 = vmatmul.mubr.f32.gmra.mrb[0].mxu0 %v716
    %v882 = vpop.f32.mrb[0].mxu0
    %v883 = vadd.f32 0.0, %v882
    %v884 = vpop.f32.mrb[0].mxu0
    %885 = vmatprep.mubr.f32.mxu0 %v721
    %886 = vmatmul.mubr.f32.gmra.mrb[0].mxu0 %v720
    %v887 = vpop.f32.mrb[0].mxu0
    %v888 = vadd.f32 0.0, %v887
    %v889 = vpop.f32.mrb[0].mxu0
    %890 = vmatprep.mubr.f32.mxu0 %v725
    %891 = vmatmul.mubr.f32.gmra.mrb[0].mxu0 %v724
    %v892 = vpop.f32.mrb[0].mxu0
    %v893 = vadd.f32 0.0, %v892
    %v894 = vpop.f32.mrb[0].mxu0
    %895 = vmatprep.mubr.f32.mxu0 %v729
    %896 = vmatmul.mubr.f32.gmra.mrb[0].mxu0 %v728
    %v897 = vpop.f32.mrb[0].mxu0
    %v898 = vadd.f32 0.0, %v897
    %v899 = vpop.f32.mrb[0].mxu0
    %900 = vmatprep.mubr.f32.mxu0 %v733
    %901 = vmatmul.mubr.f32.gmra.mrb[0].mxu0 %v732
    %v902 = vpop.f32.mrb[0].mxu0
    %v903 = vadd.f32 0.0, %v902
    %v904 = vpop.f32.mrb[0].mxu0
    %905 = vmatprep.mubr.f32.mxu0 %v737
    %906 = vmatmul.mubr.f32.gmra.mrb[0].mxu0 %v736
    %v907 = vpop.f32.mrb[0].mxu0
    %v908 = vadd.f32 0.0, %v907
    %v909 = vpop.f32.mrb[0].mxu0
    %910 = vmatprep.mubr.f32.mxu0 %v741
    %911 = vmatmul.mubr.f32.gmra.mrb[0].mxu0 %v740
    %v912 = vpop.f32.mrb[0].mxu0
    %v913 = vadd.f32 0.0, %v912
    %v914 = vpop.f32.mrb[0].mxu0
    %915 = vmatprep.mubr.f32.mxu0 %v745
    %916 = vmatmul.mubr.f32.gmra.mrb[0].mxu0 %v744
    %v917 = vpop.f32.mrb[0].mxu0
    %v918 = vadd.f32 0.0, %v917
    %v919 = vpop.f32.mrb[0].mxu0
    %920 = vmatprep.mubr.f32.mxu0 %v749
    %921 = vmatmul.mubr.f32.gmra.mrb[0].mxu0 %v748
    %v922 = vpop.f32.mrb[0].mxu0
    %v923 = vadd.f32 0.0, %v922
    %v924 = vpop.f32.mrb[0].mxu0
    %925 = vdwg.mxu0
    %926 = vmatprep.subr.mxu0 0.0
    %927 = vmatpush1.msra.mxu0 %v675
    %928 = vmatprep.subr.mxu0 0.0
    %929 = vmatpush1.msra.mxu0 %v676
    %930 = vmatprep.subr.mxu0 0.0
    %931 = vmatpush1.msra.mxu0 %v677
    %932 = vmatprep.subr.mxu0 0.0
    %933 = vmatpush1.msra.mxu0 %v678
    %934 = vmatprep.subr.mxu0 0.0
    %935 = vmatpush1.msra.mxu0 %v679
    %936 = vmatprep.subr.mxu0 0.0
    %937 = vmatpush1.msra.mxu0 %v680
    %938 = vmatprep.subr.mxu0 0.0
    %939 = vmatpush1.msra.mxu0 %v681
    %940 = vmatprep.subr.mxu0 0.0
    %941 = vmatpush1.msra.mxu0 %v682
    %942 = vmatprep.subr.mxu0 0.0
    %943 = vmatpush1.msra.mxu0 %v683
    %944 = vmatprep.subr.mxu0 0.0
    %945 = vmatpush1.msra.mxu0 %v684
    %946 = vmatprep.subr.mxu0 0.0
    %947 = vmatpush1.msra.mxu0 %v685
    %948 = vmatprep.subr.mxu0 0.0
    %949 = vmatpush1.msra.mxu0 %v686
    %950 = vmatprep.subr.mxu0 0.0
    %951 = vmatpush1.msra.mxu0 %v687
    %952 = vmatprep.subr.mxu0 0.0
    %953 = vmatpush1.msra.mxu0 %v688
    %954 = vmatprep.subr.mxu0 0.0
    %955 = vmatpush1.msra.mxu0 %v689
    %956 = vmatprep.subr.mxu0 0.0
    %957 = vmatpush1.msra.mxu0 %v690
    %958 = vmatprep.subr.mxu0 0.0
    %959 = vmatpush1.msra.mxu0 %v691
    %960 = vmatprep.subr.mxu0 0.0
    %961 = vmatpush1.msra.mxu0 %v692
    %962 = vmatprep.subr.mxu0 0.0
    %963 = vmatpush1.msra.mxu0 %v693
    %964 = vmatprep.subr.mxu0 0.0
    %965 = vmatpush1.msra.mxu0 %v694
    %966 = vmatprep.subr.mxu0 0.0
    %967 = vmatpush1.msra.mxu0 %v695
    %968 = vmatprep.subr.mxu0 0.0
    %969 = vmatpush1.msra.mxu0 %v696
    %970 = vmatprep.subr.mxu0 0.0
    %971 = vmatpush1.msra.mxu0 %v697
    %972 = vmatprep.subr.mxu0 0.0
    %973 = vmatpush1.msra.mxu0 %v698
    %974 = vmatprep.subr.mxu0 0.0
    %975 = vmatpush1.msra.mxu0 %v794
    %976 = vmatprep.subr.mxu0 0.0
    %977 = vmatpush1.msra.mxu0 0.0
    %978 = vmatprep.subr.mxu0 0.0
    %979 = vmatpush1.msra.mxu0 0.0
    %980 = vmatprep.subr.mxu0 0.0
    %981 = vmatpush1.msra.mxu0 0.0
    %982 = vmatprep.subr.mxu0 0.0
    %983 = vmatpush1.msra.mxu0 0.0
    %984 = vmatprep.subr.mxu0 0.0
    %985 = vmatpush1.msra.mxu0 0.0
    %986 = vmatprep.subr.mxu0 0.0
    %987 = vmatpush1.msra.mxu0 0.0
    %988 = vmatprep.subr.mxu0 0.0
    %989 = vmatpush1.msra.mxu0 0.0
    %990 = vmatprep.mubr.f32.mxu0 %v754
    %991 = vmatmul.mubr.f32.gmra.mrb[0].mxu0 %v702
    %v992 = vpop.f32.mrb[0].mxu0
    %v993 = vadd.f32 %v863, %v992
    %v994 = vpop.f32.mrb[0].mxu0
    %995 = vmatprep.mubr.f32.mxu0 %v757
    %996 = vmatmul.mubr.f32.gmra.mrb[0].mxu0 %v706
    %v997 = vpop.f32.mrb[0].mxu0
    %v998 = vadd.f32 %v868, %v997
    %v999 = vpop.f32.mrb[0].mxu0
    %1000 = vmatprep.mubr.f32.mxu0 %v760
    %1001 = vmatmul.mubr.f32.gmra.mrb[0].mxu0 %v710
    %v1002 = vpop.f32.mrb[0].mxu0
    %v1003 = vadd.f32 %v873, %v1002
    %v1004 = vpop.f32.mrb[0].mxu0
    %1005 = vmatprep.mubr.f32.mxu0 %v763
    %1006 = vmatmul.mubr.f32.gmra.mrb[0].mxu0 %v714
    %v1007 = vpop.f32.mrb[0].mxu0
    %v1008 = vadd.f32 %v878, %v1007
    %v1009 = vpop.f32.mrb[0].mxu0
    %1010 = vmatprep.mubr.f32.mxu0 %v766
    %1011 = vmatmul.mubr.f32.gmra.mrb[0].mxu0 %v718
    %v1012 = vpop.f32.mrb[0].mxu0
    %v1013 = vadd.f32 %v883, %v1012
    %v1014 = vpop.f32.mrb[0].mxu0
    %1015 = vmatprep.mubr.f32.mxu0 %v769
    %1016 = vmatmul.mubr.f32.gmra.mrb[0].mxu0 %v722
    %v1017 = vpop.f32.mrb[0].mxu0
    %v1018 = vadd.f32 %v888, %v1017
    %v1019 = vpop.f32.mrb[0].mxu0
    %1020 = vmatprep.mubr.f32.mxu0 %v772
    %1021 = vmatmul.mubr.f32.gmra.mrb[0].mxu0 %v726
    %v1022 = vpop.f32.mrb[0].mxu0
    %v1023 = vadd.f32 %v893, %v1022
    %v1024 = vpop.f32.mrb[0].mxu0
    %1025 = vmatprep.mubr.f32.mxu0 %v775
    %1026 = vmatmul.mubr.f32.gmra.mrb[0].mxu0 %v730
    %v1027 = vpop.f32.mrb[0].mxu0
    %v1028 = vadd.f32 %v898, %v1027
    %v1029 = vpop.f32.mrb[0].mxu0
    %1030 = vmatprep.mubr.f32.mxu0 %v778
    %1031 = vmatmul.mubr.f32.gmra.mrb[0].mxu0 %v734
    %v1032 = vpop.f32.mrb[0].mxu0
    %v1033 = vadd.f32 %v903, %v1032
    %v1034 = vpop.f32.mrb[0].mxu0
    %1035 = vmatprep.mubr.f32.mxu0 %v781
    %1036 = vmatmul.mubr.f32.gmra.mrb[0].mxu0 %v738
    %v1037 = vpop.f32.mrb[0].mxu0
    %v1038 = vadd.f32 %v908, %v1037
    %v1039 = vpop.f32.mrb[0].mxu0
    %1040 = vmatprep.mubr.f32.mxu0 %v784
    %1041 = vmatmul.mubr.f32.gmra.mrb[0].mxu0 %v742
    %v1042 = vpop.f32.mrb[0].mxu0
    %v1043 = vadd.f32 %v913, %v1042
    %v1044 = vpop.f32.mrb[0].mxu0
    %1045 = vmatprep.mubr.f32.mxu0 %v787
    %1046 = vmatmul.mubr.f32.gmra.mrb[0].mxu0 %v746
    %v1047 = vpop.f32.mrb[0].mxu0
    %v1048 = vadd.f32 %v918, %v1047
    %v1049 = vpop.f32.mrb[0].mxu0
    %1050 = vmatprep.mubr.f32.mxu0 %v790
    %1051 = vmatmul.mubr.f32.gmra.mrb[0].mxu0 %v750
    %v1052 = vpop.f32.mrb[0].mxu0
    %v1053 = vadd.f32 %v923, %v1052
    %v1054 = vpop.f32.mrb[0].mxu0
    %1055 = vdwg.mxu0
    %s1056 = scalar_lea.vmem %s3, 416
    %v1057 = vld [vmem:[%s1056] sm:$0xff]
    %v1058 = vld [vmem:[%s1056 + $0x8] sm:$0xff]
    %v1059 = vld [vmem:[%s1056 + $0x10] sm:$0xff]
    %v1060 = vld [vmem:[%s1056 + $0x18] sm:$0xff]
    %v1061 = vld [vmem:[%s1056 + $0x20] sm:$0xff]
    %v1062 = vld [vmem:[%s1056 + $0x28] sm:$0xff]
    %v1063 = vld [vmem:[%s1056 + $0x30] sm:$0xff]
    %v1064 = vld [vmem:[%s1056 + $0x38] sm:$0xff]
    %v1065 = vld [vmem:[%s1056 + $0x40] sm:$0xff]
    %v1066 = vld [vmem:[%s1056 + $0x48] sm:$0xff]
    %v1067 = vld [vmem:[%s1056 + $0x50] sm:$0xff]
    %v1068 = vld [vmem:[%s1056 + $0x58] sm:$0xff]
    %v1069 = vld [vmem:[%s1056 + $0x60] sm:$0xff]
    %v1070 = vld [vmem:[%s1056 + $0x68] sm:$0xff]
    %v1071 = vld [vmem:[%s1056 + $0x70] sm:$0xff]
    %v1072 = vld [vmem:[%s1056 + $0x78] sm:$0xff]
    %v1073 = vld [vmem:[%s1056 + $0x80] sm:$0xff]
    %v1074 = vld [vmem:[%s1056 + $0x88] sm:$0xff]
    %v1075 = vld [vmem:[%s1056 + $0x90] sm:$0xff]
    %v1076 = vld [vmem:[%s1056 + $0x98] sm:$0xff]
    %v1077 = vld [vmem:[%s1056 + $0xa0] sm:$0xff]
    %v1078 = vld [vmem:[%s1056 + $0xa8] sm:$0xff]
    %v1079 = vld [vmem:[%s1056 + $0xb0] sm:$0xff]
    %v1080 = vld [vmem:[%s1056 + $0xb8] sm:$0xff]
    %v1081 = vld [vmem:[%s1056 + $0xc0] sm:$0xff]
    %v1082 = vld [vmem:[%s1056 + $0xc8] sm:$0xff]
    %v1083 = vld [vmem:[%s1056 + $0xd0] sm:$0xff]
    %v1084 = vld [vmem:[%s1056 + $0xd8] sm:$0xff]
    %v1085 = vld [vmem:[%s1056 + $0xe0] sm:$0xff]
    %v1086 = vld [vmem:[%s1056 + $0xe8] sm:$0xff]
    %v1087 = vld [vmem:[%s1056 + $0xf0] sm:$0xff]
    %v1088 = vld [vmem:[%s1056 + $0xf8] sm:$0xff]
    %v1089 = vld [vmem:[%s1056 + $0x100] sm:$0xff]
    %v1090 = vld [vmem:[%s1056 + $0x108] sm:$0xff]
    %v1091 = vld [vmem:[%s1056 + $0x110] sm:$0xff]
    %v1092 = vld [vmem:[%s1056 + $0x118] sm:$0xff]
    %v1093 = vld [vmem:[%s1056 + $0x120] sm:$0xff]
    %v1094 = vld [vmem:[%s1056 + $0x128] sm:$0xff]
    %v1095 = vld [vmem:[%s1056 + $0x130] sm:$0xff]
    %v1096 = vld [vmem:[%s1056 + $0x138] sm:$0xff]
    %v1097 = vld [vmem:[%s1056 + $0x140] sm:$0xff]
    %v1098 = vld [vmem:[%s1056 + $0x148] sm:$0xff]
    %v1099 = vld [vmem:[%s1056 + $0x150] sm:$0xff]
    %v1100 = vld [vmem:[%s1056 + $0x158] sm:$0xff]
    %v1101 = vld [vmem:[%s1056 + $0x160] sm:$0xff]
    %v1102 = vld [vmem:[%s1056 + $0x168] sm:$0xff]
    %v1103 = vld [vmem:[%s1056 + $0x170] sm:$0xff]
    %v1104 = vld [vmem:[%s1056 + $0x178] sm:$0xff]
    %v1105 = vld [vmem:[%s1056 + $0x180] sm:$0x3]
    %v1106 = vld [vmem:[%s1056 + $0x188] sm:$0x3]
    %v1107 = vld [vmem:[%s1056 + $0x190] sm:$0x3]
    %v1108 = vld [vmem:[%s1056 + $0x198] sm:$0x3]
    %v1110 = vsel %vm752, %v1060, 0
    %v1113 = vsel %vm752, %v1064, 0
    %v1116 = vsel %vm752, %v1068, 0
    %v1119 = vsel %vm752, %v1072, 0
    %v1122 = vsel %vm752, %v1076, 0
    %v1125 = vsel %vm752, %v1080, 0
    %v1128 = vsel %vm752, %v1084, 0
    %v1131 = vsel %vm752, %v1088, 0
    %v1134 = vsel %vm752, %v1092, 0
    %v1137 = vsel %vm752, %v1096, 0
    %v1140 = vsel %vm752, %v1100, 0
    %v1143 = vsel %vm752, %v1104, 0
    %v1146 = vsel %vm752, %v1108, 0
    %1148 = vmatprep.subr.mxu0 0.0
    %1149 = vmatpush1.msra.mxu0 %v643
    %1150 = vmatprep.subr.mxu0 0.0
    %1151 = vmatpush1.msra.mxu0 %v644
    %1152 = vmatprep.subr.mxu0 0.0
    %1153 = vmatpush1.msra.mxu0 %v645
    %1154 = vmatprep.subr.mxu0 0.0
    %1155 = vmatpush1.msra.mxu0 %v646
    %1156 = vmatprep.subr.mxu0 0.0
    %1157 = vmatpush1.msra.mxu0 %v647
    %1158 = vmatprep.subr.mxu0 0.0
    %1159 = vmatpush1.msra.mxu0 %v648
    %1160 = vmatprep.subr.mxu0 0.0
    %1161 = vmatpush1.msra.mxu0 %v649
    %1162 = vmatprep.subr.mxu0 0.0
    %1163 = vmatpush1.msra.mxu0 %v650
    %1164 = vmatprep.subr.mxu0 0.0
    %1165 = vmatpush1.msra.mxu0 %v651
    %1166 = vmatprep.subr.mxu0 0.0
    %1167 = vmatpush1.msra.mxu0 %v652
    %1168 = vmatprep.subr.mxu0 0.0
    %1169 = vmatpush1.msra.mxu0 %v653
    %1170 = vmatprep.subr.mxu0 0.0
    %1171 = vmatpush1.msra.mxu0 %v654
    %1172 = vmatprep.subr.mxu0 0.0
    %1173 = vmatpush1.msra.mxu0 %v655
    %1174 = vmatprep.subr.mxu0 0.0
    %1175 = vmatpush1.msra.mxu0 %v656
    %1176 = vmatprep.subr.mxu0 0.0
    %1177 = vmatpush1.msra.mxu0 %v657
    %1178 = vmatprep.subr.mxu0 0.0
    %1179 = vmatpush1.msra.mxu0 %v658
    %1180 = vmatprep.subr.mxu0 0.0
    %1181 = vmatpush1.msra.mxu0 %v659
    %1182 = vmatprep.subr.mxu0 0.0
    %1183 = vmatpush1.msra.mxu0 %v660
    %1184 = vmatprep.subr.mxu0 0.0
    %1185 = vmatpush1.msra.mxu0 %v661
    %1186 = vmatprep.subr.mxu0 0.0
    %1187 = vmatpush1.msra.mxu0 %v662
    %1188 = vmatprep.subr.mxu0 0.0
    %1189 = vmatpush1.msra.mxu0 %v663
    %1190 = vmatprep.subr.mxu0 0.0
    %1191 = vmatpush1.msra.mxu0 %v664
    %1192 = vmatprep.subr.mxu0 0.0
    %1193 = vmatpush1.msra.mxu0 %v665
    %1194 = vmatprep.subr.mxu0 0.0
    %1195 = vmatpush1.msra.mxu0 %v666
    %1196 = vmatprep.subr.mxu0 0.0
    %1197 = vmatpush1.msra.mxu0 %v667
    %1198 = vmatprep.subr.mxu0 0.0
    %1199 = vmatpush1.msra.mxu0 %v668
    %1200 = vmatprep.subr.mxu0 0.0
    %1201 = vmatpush1.msra.mxu0 %v669
    %1202 = vmatprep.subr.mxu0 0.0
    %1203 = vmatpush1.msra.mxu0 %v670
    %1204 = vmatprep.subr.mxu0 0.0
    %1205 = vmatpush1.msra.mxu0 %v671
    %1206 = vmatprep.subr.mxu0 0.0
    %1207 = vmatpush1.msra.mxu0 %v672
    %1208 = vmatprep.subr.mxu0 0.0
    %1209 = vmatpush1.msra.mxu0 %v673
    %1210 = vmatprep.subr.mxu0 0.0
    %1211 = vmatpush1.msra.mxu0 %v674
    %1212 = vmatprep.mubr.f32.mxu0 %v1058
    %1213 = vmatmul.mubr.f32.gmra.mrb[0].mxu0 %v1057
    %v1214 = vpop.f32.mrb[0].mxu0
    %v1215 = vadd.f32 0.0, %v1214
    %v1216 = vpop.f32.mrb[0].mxu0
    %1217 = vmatprep.mubr.f32.mxu0 %v1062
    %1218 = vmatmul.mubr.f32.gmra.mrb[0].mxu0 %v1061
    %v1219 = vpop.f32.mrb[0].mxu0
    %v1220 = vadd.f32 0.0, %v1219
    %v1221 = vpop.f32.mrb[0].mxu0
    %1222 = vmatprep.mubr.f32.mxu0 %v1066
    %1223 = vmatmul.mubr.f32.gmra.mrb[0].mxu0 %v1065
    %v1224 = vpop.f32.mrb[0].mxu0
    %v1225 = vadd.f32 0.0, %v1224
    %v1226 = vpop.f32.mrb[0].mxu0
    %1227 = vmatprep.mubr.f32.mxu0 %v1070
    %1228 = vmatmul.mubr.f32.gmra.mrb[0].mxu0 %v1069
    %v1229 = vpop.f32.mrb[0].mxu0
    %v1230 = vadd.f32 0.0, %v1229
    %v1231 = vpop.f32.mrb[0].mxu0
    %1232 = vmatprep.mubr.f32.mxu0 %v1074
    %1233 = vmatmul.mubr.f32.gmra.mrb[0].mxu0 %v1073
    %v1234 = vpop.f32.mrb[0].mxu0
    %v1235 = vadd.f32 0.0, %v1234
    %v1236 = vpop.f32.mrb[0].mxu0
    %1237 = vmatprep.mubr.f32.mxu0 %v1078
    %1238 = vmatmul.mubr.f32.gmra.mrb[0].mxu0 %v1077
    %v1239 = vpop.f32.mrb[0].mxu0
    %v1240 = vadd.f32 0.0, %v1239
    %v1241 = vpop.f32.mrb[0].mxu0
    %1242 = vmatprep.mubr.f32.mxu0 %v1082
    %1243 = vmatmul.mubr.f32.gmra.mrb[0].mxu0 %v1081
    %v1244 = vpop.f32.mrb[0].mxu0
    %v1245 = vadd.f32 0.0, %v1244
    %v1246 = vpop.f32.mrb[0].mxu0
    %1247 = vmatprep.mubr.f32.mxu0 %v1086
    %1248 = vmatmul.mubr.f32.gmra.mrb[0].mxu0 %v1085
    %v1249 = vpop.f32.mrb[0].mxu0
    %v1250 = vadd.f32 0.0, %v1249
    %v1251 = vpop.f32.mrb[0].mxu0
    %1252 = vmatprep.mubr.f32.mxu0 %v1090
    %1253 = vmatmul.mubr.f32.gmra.mrb[0].mxu0 %v1089
    %v1254 = vpop.f32.mrb[0].mxu0
    %v1255 = vadd.f32 0.0, %v1254
    %v1256 = vpop.f32.mrb[0].mxu0
    %1257 = vmatprep.mubr.f32.mxu0 %v1094
    %1258 = vmatmul.mubr.f32.gmra.mrb[0].mxu0 %v1093
    %v1259 = vpop.f32.mrb[0].mxu0
    %v1260 = vadd.f32 0.0, %v1259
    %v1261 = vpop.f32.mrb[0].mxu0
    %1262 = vmatprep.mubr.f32.mxu0 %v1098
    %1263 = vmatmul.mubr.f32.gmra.mrb[0].mxu0 %v1097
    %v1264 = vpop.f32.mrb[0].mxu0
    %v1265 = vadd.f32 0.0, %v1264
    %v1266 = vpop.f32.mrb[0].mxu0
    %1267 = vmatprep.mubr.f32.mxu0 %v1102
    %1268 = vmatmul.mubr.f32.gmra.mrb[0].mxu0 %v1101
    %v1269 = vpop.f32.mrb[0].mxu0
    %v1270 = vadd.f32 0.0, %v1269
    %v1271 = vpop.f32.mrb[0].mxu0
    %1272 = vmatprep.mubr.f32.mxu0 %v1106
    %1273 = vmatmul.mubr.f32.gmra.mrb[0].mxu0 %v1105
    %v1274 = vpop.f32.mrb[0].mxu0
    %v1275 = vadd.f32 0.0, %v1274
    %v1276 = vpop.f32.mrb[0].mxu0
    %1277 = vdwg.mxu0
    %1278 = vmatprep.subr.mxu0 0.0
    %1279 = vmatpush1.msra.mxu0 %v675
    %1280 = vmatprep.subr.mxu0 0.0
    %1281 = vmatpush1.msra.mxu0 %v676
    %1282 = vmatprep.subr.mxu0 0.0
    %1283 = vmatpush1.msra.mxu0 %v677
    %1284 = vmatprep.subr.mxu0 0.0
    %1285 = vmatpush1.msra.mxu0 %v678
    %1286 = vmatprep.subr.mxu0 0.0
    %1287 = vmatpush1.msra.mxu0 %v679
    %1288 = vmatprep.subr.mxu0 0.0
    %1289 = vmatpush1.msra.mxu0 %v680
    %1290 = vmatprep.subr.mxu0 0.0
    %1291 = vmatpush1.msra.mxu0 %v681
    %1292 = vmatprep.subr.mxu0 0.0
    %1293 = vmatpush1.msra.mxu0 %v682
    %1294 = vmatprep.subr.mxu0 0.0
    %1295 = vmatpush1.msra.mxu0 %v683
    %1296 = vmatprep.subr.mxu0 0.0
    %1297 = vmatpush1.msra.mxu0 %v684
    %1298 = vmatprep.subr.mxu0 0.0
    %1299 = vmatpush1.msra.mxu0 %v685
    %1300 = vmatprep.subr.mxu0 0.0
    %1301 = vmatpush1.msra.mxu0 %v686
    %1302 = vmatprep.subr.mxu0 0.0
    %1303 = vmatpush1.msra.mxu0 %v687
    %1304 = vmatprep.subr.mxu0 0.0
    %1305 = vmatpush1.msra.mxu0 %v688
    %1306 = vmatprep.subr.mxu0 0.0
    %1307 = vmatpush1.msra.mxu0 %v689
    %1308 = vmatprep.subr.mxu0 0.0
    %1309 = vmatpush1.msra.mxu0 %v690
    %1310 = vmatprep.subr.mxu0 0.0
    %1311 = vmatpush1.msra.mxu0 %v691
    %1312 = vmatprep.subr.mxu0 0.0
    %1313 = vmatpush1.msra.mxu0 %v692
    %1314 = vmatprep.subr.mxu0 0.0
    %1315 = vmatpush1.msra.mxu0 %v693
    %1316 = vmatprep.subr.mxu0 0.0
    %1317 = vmatpush1.msra.mxu0 %v694
    %1318 = vmatprep.subr.mxu0 0.0
    %1319 = vmatpush1.msra.mxu0 %v695
    %1320 = vmatprep.subr.mxu0 0.0
    %1321 = vmatpush1.msra.mxu0 %v696
    %1322 = vmatprep.subr.mxu0 0.0
    %1323 = vmatpush1.msra.mxu0 %v697
    %1324 = vmatprep.subr.mxu0 0.0
    %1325 = vmatpush1.msra.mxu0 %v698
    %1326 = vmatprep.subr.mxu0 0.0
    %1327 = vmatpush1.msra.mxu0 %v794
    %1328 = vmatprep.subr.mxu0 0.0
    %1329 = vmatpush1.msra.mxu0 0.0
    %1330 = vmatprep.subr.mxu0 0.0
    %1331 = vmatpush1.msra.mxu0 0.0
    %1332 = vmatprep.subr.mxu0 0.0
    %1333 = vmatpush1.msra.mxu0 0.0
    %1334 = vmatprep.subr.mxu0 0.0
    %1335 = vmatpush1.msra.mxu0 0.0
    %1336 = vmatprep.subr.mxu0 0.0
    %1337 = vmatpush1.msra.mxu0 0.0
    %1338 = vmatprep.subr.mxu0 0.0
    %1339 = vmatpush1.msra.mxu0 0.0
    %1340 = vmatprep.subr.mxu0 0.0
    %1341 = vmatpush1.msra.mxu0 0.0
    %1342 = vmatprep.mubr.f32.mxu0 %v1110
    %1343 = vmatmul.mubr.f32.gmra.mrb[0].mxu0 %v1059
    %v1344 = vpop.f32.mrb[0].mxu0
    %v1345 = vadd.f32 %v1215, %v1344
    %v1346 = vpop.f32.mrb[0].mxu0
    %1347 = vmatprep.mubr.f32.mxu0 %v1113
    %1348 = vmatmul.mubr.f32.gmra.mrb[0].mxu0 %v1063
    %v1349 = vpop.f32.mrb[0].mxu0
    %v1350 = vadd.f32 %v1220, %v1349
    %v1351 = vpop.f32.mrb[0].mxu0
    %1352 = vmatprep.mubr.f32.mxu0 %v1116
    %1353 = vmatmul.mubr.f32.gmra.mrb[0].mxu0 %v1067
    %v1354 = vpop.f32.mrb[0].mxu0
    %v1355 = vadd.f32 %v1225, %v1354
    %v1356 = vpop.f32.mrb[0].mxu0
    %1357 = vmatprep.mubr.f32.mxu0 %v1119
    %1358 = vmatmul.mubr.f32.gmra.mrb[0].mxu0 %v1071
    %v1359 = vpop.f32.mrb[0].mxu0
    %v1360 = vadd.f32 %v1230, %v1359
    %v1361 = vpop.f32.mrb[0].mxu0
    %1362 = vmatprep.mubr.f32.mxu0 %v1122
    %1363 = vmatmul.mubr.f32.gmra.mrb[0].mxu0 %v1075
    %v1364 = vpop.f32.mrb[0].mxu0
    %v1365 = vadd.f32 %v1235, %v1364
    %v1366 = vpop.f32.mrb[0].mxu0
    %1367 = vmatprep.mubr.f32.mxu0 %v1125
    %1368 = vmatmul.mubr.f32.gmra.mrb[0].mxu0 %v1079
    %v1369 = vpop.f32.mrb[0].mxu0
    %v1370 = vadd.f32 %v1240, %v1369
    %v1371 = vpop.f32.mrb[0].mxu0
    %1372 = vmatprep.mubr.f32.mxu0 %v1128
    %1373 = vmatmul.mubr.f32.gmra.mrb[0].mxu0 %v1083
    %v1374 = vpop.f32.mrb[0].mxu0
    %v1375 = vadd.f32 %v1245, %v1374
    %v1376 = vpop.f32.mrb[0].mxu0
    %1377 = vmatprep.mubr.f32.mxu0 %v1131
    %1378 = vmatmul.mubr.f32.gmra.mrb[0].mxu0 %v1087
    %v1379 = vpop.f32.mrb[0].mxu0
    %v1380 = vadd.f32 %v1250, %v1379
    %v1381 = vpop.f32.mrb[0].mxu0
    %1382 = vmatprep.mubr.f32.mxu0 %v1134
    %1383 = vmatmul.mubr.f32.gmra.mrb[0].mxu0 %v1091
    %v1384 = vpop.f32.mrb[0].mxu0
    %v1385 = vadd.f32 %v1255, %v1384
    %v1386 = vpop.f32.mrb[0].mxu0
    %1387 = vmatprep.mubr.f32.mxu0 %v1137
    %1388 = vmatmul.mubr.f32.gmra.mrb[0].mxu0 %v1095
    %v1389 = vpop.f32.mrb[0].mxu0
    %v1390 = vadd.f32 %v1260, %v1389
    %v1391 = vpop.f32.mrb[0].mxu0
    %1392 = vmatprep.mubr.f32.mxu0 %v1140
    %1393 = vmatmul.mubr.f32.gmra.mrb[0].mxu0 %v1099
    %v1394 = vpop.f32.mrb[0].mxu0
    %v1395 = vadd.f32 %v1265, %v1394
    %v1396 = vpop.f32.mrb[0].mxu0
    %1397 = vmatprep.mubr.f32.mxu0 %v1143
    %1398 = vmatmul.mubr.f32.gmra.mrb[0].mxu0 %v1103
    %v1399 = vpop.f32.mrb[0].mxu0
    %v1400 = vadd.f32 %v1270, %v1399
    %v1401 = vpop.f32.mrb[0].mxu0
    %1402 = vmatprep.mubr.f32.mxu0 %v1146
    %1403 = vmatmul.mubr.f32.gmra.mrb[0].mxu0 %v1107
    %v1404 = vpop.f32.mrb[0].mxu0
    %v1405 = vadd.f32 %v1275, %v1404
    %v1406 = vpop.f32.mrb[0].mxu0
    %1407 = vdwg.mxu0
    %v1408 = vmax.f32 %v993, %v1345
    %v1409 = vmax.f32 %v998, %v1350
    %v1410 = vmax.f32 %v1003, %v1355
    %v1411 = vmax.f32 %v1008, %v1360
    %v1412 = vmax.f32 %v1013, %v1365
    %v1413 = vmax.f32 %v1018, %v1370
    %v1414 = vmax.f32 %v1023, %v1375
    %v1415 = vmax.f32 %v1028, %v1380
    %v1416 = vmax.f32 %v1033, %v1385
    %v1417 = vmax.f32 %v1038, %v1390
    %v1418 = vmax.f32 %v1043, %v1395
    %v1419 = vmax.f32 %v1048, %v1400
    %v1420 = vmax.f32 %v1053, %v1405
    %s1421 = scalar_lea.vmem %s3, 832
    %v1422 = vld [vmem:[%s1421] sm:$0xff]
    %v1423 = vld [vmem:[%s1421 + $0x8] sm:$0xff]
    %v1424 = vld [vmem:[%s1421 + $0x10] sm:$0xff]
    %v1425 = vld [vmem:[%s1421 + $0x18] sm:$0xff]
    %v1426 = vld [vmem:[%s1421 + $0x20] sm:$0xff]
    %v1427 = vld [vmem:[%s1421 + $0x28] sm:$0xff]
    %v1428 = vld [vmem:[%s1421 + $0x30] sm:$0xff]
    %v1429 = vld [vmem:[%s1421 + $0x38] sm:$0xff]
    %v1430 = vld [vmem:[%s1421 + $0x40] sm:$0xff]
    %v1431 = vld [vmem:[%s1421 + $0x48] sm:$0xff]
    %v1432 = vld [vmem:[%s1421 + $0x50] sm:$0xff]
    %v1433 = vld [vmem:[%s1421 + $0x58] sm:$0xff]
    %v1434 = vld [vmem:[%s1421 + $0x60] sm:$0xff]
    %v1435 = vld [vmem:[%s1421 + $0x68] sm:$0xff]
    %v1436 = vld [vmem:[%s1421 + $0x70] sm:$0xff]
    %v1437 = vld [vmem:[%s1421 + $0x78] sm:$0xff]
    %v1438 = vld [vmem:[%s1421 + $0x80] sm:$0xff]
    %v1439 = vld [vmem:[%s1421 + $0x88] sm:$0xff]
    %v1440 = vld [vmem:[%s1421 + $0x90] sm:$0xff]
    %v1441 = vld [vmem:[%s1421 + $0x98] sm:$0xff]
    %v1442 = vld [vmem:[%s1421 + $0xa0] sm:$0xff]
    %v1443 = vld [vmem:[%s1421 + $0xa8] sm:$0xff]
    %v1444 = vld [vmem:[%s1421 + $0xb0] sm:$0xff]
    %v1445 = vld [vmem:[%s1421 + $0xb8] sm:$0xff]
    %v1446 = vld [vmem:[%s1421 + $0xc0] sm:$0xff]
    %v1447 = vld [vmem:[%s1421 + $0xc8] sm:$0xff]
    %v1448 = vld [vmem:[%s1421 + $0xd0] sm:$0xff]
    %v1449 = vld [vmem:[%s1421 + $0xd8] sm:$0xff]
    %v1450 = vld [vmem:[%s1421 + $0xe0] sm:$0xff]
    %v1451 = vld [vmem:[%s1421 + $0xe8] sm:$0xff]
    %v1452 = vld [vmem:[%s1421 + $0xf0] sm:$0xff]
    %v1453 = vld [vmem:[%s1421 + $0xf8] sm:$0xff]
    %v1454 = vld [vmem:[%s1421 + $0x100] sm:$0xff]
    %v1455 = vld [vmem:[%s1421 + $0x108] sm:$0xff]
    %v1456 = vld [vmem:[%s1421 + $0x110] sm:$0xff]
    %v1457 = vld [vmem:[%s1421 + $0x118] sm:$0xff]
    %v1458 = vld [vmem:[%s1421 + $0x120] sm:$0xff]
    %v1459 = vld [vmem:[%s1421 + $0x128] sm:$0xff]
    %v1460 = vld [vmem:[%s1421 + $0x130] sm:$0xff]
    %v1461 = vld [vmem:[%s1421 + $0x138] sm:$0xff]
    %v1462 = vld [vmem:[%s1421 + $0x140] sm:$0xff]
    %v1463 = vld [vmem:[%s1421 + $0x148] sm:$0xff]
    %v1464 = vld [vmem:[%s1421 + $0x150] sm:$0xff]
    %v1465 = vld [vmem:[%s1421 + $0x158] sm:$0xff]
    %v1466 = vld [vmem:[%s1421 + $0x160] sm:$0xff]
    %v1467 = vld [vmem:[%s1421 + $0x168] sm:$0xff]
    %v1468 = vld [vmem:[%s1421 + $0x170] sm:$0xff]
    %v1469 = vld [vmem:[%s1421 + $0x178] sm:$0xff]
    %v1470 = vld [vmem:[%s1421 + $0x180] sm:$0x3]
    %v1471 = vld [vmem:[%s1421 + $0x188] sm:$0x3]
    %v1472 = vld [vmem:[%s1421 + $0x190] sm:$0x3]
    %v1473 = vld [vmem:[%s1421 + $0x198] sm:$0x3]
    %v1475 = vsel %vm752, %v1425, 0
    %v1478 = vsel %vm752, %v1429, 0
    %v1481 = vsel %vm752, %v1433, 0
    %v1484 = vsel %vm752, %v1437, 0
    %v1487 = vsel %vm752, %v1441, 0
    %v1490 = vsel %vm752, %v1445, 0
    %v1493 = vsel %vm752, %v1449, 0
    %v1496 = vsel %vm752, %v1453, 0
    %v1499 = vsel %vm752, %v1457, 0
    %v1502 = vsel %vm752, %v1461, 0
    %v1505 = vsel %vm752, %v1465, 0
    %v1508 = vsel %vm752, %v1469, 0
    %v1511 = vsel %vm752, %v1473, 0
    %1513 = vmatprep.subr.mxu0 0.0
    %1514 = vmatpush1.msra.mxu0 %v643
    %1515 = vmatprep.subr.mxu0 0.0
    %1516 = vmatpush1.msra.mxu0 %v644
    %1517 = vmatprep.subr.mxu0 0.0
    %1518 = vmatpush1.msra.mxu0 %v645
    %1519 = vmatprep.subr.mxu0 0.0
    %1520 = vmatpush1.msra.mxu0 %v646
    %1521 = vmatprep.subr.mxu0 0.0
    %1522 = vmatpush1.msra.mxu0 %v647
    %1523 = vmatprep.subr.mxu0 0.0
    %1524 = vmatpush1.msra.mxu0 %v648
    %1525 = vmatprep.subr.mxu0 0.0
    %1526 = vmatpush1.msra.mxu0 %v649
    %1527 = vmatprep.subr.mxu0 0.0
    %1528 = vmatpush1.msra.mxu0 %v650
    %1529 = vmatprep.subr.mxu0 0.0
    %1530 = vmatpush1.msra.mxu0 %v651
    %1531 = vmatprep.subr.mxu0 0.0
    %1532 = vmatpush1.msra.mxu0 %v652
    %1533 = vmatprep.subr.mxu0 0.0
    %1534 = vmatpush1.msra.mxu0 %v653
    %1535 = vmatprep.subr.mxu0 0.0
    %1536 = vmatpush1.msra.mxu0 %v654
    %1537 = vmatprep.subr.mxu0 0.0
    %1538 = vmatpush1.msra.mxu0 %v655
    %1539 = vmatprep.subr.mxu0 0.0
    %1540 = vmatpush1.msra.mxu0 %v656
    %1541 = vmatprep.subr.mxu0 0.0
    %1542 = vmatpush1.msra.mxu0 %v657
    %1543 = vmatprep.subr.mxu0 0.0
    %1544 = vmatpush1.msra.mxu0 %v658
    %1545 = vmatprep.subr.mxu0 0.0
    %1546 = vmatpush1.msra.mxu0 %v659
    %1547 = vmatprep.subr.mxu0 0.0
    %1548 = vmatpush1.msra.mxu0 %v660
    %1549 = vmatprep.subr.mxu0 0.0
    %1550 = vmatpush1.msra.mxu0 %v661
    %1551 = vmatprep.subr.mxu0 0.0
    %1552 = vmatpush1.msra.mxu0 %v662
    %1553 = vmatprep.subr.mxu0 0.0
    %1554 = vmatpush1.msra.mxu0 %v663
    %1555 = vmatprep.subr.mxu0 0.0
    %1556 = vmatpush1.msra.mxu0 %v664
    %1557 = vmatprep.subr.mxu0 0.0
    %1558 = vmatpush1.msra.mxu0 %v665
    %1559 = vmatprep.subr.mxu0 0.0
    %1560 = vmatpush1.msra.mxu0 %v666
    %1561 = vmatprep.subr.mxu0 0.0
    %1562 = vmatpush1.msra.mxu0 %v667
    %1563 = vmatprep.subr.mxu0 0.0
    %1564 = vmatpush1.msra.mxu0 %v668
    %1565 = vmatprep.subr.mxu0 0.0
    %1566 = vmatpush1.msra.mxu0 %v669
    %1567 = vmatprep.subr.mxu0 0.0
    %1568 = vmatpush1.msra.mxu0 %v670
    %1569 = vmatprep.subr.mxu0 0.0
    %1570 = vmatpush1.msra.mxu0 %v671
    %1571 = vmatprep.subr.mxu0 0.0
    %1572 = vmatpush1.msra.mxu0 %v672
    %1573 = vmatprep.subr.mxu0 0.0
    %1574 = vmatpush1.msra.mxu0 %v673
    %1575 = vmatprep.subr.mxu0 0.0
    %1576 = vmatpush1.msra.mxu0 %v674
    %1577 = vmatprep.mubr.f32.mxu0 %v1423
    %1578 = vmatmul.mubr.f32.gmra.mrb[0].mxu0 %v1422
    %v1579 = vpop.f32.mrb[0].mxu0
    %v1580 = vadd.f32 0.0, %v1579
    %v1581 = vpop.f32.mrb[0].mxu0
    %1582 = vmatprep.mubr.f32.mxu0 %v1427
    %1583 = vmatmul.mubr.f32.gmra.mrb[0].mxu0 %v1426
    %v1584 = vpop.f32.mrb[0].mxu0
    %v1585 = vadd.f32 0.0, %v1584
    %v1586 = vpop.f32.mrb[0].mxu0
    %1587 = vmatprep.mubr.f32.mxu0 %v1431
    %1588 = vmatmul.mubr.f32.gmra.mrb[0].mxu0 %v1430
    %v1589 = vpop.f32.mrb[0].mxu0
    %v1590 = vadd.f32 0.0, %v1589
    %v1591 = vpop.f32.mrb[0].mxu0
    %1592 = vmatprep.mubr.f32.mxu0 %v1435
    %1593 = vmatmul.mubr.f32.gmra.mrb[0].mxu0 %v1434
    %v1594 = vpop.f32.mrb[0].mxu0
    %v1595 = vadd.f32 0.0, %v1594
    %v1596 = vpop.f32.mrb[0].mxu0
    %1597 = vmatprep.mubr.f32.mxu0 %v1439
    %1598 = vmatmul.mubr.f32.gmra.mrb[0].mxu0 %v1438
    %v1599 = vpop.f32.mrb[0].mxu0
    %v1600 = vadd.f32 0.0, %v1599
    %v1601 = vpop.f32.mrb[0].mxu0
    %1602 = vmatprep.mubr.f32.mxu0 %v1443
    %1603 = vmatmul.mubr.f32.gmra.mrb[0].mxu0 %v1442
    %v1604 = vpop.f32.mrb[0].mxu0
    %v1605 = vadd.f32 0.0, %v1604
    %v1606 = vpop.f32.mrb[0].mxu0
    %1607 = vmatprep.mubr.f32.mxu0 %v1447
    %1608 = vmatmul.mubr.f32.gmra.mrb[0].mxu0 %v1446
    %v1609 = vpop.f32.mrb[0].mxu0
    %v1610 = vadd.f32 0.0, %v1609
    %v1611 = vpop.f32.mrb[0].mxu0
    %1612 = vmatprep.mubr.f32.mxu0 %v1451
    %1613 = vmatmul.mubr.f32.gmra.mrb[0].mxu0 %v1450
    %v1614 = vpop.f32.mrb[0].mxu0
    %v1615 = vadd.f32 0.0, %v1614
    %v1616 = vpop.f32.mrb[0].mxu0
    %1617 = vmatprep.mubr.f32.mxu0 %v1455
    %1618 = vmatmul.mubr.f32.gmra.mrb[0].mxu0 %v1454
    %v1619 = vpop.f32.mrb[0].mxu0
    %v1620 = vadd.f32 0.0, %v1619
    %v1621 = vpop.f32.mrb[0].mxu0
    %1622 = vmatprep.mubr.f32.mxu0 %v1459
    %1623 = vmatmul.mubr.f32.gmra.mrb[0].mxu0 %v1458
    %v1624 = vpop.f32.mrb[0].mxu0
    %v1625 = vadd.f32 0.0, %v1624
    %v1626 = vpop.f32.mrb[0].mxu0
    %1627 = vmatprep.mubr.f32.mxu0 %v1463
    %1628 = vmatmul.mubr.f32.gmra.mrb[0].mxu0 %v1462
    %v1629 = vpop.f32.mrb[0].mxu0
    %v1630 = vadd.f32 0.0, %v1629
    %v1631 = vpop.f32.mrb[0].mxu0
    %1632 = vmatprep.mubr.f32.mxu0 %v1467
    %1633 = vmatmul.mubr.f32.gmra.mrb[0].mxu0 %v1466
    %v1634 = vpop.f32.mrb[0].mxu0
    %v1635 = vadd.f32 0.0, %v1634
    %v1636 = vpop.f32.mrb[0].mxu0
    %1637 = vmatprep.mubr.f32.mxu0 %v1471
    %1638 = vmatmul.mubr.f32.gmra.mrb[0].mxu0 %v1470
    %v1639 = vpop.f32.mrb[0].mxu0
    %v1640 = vadd.f32 0.0, %v1639
    %v1641 = vpop.f32.mrb[0].mxu0
    %1642 = vdwg.mxu0
    %1643 = vmatprep.subr.mxu0 0.0
    %1644 = vmatpush1.msra.mxu0 %v675
    %1645 = vmatprep.subr.mxu0 0.0
    %1646 = vmatpush1.msra.mxu0 %v676
    %1647 = vmatprep.subr.mxu0 0.0
    %1648 = vmatpush1.msra.mxu0 %v677
    %1649 = vmatprep.subr.mxu0 0.0
    %1650 = vmatpush1.msra.mxu0 %v678
    %1651 = vmatprep.subr.mxu0 0.0
    %1652 = vmatpush1.msra.mxu0 %v679
    %1653 = vmatprep.subr.mxu0 0.0
    %1654 = vmatpush1.msra.mxu0 %v680
    %1655 = vmatprep.subr.mxu0 0.0
    %1656 = vmatpush1.msra.mxu0 %v681
    %1657 = vmatprep.subr.mxu0 0.0
    %1658 = vmatpush1.msra.mxu0 %v682
    %1659 = vmatprep.subr.mxu0 0.0
    %1660 = vmatpush1.msra.mxu0 %v683
    %1661 = vmatprep.subr.mxu0 0.0
    %1662 = vmatpush1.msra.mxu0 %v684
    %1663 = vmatprep.subr.mxu0 0.0
    %1664 = vmatpush1.msra.mxu0 %v685
    %1665 = vmatprep.subr.mxu0 0.0
    %1666 = vmatpush1.msra.mxu0 %v686
    %1667 = vmatprep.subr.mxu0 0.0
    %1668 = vmatpush1.msra.mxu0 %v687
    %1669 = vmatprep.subr.mxu0 0.0
    %1670 = vmatpush1.msra.mxu0 %v688
    %1671 = vmatprep.subr.mxu0 0.0
    %1672 = vmatpush1.msra.mxu0 %v689
    %1673 = vmatprep.subr.mxu0 0.0
    %1674 = vmatpush1.msra.mxu0 %v690
    %1675 = vmatprep.subr.mxu0 0.0
    %1676 = vmatpush1.msra.mxu0 %v691
    %1677 = vmatprep.subr.mxu0 0.0
    %1678 = vmatpush1.msra.mxu0 %v692
    %1679 = vmatprep.subr.mxu0 0.0
    %1680 = vmatpush1.msra.mxu0 %v693
    %1681 = vmatprep.subr.mxu0 0.0
    %1682 = vmatpush1.msra.mxu0 %v694
    %1683 = vmatprep.subr.mxu0 0.0
    %1684 = vmatpush1.msra.mxu0 %v695
    %1685 = vmatprep.subr.mxu0 0.0
    %1686 = vmatpush1.msra.mxu0 %v696
    %1687 = vmatprep.subr.mxu0 0.0
    %1688 = vmatpush1.msra.mxu0 %v697
    %1689 = vmatprep.subr.mxu0 0.0
    %1690 = vmatpush1.msra.mxu0 %v698
    %1691 = vmatprep.subr.mxu0 0.0
    %1692 = vmatpush1.msra.mxu0 %v794
    %1693 = vmatprep.subr.mxu0 0.0
    %1694 = vmatpush1.msra.mxu0 0.0
    %1695 = vmatprep.subr.mxu0 0.0
    %1696 = vmatpush1.msra.mxu0 0.0
    %1697 = vmatprep.subr.mxu0 0.0
    %1698 = vmatpush1.msra.mxu0 0.0
    %1699 = vmatprep.subr.mxu0 0.0
    %1700 = vmatpush1.msra.mxu0 0.0
    %1701 = vmatprep.subr.mxu0 0.0
    %1702 = vmatpush1.msra.mxu0 0.0
    %1703 = vmatprep.subr.mxu0 0.0
    %1704 = vmatpush1.msra.mxu0 0.0
    %1705 = vmatprep.subr.mxu0 0.0
    %1706 = vmatpush1.msra.mxu0 0.0
    %1707 = vmatprep.mubr.f32.mxu0 %v1475
    %1708 = vmatmul.mubr.f32.gmra.mrb[0].mxu0 %v1424
    %v1709 = vpop.f32.mrb[0].mxu0
    %v1710 = vadd.f32 %v1580, %v1709
    %v1711 = vpop.f32.mrb[0].mxu0
    %1712 = vmatprep.mubr.f32.mxu0 %v1478
    %1713 = vmatmul.mubr.f32.gmra.mrb[0].mxu0 %v1428
    %v1714 = vpop.f32.mrb[0].mxu0
    %v1715 = vadd.f32 %v1585, %v1714
    %v1716 = vpop.f32.mrb[0].mxu0
    %1717 = vmatprep.mubr.f32.mxu0 %v1481
    %1718 = vmatmul.mubr.f32.gmra.mrb[0].mxu0 %v1432
    %v1719 = vpop.f32.mrb[0].mxu0
    %v1720 = vadd.f32 %v1590, %v1719
    %v1721 = vpop.f32.mrb[0].mxu0
    %1722 = vmatprep.mubr.f32.mxu0 %v1484
    %1723 = vmatmul.mubr.f32.gmra.mrb[0].mxu0 %v1436
    %v1724 = vpop.f32.mrb[0].mxu0
    %v1725 = vadd.f32 %v1595, %v1724
    %v1726 = vpop.f32.mrb[0].mxu0
    %1727 = vmatprep.mubr.f32.mxu0 %v1487
    %1728 = vmatmul.mubr.f32.gmra.mrb[0].mxu0 %v1440
    %v1729 = vpop.f32.mrb[0].mxu0
    %v1730 = vadd.f32 %v1600, %v1729
    %v1731 = vpop.f32.mrb[0].mxu0
    %1732 = vmatprep.mubr.f32.mxu0 %v1490
    %1733 = vmatmul.mubr.f32.gmra.mrb[0].mxu0 %v1444
    %v1734 = vpop.f32.mrb[0].mxu0
    %v1735 = vadd.f32 %v1605, %v1734
    %v1736 = vpop.f32.mrb[0].mxu0
    %1737 = vmatprep.mubr.f32.mxu0 %v1493
    %1738 = vmatmul.mubr.f32.gmra.mrb[0].mxu0 %v1448
    %v1739 = vpop.f32.mrb[0].mxu0
    %v1740 = vadd.f32 %v1610, %v1739
    %v1741 = vpop.f32.mrb[0].mxu0
    %1742 = vmatprep.mubr.f32.mxu0 %v1496
    %1743 = vmatmul.mubr.f32.gmra.mrb[0].mxu0 %v1452
    %v1744 = vpop.f32.mrb[0].mxu0
    %v1745 = vadd.f32 %v1615, %v1744
    %v1746 = vpop.f32.mrb[0].mxu0
    %1747 = vmatprep.mubr.f32.mxu0 %v1499
    %1748 = vmatmul.mubr.f32.gmra.mrb[0].mxu0 %v1456
    %v1749 = vpop.f32.mrb[0].mxu0
    %v1750 = vadd.f32 %v1620, %v1749
    %v1751 = vpop.f32.mrb[0].mxu0
    %1752 = vmatprep.mubr.f32.mxu0 %v1502
    %1753 = vmatmul.mubr.f32.gmra.mrb[0].mxu0 %v1460
    %v1754 = vpop.f32.mrb[0].mxu0
    %v1755 = vadd.f32 %v1625, %v1754
    %v1756 = vpop.f32.mrb[0].mxu0
    %1757 = vmatprep.mubr.f32.mxu0 %v1505
    %1758 = vmatmul.mubr.f32.gmra.mrb[0].mxu0 %v1464
    %v1759 = vpop.f32.mrb[0].mxu0
    %v1760 = vadd.f32 %v1630, %v1759
    %v1761 = vpop.f32.mrb[0].mxu0
    %1762 = vmatprep.mubr.f32.mxu0 %v1508
    %1763 = vmatmul.mubr.f32.gmra.mrb[0].mxu0 %v1468
    %v1764 = vpop.f32.mrb[0].mxu0
    %v1765 = vadd.f32 %v1635, %v1764
    %v1766 = vpop.f32.mrb[0].mxu0
    %1767 = vmatprep.mubr.f32.mxu0 %v1511
    %1768 = vmatmul.mubr.f32.gmra.mrb[0].mxu0 %v1472
    %v1769 = vpop.f32.mrb[0].mxu0
    %v1770 = vadd.f32 %v1640, %v1769
    %v1771 = vpop.f32.mrb[0].mxu0
    %1772 = vdwg.mxu0
    %v1773 = vmax.f32 %v1408, %v1710
    %v1774 = vmax.f32 %v1409, %v1715
    %v1775 = vmax.f32 %v1410, %v1720
    %v1776 = vmax.f32 %v1411, %v1725
    %v1777 = vmax.f32 %v1412, %v1730
    %v1778 = vmax.f32 %v1413, %v1735
    %v1779 = vmax.f32 %v1414, %v1740
    %v1780 = vmax.f32 %v1415, %v1745
    %v1781 = vmax.f32 %v1416, %v1750
    %v1782 = vmax.f32 %v1417, %v1755
    %v1783 = vmax.f32 %v1418, %v1760
    %v1784 = vmax.f32 %v1419, %v1765
    %v1785 = vmax.f32 %v1420, %v1770
    %s1786 = scalar_lea.vmem %s3, 1248
    %v1787 = vld [vmem:[%s1786] sm:$0xff]
    %v1788 = vld [vmem:[%s1786 + $0x8] sm:$0xff]
    %v1789 = vld [vmem:[%s1786 + $0x10] sm:$0xff]
    %v1790 = vld [vmem:[%s1786 + $0x18] sm:$0xff]
    %v1791 = vld [vmem:[%s1786 + $0x20] sm:$0xff]
    %v1792 = vld [vmem:[%s1786 + $0x28] sm:$0xff]
    %v1793 = vld [vmem:[%s1786 + $0x30] sm:$0xff]
    %v1794 = vld [vmem:[%s1786 + $0x38] sm:$0xff]
    %v1795 = vld [vmem:[%s1786 + $0x40] sm:$0xff]
    %v1796 = vld [vmem:[%s1786 + $0x48] sm:$0xff]
    %v1797 = vld [vmem:[%s1786 + $0x50] sm:$0xff]
    %v1798 = vld [vmem:[%s1786 + $0x58] sm:$0xff]
    %v1799 = vld [vmem:[%s1786 + $0x60] sm:$0xff]
    %v1800 = vld [vmem:[%s1786 + $0x68] sm:$0xff]
    %v1801 = vld [vmem:[%s1786 + $0x70] sm:$0xff]
    %v1802 = vld [vmem:[%s1786 + $0x78] sm:$0xff]
    %v1803 = vld [vmem:[%s1786 + $0x80] sm:$0xff]
    %v1804 = vld [vmem:[%s1786 + $0x88] sm:$0xff]
    %v1805 = vld [vmem:[%s1786 + $0x90] sm:$0xff]
    %v1806 = vld [vmem:[%s1786 + $0x98] sm:$0xff]
    %v1807 = vld [vmem:[%s1786 + $0xa0] sm:$0xff]
    %v1808 = vld [vmem:[%s1786 + $0xa8] sm:$0xff]
    %v1809 = vld [vmem:[%s1786 + $0xb0] sm:$0xff]
    %v1810 = vld [vmem:[%s1786 + $0xb8] sm:$0xff]
    %v1811 = vld [vmem:[%s1786 + $0xc0] sm:$0xff]
    %v1812 = vld [vmem:[%s1786 + $0xc8] sm:$0xff]
    %v1813 = vld [vmem:[%s1786 + $0xd0] sm:$0xff]
    %v1814 = vld [vmem:[%s1786 + $0xd8] sm:$0xff]
    %v1815 = vld [vmem:[%s1786 + $0xe0] sm:$0xff]
    %v1816 = vld [vmem:[%s1786 + $0xe8] sm:$0xff]
    %v1817 = vld [vmem:[%s1786 + $0xf0] sm:$0xff]
    %v1818 = vld [vmem:[%s1786 + $0xf8] sm:$0xff]
    %v1819 = vld [vmem:[%s1786 + $0x100] sm:$0xff]
    %v1820 = vld [vmem:[%s1786 + $0x108] sm:$0xff]
    %v1821 = vld [vmem:[%s1786 + $0x110] sm:$0xff]
    %v1822 = vld [vmem:[%s1786 + $0x118] sm:$0xff]
    %v1823 = vld [vmem:[%s1786 + $0x120] sm:$0xff]
    %v1824 = vld [vmem:[%s1786 + $0x128] sm:$0xff]
    %v1825 = vld [vmem:[%s1786 + $0x130] sm:$0xff]
    %v1826 = vld [vmem:[%s1786 + $0x138] sm:$0xff]
    %v1827 = vld [vmem:[%s1786 + $0x140] sm:$0xff]
    %v1828 = vld [vmem:[%s1786 + $0x148] sm:$0xff]
    %v1829 = vld [vmem:[%s1786 + $0x150] sm:$0xff]
    %v1830 = vld [vmem:[%s1786 + $0x158] sm:$0xff]
    %v1831 = vld [vmem:[%s1786 + $0x160] sm:$0xff]
    %v1832 = vld [vmem:[%s1786 + $0x168] sm:$0xff]
    %v1833 = vld [vmem:[%s1786 + $0x170] sm:$0xff]
    %v1834 = vld [vmem:[%s1786 + $0x178] sm:$0xff]
    %v1835 = vld [vmem:[%s1786 + $0x180] sm:$0x3]
    %v1836 = vld [vmem:[%s1786 + $0x188] sm:$0x3]
    %v1837 = vld [vmem:[%s1786 + $0x190] sm:$0x3]
    %v1838 = vld [vmem:[%s1786 + $0x198] sm:$0x3]
    %v1840 = vsel %vm752, %v1790, 0
    %v1843 = vsel %vm752, %v1794, 0
    %v1846 = vsel %vm752, %v1798, 0
    %v1849 = vsel %vm752, %v1802, 0
    %v1852 = vsel %vm752, %v1806, 0
    %v1855 = vsel %vm752, %v1810, 0
    %v1858 = vsel %vm752, %v1814, 0
    %v1861 = vsel %vm752, %v1818, 0
    %v1864 = vsel %vm752, %v1822, 0
    %v1867 = vsel %vm752, %v1826, 0
    %v1870 = vsel %vm752, %v1830, 0
    %v1873 = vsel %vm752, %v1834, 0
    %v1876 = vsel %vm752, %v1838, 0
    %1878 = vmatprep.subr.mxu0 0.0
    %1879 = vmatpush1.msra.mxu0 %v643
    %1880 = vmatprep.subr.mxu0 0.0
    %1881 = vmatpush1.msra.mxu0 %v644
    %1882 = vmatprep.subr.mxu0 0.0
    %1883 = vmatpush1.msra.mxu0 %v645
    %1884 = vmatprep.subr.mxu0 0.0
    %1885 = vmatpush1.msra.mxu0 %v646
    %1886 = vmatprep.subr.mxu0 0.0
    %1887 = vmatpush1.msra.mxu0 %v647
    %1888 = vmatprep.subr.mxu0 0.0
    %1889 = vmatpush1.msra.mxu0 %v648
    %1890 = vmatprep.subr.mxu0 0.0
    %1891 = vmatpush1.msra.mxu0 %v649
    %1892 = vmatprep.subr.mxu0 0.0
    %1893 = vmatpush1.msra.mxu0 %v650
    %1894 = vmatprep.subr.mxu0 0.0
    %1895 = vmatpush1.msra.mxu0 %v651
    %1896 = vmatprep.subr.mxu0 0.0
    %1897 = vmatpush1.msra.mxu0 %v652
    %1898 = vmatprep.subr.mxu0 0.0
    %1899 = vmatpush1.msra.mxu0 %v653
    %1900 = vmatprep.subr.mxu0 0.0
    %1901 = vmatpush1.msra.mxu0 %v654
    %1902 = vmatprep.subr.mxu0 0.0
    %1903 = vmatpush1.msra.mxu0 %v655
    %1904 = vmatprep.subr.mxu0 0.0
    %1905 = vmatpush1.msra.mxu0 %v656
    %1906 = vmatprep.subr.mxu0 0.0
    %1907 = vmatpush1.msra.mxu0 %v657
    %1908 = vmatprep.subr.mxu0 0.0
    %1909 = vmatpush1.msra.mxu0 %v658
    %1910 = vmatprep.subr.mxu0 0.0
    %1911 = vmatpush1.msra.mxu0 %v659
    %1912 = vmatprep.subr.mxu0 0.0
    %1913 = vmatpush1.msra.mxu0 %v660
    %1914 = vmatprep.subr.mxu0 0.0
    %1915 = vmatpush1.msra.mxu0 %v661
    %1916 = vmatprep.subr.mxu0 0.0
    %1917 = vmatpush1.msra.mxu0 %v662
    %1918 = vmatprep.subr.mxu0 0.0
    %1919 = vmatpush1.msra.mxu0 %v663
    %1920 = vmatprep.subr.mxu0 0.0
    %1921 = vmatpush1.msra.mxu0 %v664
    %1922 = vmatprep.subr.mxu0 0.0
    %1923 = vmatpush1.msra.mxu0 %v665
    %1924 = vmatprep.subr.mxu0 0.0
    %1925 = vmatpush1.msra.mxu0 %v666
    %1926 = vmatprep.subr.mxu0 0.0
    %1927 = vmatpush1.msra.mxu0 %v667
    %1928 = vmatprep.subr.mxu0 0.0
    %1929 = vmatpush1.msra.mxu0 %v668
    %1930 = vmatprep.subr.mxu0 0.0
    %1931 = vmatpush1.msra.mxu0 %v669
    %1932 = vmatprep.subr.mxu0 0.0
    %1933 = vmatpush1.msra.mxu0 %v670
    %1934 = vmatprep.subr.mxu0 0.0
    %1935 = vmatpush1.msra.mxu0 %v671
    %1936 = vmatprep.subr.mxu0 0.0
    %1937 = vmatpush1.msra.mxu0 %v672
    %1938 = vmatprep.subr.mxu0 0.0
    %1939 = vmatpush1.msra.mxu0 %v673
    %1940 = vmatprep.subr.mxu0 0.0
    %1941 = vmatpush1.msra.mxu0 %v674
    %1942 = vmatprep.mubr.f32.mxu0 %v1788
    %1943 = vmatmul.mubr.f32.gmra.mrb[0].mxu0 %v1787
    %v1944 = vpop.f32.mrb[0].mxu0
    %v1945 = vadd.f32 0.0, %v1944
    %v1946 = vpop.f32.mrb[0].mxu0
    %1947 = vmatprep.mubr.f32.mxu0 %v1792
    %1948 = vmatmul.mubr.f32.gmra.mrb[0].mxu0 %v1791
    %v1949 = vpop.f32.mrb[0].mxu0
    %v1950 = vadd.f32 0.0, %v1949
    %v1951 = vpop.f32.mrb[0].mxu0
    %1952 = vmatprep.mubr.f32.mxu0 %v1796
    %1953 = vmatmul.mubr.f32.gmra.mrb[0].mxu0 %v1795
    %v1954 = vpop.f32.mrb[0].mxu0
    %v1955 = vadd.f32 0.0, %v1954
    %v1956 = vpop.f32.mrb[0].mxu0
    %1957 = vmatprep.mubr.f32.mxu0 %v1800
    %1958 = vmatmul.mubr.f32.gmra.mrb[0].mxu0 %v1799
    %v1959 = vpop.f32.mrb[0].mxu0
    %v1960 = vadd.f32 0.0, %v1959
    %v1961 = vpop.f32.mrb[0].mxu0
    %1962 = vmatprep.mubr.f32.mxu0 %v1804
    %1963 = vmatmul.mubr.f32.gmra.mrb[0].mxu0 %v1803
    %v1964 = vpop.f32.mrb[0].mxu0
    %v1965 = vadd.f32 0.0, %v1964
    %v1966 = vpop.f32.mrb[0].mxu0
    %1967 = vmatprep.mubr.f32.mxu0 %v1808
    %1968 = vmatmul.mubr.f32.gmra.mrb[0].mxu0 %v1807
    %v1969 = vpop.f32.mrb[0].mxu0
    %v1970 = vadd.f32 0.0, %v1969
    %v1971 = vpop.f32.mrb[0].mxu0
    %1972 = vmatprep.mubr.f32.mxu0 %v1812
    %1973 = vmatmul.mubr.f32.gmra.mrb[0].mxu0 %v1811
    %v1974 = vpop.f32.mrb[0].mxu0
    %v1975 = vadd.f32 0.0, %v1974
    %v1976 = vpop.f32.mrb[0].mxu0
    %1977 = vmatprep.mubr.f32.mxu0 %v1816
    %1978 = vmatmul.mubr.f32.gmra.mrb[0].mxu0 %v1815
    %v1979 = vpop.f32.mrb[0].mxu0
    %v1980 = vadd.f32 0.0, %v1979
    %v1981 = vpop.f32.mrb[0].mxu0
    %1982 = vmatprep.mubr.f32.mxu0 %v1820
    %1983 = vmatmul.mubr.f32.gmra.mrb[0].mxu0 %v1819
    %v1984 = vpop.f32.mrb[0].mxu0
    %v1985 = vadd.f32 0.0, %v1984
    %v1986 = vpop.f32.mrb[0].mxu0
    %1987 = vmatprep.mubr.f32.mxu0 %v1824
    %1988 = vmatmul.mubr.f32.gmra.mrb[0].mxu0 %v1823
    %v1989 = vpop.f32.mrb[0].mxu0
    %v1990 = vadd.f32 0.0, %v1989
    %v1991 = vpop.f32.mrb[0].mxu0
    %1992 = vmatprep.mubr.f32.mxu0 %v1828
    %1993 = vmatmul.mubr.f32.gmra.mrb[0].mxu0 %v1827
    %v1994 = vpop.f32.mrb[0].mxu0
    %v1995 = vadd.f32 0.0, %v1994
    %v1996 = vpop.f32.mrb[0].mxu0
    %1997 = vmatprep.mubr.f32.mxu0 %v1832
    %1998 = vmatmul.mubr.f32.gmra.mrb[0].mxu0 %v1831
    %v1999 = vpop.f32.mrb[0].mxu0
    %v2000 = vadd.f32 0.0, %v1999
    %v2001 = vpop.f32.mrb[0].mxu0
    %2002 = vmatprep.mubr.f32.mxu0 %v1836
    %2003 = vmatmul.mubr.f32.gmra.mrb[0].mxu0 %v1835
    %v2004 = vpop.f32.mrb[0].mxu0
    %v2005 = vadd.f32 0.0, %v2004
    %v2006 = vpop.f32.mrb[0].mxu0
    %2007 = vdwg.mxu0
    %2008 = vmatprep.subr.mxu0 0.0
    %2009 = vmatpush1.msra.mxu0 %v675
    %2010 = vmatprep.subr.mxu0 0.0
    %2011 = vmatpush1.msra.mxu0 %v676
    %2012 = vmatprep.subr.mxu0 0.0
    %2013 = vmatpush1.msra.mxu0 %v677
    %2014 = vmatprep.subr.mxu0 0.0
    %2015 = vmatpush1.msra.mxu0 %v678
    %2016 = vmatprep.subr.mxu0 0.0
    %2017 = vmatpush1.msra.mxu0 %v679
    %2018 = vmatprep.subr.mxu0 0.0
    %2019 = vmatpush1.msra.mxu0 %v680
    %2020 = vmatprep.subr.mxu0 0.0
    %2021 = vmatpush1.msra.mxu0 %v681
    %2022 = vmatprep.subr.mxu0 0.0
    %2023 = vmatpush1.msra.mxu0 %v682
    %2024 = vmatprep.subr.mxu0 0.0
    %2025 = vmatpush1.msra.mxu0 %v683
    %2026 = vmatprep.subr.mxu0 0.0
    %2027 = vmatpush1.msra.mxu0 %v684
    %2028 = vmatprep.subr.mxu0 0.0
    %2029 = vmatpush1.msra.mxu0 %v685
    %2030 = vmatprep.subr.mxu0 0.0
    %2031 = vmatpush1.msra.mxu0 %v686
    %2032 = vmatprep.subr.mxu0 0.0
    %2033 = vmatpush1.msra.mxu0 %v687
    %2034 = vmatprep.subr.mxu0 0.0
    %2035 = vmatpush1.msra.mxu0 %v688
    %2036 = vmatprep.subr.mxu0 0.0
    %2037 = vmatpush1.msra.mxu0 %v689
    %2038 = vmatprep.subr.mxu0 0.0
    %2039 = vmatpush1.msra.mxu0 %v690
    %2040 = vmatprep.subr.mxu0 0.0
    %2041 = vmatpush1.msra.mxu0 %v691
    %2042 = vmatprep.subr.mxu0 0.0
    %2043 = vmatpush1.msra.mxu0 %v692
    %2044 = vmatprep.subr.mxu0 0.0
    %2045 = vmatpush1.msra.mxu0 %v693
    %2046 = vmatprep.subr.mxu0 0.0
    %2047 = vmatpush1.msra.mxu0 %v694
    %2048 = vmatprep.subr.mxu0 0.0
    %2049 = vmatpush1.msra.mxu0 %v695
    %2050 = vmatprep.subr.mxu0 0.0
    %2051 = vmatpush1.msra.mxu0 %v696
    %2052 = vmatprep.subr.mxu0 0.0
    %2053 = vmatpush1.msra.mxu0 %v697
    %2054 = vmatprep.subr.mxu0 0.0
    %2055 = vmatpush1.msra.mxu0 %v698
    %2056 = vmatprep.subr.mxu0 0.0
    %2057 = vmatpush1.msra.mxu0 %v794
    %2058 = vmatprep.subr.mxu0 0.0
    %2059 = vmatpush1.msra.mxu0 0.0
    %2060 = vmatprep.subr.mxu0 0.0
    %2061 = vmatpush1.msra.mxu0 0.0
    %2062 = vmatprep.subr.mxu0 0.0
    %2063 = vmatpush1.msra.mxu0 0.0
    %2064 = vmatprep.subr.mxu0 0.0
    %2065 = vmatpush1.msra.mxu0 0.0
    %2066 = vmatprep.subr.mxu0 0.0
    %2067 = vmatpush1.msra.mxu0 0.0
    %2068 = vmatprep.subr.mxu0 0.0
    %2069 = vmatpush1.msra.mxu0 0.0
    %2070 = vmatprep.subr.mxu0 0.0
    %2071 = vmatpush1.msra.mxu0 0.0
    %2072 = vmatprep.mubr.f32.mxu0 %v1840
    %2073 = vmatmul.mubr.f32.gmra.mrb[0].mxu0 %v1789
    %v2074 = vpop.f32.mrb[0].mxu0
    %v2075 = vadd.f32 %v1945, %v2074
    %v2076 = vpop.f32.mrb[0].mxu0
    %2077 = vmatprep.mubr.f32.mxu0 %v1843
    %2078 = vmatmul.mubr.f32.gmra.mrb[0].mxu0 %v1793
    %v2079 = vpop.f32.mrb[0].mxu0
    %v2080 = vadd.f32 %v1950, %v2079
    %v2081 = vpop.f32.mrb[0].mxu0
    %2082 = vmatprep.mubr.f32.mxu0 %v1846
    %2083 = vmatmul.mubr.f32.gmra.mrb[0].mxu0 %v1797
    %v2084 = vpop.f32.mrb[0].mxu0
    %v2085 = vadd.f32 %v1955, %v2084
    %v2086 = vpop.f32.mrb[0].mxu0
    %2087 = vmatprep.mubr.f32.mxu0 %v1849
    %2088 = vmatmul.mubr.f32.gmra.mrb[0].mxu0 %v1801
    %v2089 = vpop.f32.mrb[0].mxu0
    %v2090 = vadd.f32 %v1960, %v2089
    %v2091 = vpop.f32.mrb[0].mxu0
    %2092 = vmatprep.mubr.f32.mxu0 %v1852
    %2093 = vmatmul.mubr.f32.gmra.mrb[0].mxu0 %v1805
    %v2094 = vpop.f32.mrb[0].mxu0
    %v2095 = vadd.f32 %v1965, %v2094
    %v2096 = vpop.f32.mrb[0].mxu0
    %2097 = vmatprep.mubr.f32.mxu0 %v1855
    %2098 = vmatmul.mubr.f32.gmra.mrb[0].mxu0 %v1809
    %v2099 = vpop.f32.mrb[0].mxu0
    %v2100 = vadd.f32 %v1970, %v2099
    %v2101 = vpop.f32.mrb[0].mxu0
    %2102 = vmatprep.mubr.f32.mxu0 %v1858
    %2103 = vmatmul.mubr.f32.gmra.mrb[0].mxu0 %v1813
    %v2104 = vpop.f32.mrb[0].mxu0
    %v2105 = vadd.f32 %v1975, %v2104
    %v2106 = vpop.f32.mrb[0].mxu0
    %2107 = vmatprep.mubr.f32.mxu0 %v1861
    %2108 = vmatmul.mubr.f32.gmra.mrb[0].mxu0 %v1817
    %v2109 = vpop.f32.mrb[0].mxu0
    %v2110 = vadd.f32 %v1980, %v2109
    %v2111 = vpop.f32.mrb[0].mxu0
    %2112 = vmatprep.mubr.f32.mxu0 %v1864
    %2113 = vmatmul.mubr.f32.gmra.mrb[0].mxu0 %v1821
    %v2114 = vpop.f32.mrb[0].mxu0
    %v2115 = vadd.f32 %v1985, %v2114
    %v2116 = vpop.f32.mrb[0].mxu0
    %2117 = vmatprep.mubr.f32.mxu0 %v1867
    %2118 = vmatmul.mubr.f32.gmra.mrb[0].mxu0 %v1825
    %v2119 = vpop.f32.mrb[0].mxu0
    %v2120 = vadd.f32 %v1990, %v2119
    %v2121 = vpop.f32.mrb[0].mxu0
    %2122 = vmatprep.mubr.f32.mxu0 %v1870
    %2123 = vmatmul.mubr.f32.gmra.mrb[0].mxu0 %v1829
    %v2124 = vpop.f32.mrb[0].mxu0
    %v2125 = vadd.f32 %v1995, %v2124
    %v2126 = vpop.f32.mrb[0].mxu0
    %2127 = vmatprep.mubr.f32.mxu0 %v1873
    %2128 = vmatmul.mubr.f32.gmra.mrb[0].mxu0 %v1833
    %v2129 = vpop.f32.mrb[0].mxu0
    %v2130 = vadd.f32 %v2000, %v2129
    %v2131 = vpop.f32.mrb[0].mxu0
    %2132 = vmatprep.mubr.f32.mxu0 %v1876
    %2133 = vmatmul.mubr.f32.gmra.mrb[0].mxu0 %v1837
    %v2134 = vpop.f32.mrb[0].mxu0
    %v2135 = vadd.f32 %v2005, %v2134
    %v2136 = vpop.f32.mrb[0].mxu0
    %2137 = vdwg.mxu0
    %v2138 = vmax.f32 %v1773, %v2075
    %v2139 = vmax.f32 %v1774, %v2080
    %v2140 = vmax.f32 %v1775, %v2085
    %v2141 = vmax.f32 %v1776, %v2090
    %v2142 = vmax.f32 %v1777, %v2095
    %v2143 = vmax.f32 %v1778, %v2100
    %v2144 = vmax.f32 %v1779, %v2105
    %v2145 = vmax.f32 %v1780, %v2110
    %v2146 = vmax.f32 %v1781, %v2115
    %v2147 = vmax.f32 %v1782, %v2120
    %v2148 = vmax.f32 %v1783, %v2125
    %v2149 = vmax.f32 %v1784, %v2130
    %v2150 = vmax.f32 %v1785, %v2135
    %v2151 = vld [vmem:[%s4] sm:$0xff]
    %v2152 = vld [vmem:[%s4 + $0x8] sm:$0xff]
    %v2153 = vld [vmem:[%s4 + $0x10] sm:$0xff]
    %v2154 = vld [vmem:[%s4 + $0x18] sm:$0xff]
    %v2155 = vld [vmem:[%s4 + $0x20] sm:$0xff]
    %v2156 = vld [vmem:[%s4 + $0x28] sm:$0xff]
    %v2157 = vld [vmem:[%s4 + $0x30] sm:$0xff]
    %v2158 = vld [vmem:[%s4 + $0x38] sm:$0xff]
    %v2159 = vld [vmem:[%s4 + $0x40] sm:$0xff]
    %vm2160 = vcmask 801792
    %v2162 = vsel %vm2160, %v2151, 0
    %v2165 = vsel %vm2160, %v2152, 0
    %v2168 = vsel %vm2160, %v2153, 0
    %v2171 = vsel %vm2160, %v2154, 0
    %v2174 = vsel %vm2160, %v2155, 0
    %v2177 = vsel %vm2160, %v2156, 0
    %v2180 = vsel %vm2160, %v2157, 0
    %v2183 = vsel %vm2160, %v2158, 0
    %v2186 = vsel %vm2160, %v2159, 0
    %v2189 = vsel %vm792, %v2150, 0
    %2191 = vmatprep.subr.mxu0 0.0
    %2192 = vmatpush1.msra.mxu0 %v2138
    %2193 = vmatprep.subr.mxu0 0.0
    %2194 = vmatpush1.msra.mxu0 %v2139
    %2195 = vmatprep.subr.mxu0 0.0
    %2196 = vmatpush1.msra.mxu0 %v2140
    %2197 = vmatprep.subr.mxu0 0.0
    %2198 = vmatpush1.msra.mxu0 %v2141
    %2199 = vmatprep.subr.mxu0 0.0
    %2200 = vmatpush1.msra.mxu0 %v2142
    %2201 = vmatprep.subr.mxu0 0.0
    %2202 = vmatpush1.msra.mxu0 %v2143
    %2203 = vmatprep.subr.mxu0 0.0
    %2204 = vmatpush1.msra.mxu0 %v2144
    %2205 = vmatprep.subr.mxu0 0.0
    %2206 = vmatpush1.msra.mxu0 %v2145
    %2207 = vmatprep.subr.mxu0 0.0
    %2208 = vmatpush1.msra.mxu0 %v2146
    %2209 = vmatprep.subr.mxu0 0.0
    %2210 = vmatpush1.msra.mxu0 %v2147
    %2211 = vmatprep.subr.mxu0 0.0
    %2212 = vmatpush1.msra.mxu0 %v2148
    %2213 = vmatprep.subr.mxu0 0.0
    %2214 = vmatpush1.msra.mxu0 %v2149
    %2215 = vmatprep.subr.mxu0 0.0
    %2216 = vmatpush1.msra.mxu0 %v2189
    %2217 = vmatprep.subr.mxu0 0.0
    %2218 = vmatpush1.msra.mxu0 0.0
    %2219 = vmatprep.subr.mxu0 0.0
    %2220 = vmatpush1.msra.mxu0 0.0
    %2221 = vmatprep.subr.mxu0 0.0
    %2222 = vmatpush1.msra.mxu0 0.0
    %2223 = vmatprep.subr.mxu0 0.0
    %2224 = vmatpush1.msra.mxu0 0.0
    %2225 = vmatprep.subr.mxu0 0.0
    %2226 = vmatpush1.msra.mxu0 0.0
    %2227 = vmatprep.subr.mxu0 0.0
    %2228 = vmatpush1.msra.mxu0 0.0
    %2229 = vmatprep.subr.mxu0 0.0
    %2230 = vmatpush1.msra.mxu0 0.0
    %2231 = vmatprep.subr.mxu0 0.0
    %2232 = vmatpush1.msra.mxu0 0.0
    %2233 = vmatprep.subr.mxu0 0.0
    %2234 = vmatpush1.msra.mxu0 0.0
    %2235 = vmatprep.subr.mxu0 0.0
    %2236 = vmatpush1.msra.mxu0 0.0
    %2237 = vmatprep.subr.mxu0 0.0
    %2238 = vmatpush1.msra.mxu0 0.0
    %2239 = vmatprep.subr.mxu0 0.0
    %2240 = vmatpush1.msra.mxu0 0.0
    %2241 = vmatprep.subr.mxu0 0.0
    %2242 = vmatpush1.msra.mxu0 0.0
    %2243 = vmatprep.subr.mxu0 0.0
    %2244 = vmatpush1.msra.mxu0 0.0
    %2245 = vmatprep.subr.mxu0 0.0
    %2246 = vmatpush1.msra.mxu0 0.0
    %2247 = vmatprep.subr.mxu0 0.0
    %2248 = vmatpush1.msra.mxu0 0.0
    %2249 = vmatprep.subr.mxu0 0.0
    %2250 = vmatpush1.msra.mxu0 0.0
    %2251 = vmatprep.subr.mxu0 0.0
    %2252 = vmatpush1.msra.mxu0 0.0
    %2253 = vmatprep.subr.mxu0 0.0
    %2254 = vmatpush1.msra.mxu0 0.0
    %2255 = vmatprep.mubr.f32.mxu0 0.0
    %2256 = vmatmul.mubr.f32.gmra.mrb[0].mxu0 %v2162
    %v2257 = vpop.f32.mrb[0].mxu0
    %v2258 = vadd.f32 0.0, %v2257
    %v2259 = vpop.f32.mrb[0].mxu0
    %2260 = vmatprep.mubr.f32.mxu0 0.0
    %2261 = vmatmul.mubr.f32.gmra.mrb[0].mxu0 %v2165
    %v2262 = vpop.f32.mrb[0].mxu0
    %v2263 = vadd.f32 0.0, %v2262
    %v2264 = vpop.f32.mrb[0].mxu0
    %2265 = vmatprep.mubr.f32.mxu0 0.0
    %2266 = vmatmul.mubr.f32.gmra.mrb[0].mxu0 %v2168
    %v2267 = vpop.f32.mrb[0].mxu0
    %v2268 = vadd.f32 0.0, %v2267
    %v2269 = vpop.f32.mrb[0].mxu0
    %2270 = vmatprep.mubr.f32.mxu0 0.0
    %2271 = vmatmul.mubr.f32.gmra.mrb[0].mxu0 %v2171
    %v2272 = vpop.f32.mrb[0].mxu0
    %v2273 = vadd.f32 0.0, %v2272
    %v2274 = vpop.f32.mrb[0].mxu0
    %2275 = vmatprep.mubr.f32.mxu0 0.0
    %2276 = vmatmul.mubr.f32.gmra.mrb[0].mxu0 %v2174
    %v2277 = vpop.f32.mrb[0].mxu0
    %v2278 = vadd.f32 0.0, %v2277
    %v2279 = vpop.f32.mrb[0].mxu0
    %2280 = vmatprep.mubr.f32.mxu0 0.0
    %2281 = vmatmul.mubr.f32.gmra.mrb[0].mxu0 %v2177
    %v2282 = vpop.f32.mrb[0].mxu0
    %v2283 = vadd.f32 0.0, %v2282
    %v2284 = vpop.f32.mrb[0].mxu0
    %2285 = vmatprep.mubr.f32.mxu0 0.0
    %2286 = vmatmul.mubr.f32.gmra.mrb[0].mxu0 %v2180
    %v2287 = vpop.f32.mrb[0].mxu0
    %v2288 = vadd.f32 0.0, %v2287
    %v2289 = vpop.f32.mrb[0].mxu0
    %2290 = vmatprep.mubr.f32.mxu0 0.0
    %2291 = vmatmul.mubr.f32.gmra.mrb[0].mxu0 %v2183
    %v2292 = vpop.f32.mrb[0].mxu0
    %v2293 = vadd.f32 0.0, %v2292
    %v2294 = vpop.f32.mrb[0].mxu0
    %2295 = vmatprep.mubr.f32.mxu0 0.0
    %2296 = vmatmul.mubr.f32.gmra.mrb[0].mxu0 %v2186
    %v2297 = vpop.f32.mrb[0].mxu0
    %v2298 = vadd.f32 0.0, %v2297
    %v2299 = vpop.f32.mrb[0].mxu0
    %2300 = vdwg.mxu0
    %v2301 = vld [vmem:[%s5] sm:$0xff]
    %v2302 = vld [vmem:[%s5 + $0x8] sm:$0xff]
    %v2303 = vld [vmem:[%s5 + $0x10] sm:$0xff]
    %v2304 = vld [vmem:[%s5 + $0x18] sm:$0xff]
    %v2305 = vld [vmem:[%s5 + $0x20] sm:$0xff]
    %v2306 = vld [vmem:[%s5 + $0x28] sm:$0xff]
    %v2307 = vld [vmem:[%s5 + $0x30] sm:$0xff]
    %v2308 = vld [vmem:[%s5 + $0x38] sm:$0xff]
    %v2309 = vld [vmem:[%s5 + $0x40] sm:$0xff]
    %v2310 = vld [vmem:[%s5 + $0x48] sm:$0xff]
    %v2311 = vld [vmem:[%s5 + $0x50] sm:$0xff]
    %v2312 = vld [vmem:[%s5 + $0x58] sm:$0xff]
    %v2313 = vld [vmem:[%s5 + $0x60] sm:$0xff]
    %v2314 = vld [vmem:[%s5 + $0x68] sm:$0xff]
    %v2315 = vld [vmem:[%s5 + $0x70] sm:$0xff]
    %v2316 = vld [vmem:[%s5 + $0x78] sm:$0xff]
    %s2317 = scalar_lea.vmem %s4, 72
    %v2318 = vld [vmem:[%s2317] sm:$0xff]
    %v2319 = vld [vmem:[%s2317 + $0x8] sm:$0xff]
    %v2320 = vld [vmem:[%s2317 + $0x10] sm:$0xff]
    %v2321 = vld [vmem:[%s2317 + $0x18] sm:$0xff]
    %v2322 = vld [vmem:[%s2317 + $0x20] sm:$0xff]
    %v2323 = vld [vmem:[%s2317 + $0x28] sm:$0xff]
    %v2324 = vld [vmem:[%s2317 + $0x30] sm:$0xff]
    %v2325 = vld [vmem:[%s2317 + $0x38] sm:$0xff]
    %v2326 = vld [vmem:[%s2317 + $0x40] sm:$0xff]
    %v2328 = vsel %vm2160, %v2318, 0
    %v2331 = vsel %vm2160, %v2319, 0
    %v2334 = vsel %vm2160, %v2320, 0
    %v2337 = vsel %vm2160, %v2321, 0
    %v2340 = vsel %vm2160, %v2322, 0
    %v2343 = vsel %vm2160, %v2323, 0
    %v2346 = vsel %vm2160, %v2324, 0
    %v2349 = vsel %vm2160, %v2325, 0
    %v2352 = vsel %vm2160, %v2326, 0
    %2354 = vmatprep.subr.mxu0 0.0
    %2355 = vmatpush1.msra.mxu0 %v2138
    %2356 = vmatprep.subr.mxu0 0.0
    %2357 = vmatpush1.msra.mxu0 %v2139
    %2358 = vmatprep.subr.mxu0 0.0
    %2359 = vmatpush1.msra.mxu0 %v2140
    %2360 = vmatprep.subr.mxu0 0.0
    %2361 = vmatpush1.msra.mxu0 %v2141
    %2362 = vmatprep.subr.mxu0 0.0
    %2363 = vmatpush1.msra.mxu0 %v2142
    %2364 = vmatprep.subr.mxu0 0.0
    %2365 = vmatpush1.msra.mxu0 %v2143
    %2366 = vmatprep.subr.mxu0 0.0
    %2367 = vmatpush1.msra.mxu0 %v2144
    %2368 = vmatprep.subr.mxu0 0.0
    %2369 = vmatpush1.msra.mxu0 %v2145
    %2370 = vmatprep.subr.mxu0 0.0
    %2371 = vmatpush1.msra.mxu0 %v2146
    %2372 = vmatprep.subr.mxu0 0.0
    %2373 = vmatpush1.msra.mxu0 %v2147
    %2374 = vmatprep.subr.mxu0 0.0
    %2375 = vmatpush1.msra.mxu0 %v2148
    %2376 = vmatprep.subr.mxu0 0.0
    %2377 = vmatpush1.msra.mxu0 %v2149
    %2378 = vmatprep.subr.mxu0 0.0
    %2379 = vmatpush1.msra.mxu0 %v2189
    %2380 = vmatprep.subr.mxu0 0.0
    %2381 = vmatpush1.msra.mxu0 0.0
    %2382 = vmatprep.subr.mxu0 0.0
    %2383 = vmatpush1.msra.mxu0 0.0
    %2384 = vmatprep.subr.mxu0 0.0
    %2385 = vmatpush1.msra.mxu0 0.0
    %2386 = vmatprep.subr.mxu0 0.0
    %2387 = vmatpush1.msra.mxu0 0.0
    %2388 = vmatprep.subr.mxu0 0.0
    %2389 = vmatpush1.msra.mxu0 0.0
    %2390 = vmatprep.subr.mxu0 0.0
    %2391 = vmatpush1.msra.mxu0 0.0
    %2392 = vmatprep.subr.mxu0 0.0
    %2393 = vmatpush1.msra.mxu0 0.0
    %2394 = vmatprep.subr.mxu0 0.0
    %2395 = vmatpush1.msra.mxu0 0.0
    %2396 = vmatprep.subr.mxu0 0.0
    %2397 = vmatpush1.msra.mxu0 0.0
    %2398 = vmatprep.subr.mxu0 0.0
    %2399 = vmatpush1.msra.mxu0 0.0
    %2400 = vmatprep.subr.mxu0 0.0
    %2401 = vmatpush1.msra.mxu0 0.0
    %2402 = vmatprep.subr.mxu0 0.0
    %2403 = vmatpush1.msra.mxu0 0.0
    %2404 = vmatprep.subr.mxu0 0.0
    %2405 = vmatpush1.msra.mxu0 0.0
    %2406 = vmatprep.subr.mxu0 0.0
    %2407 = vmatpush1.msra.mxu0 0.0
    %2408 = vmatprep.subr.mxu0 0.0
    %2409 = vmatpush1.msra.mxu0 0.0
    %2410 = vmatprep.subr.mxu0 0.0
    %2411 = vmatpush1.msra.mxu0 0.0
    %2412 = vmatprep.subr.mxu0 0.0
    %2413 = vmatpush1.msra.mxu0 0.0
    %2414 = vmatprep.subr.mxu0 0.0
    %2415 = vmatpush1.msra.mxu0 0.0
    %2416 = vmatprep.subr.mxu0 0.0
    %2417 = vmatpush1.msra.mxu0 0.0
    %2418 = vmatprep.mubr.f32.mxu0 0.0
    %2419 = vmatmul.mubr.f32.gmra.mrb[0].mxu0 %v2328
    %v2420 = vpop.f32.mrb[0].mxu0
    %v2421 = vadd.f32 0.0, %v2420
    %v2422 = vpop.f32.mrb[0].mxu0
    %2423 = vmatprep.mubr.f32.mxu0 0.0
    %2424 = vmatmul.mubr.f32.gmra.mrb[0].mxu0 %v2331
    %v2425 = vpop.f32.mrb[0].mxu0
    %v2426 = vadd.f32 0.0, %v2425
    %v2427 = vpop.f32.mrb[0].mxu0
    %2428 = vmatprep.mubr.f32.mxu0 0.0
    %2429 = vmatmul.mubr.f32.gmra.mrb[0].mxu0 %v2334
    %v2430 = vpop.f32.mrb[0].mxu0
    %v2431 = vadd.f32 0.0, %v2430
    %v2432 = vpop.f32.mrb[0].mxu0
    %2433 = vmatprep.mubr.f32.mxu0 0.0
    %2434 = vmatmul.mubr.f32.gmra.mrb[0].mxu0 %v2337
    %v2435 = vpop.f32.mrb[0].mxu0
    %v2436 = vadd.f32 0.0, %v2435
    %v2437 = vpop.f32.mrb[0].mxu0
    %2438 = vmatprep.mubr.f32.mxu0 0.0
    %2439 = vmatmul.mubr.f32.gmra.mrb[0].mxu0 %v2340
    %v2440 = vpop.f32.mrb[0].mxu0
    %v2441 = vadd.f32 0.0, %v2440
    %v2442 = vpop.f32.mrb[0].mxu0
    %2443 = vmatprep.mubr.f32.mxu0 0.0
    %2444 = vmatmul.mubr.f32.gmra.mrb[0].mxu0 %v2343
    %v2445 = vpop.f32.mrb[0].mxu0
    %v2446 = vadd.f32 0.0, %v2445
    %v2447 = vpop.f32.mrb[0].mxu0
    %2448 = vmatprep.mubr.f32.mxu0 0.0
    %2449 = vmatmul.mubr.f32.gmra.mrb[0].mxu0 %v2346
    %v2450 = vpop.f32.mrb[0].mxu0
    %v2451 = vadd.f32 0.0, %v2450
    %v2452 = vpop.f32.mrb[0].mxu0
    %2453 = vmatprep.mubr.f32.mxu0 0.0
    %2454 = vmatmul.mubr.f32.gmra.mrb[0].mxu0 %v2349
    %v2455 = vpop.f32.mrb[0].mxu0
    %v2456 = vadd.f32 0.0, %v2455
    %v2457 = vpop.f32.mrb[0].mxu0
    %2458 = vmatprep.mubr.f32.mxu0 0.0
    %2459 = vmatmul.mubr.f32.gmra.mrb[0].mxu0 %v2352
    %v2460 = vpop.f32.mrb[0].mxu0
    %v2461 = vadd.f32 0.0, %v2460
    %v2462 = vpop.f32.mrb[0].mxu0
    %2463 = vdwg.mxu0
    %s2464 = scalar_lea.vmem %s5, 128
    %v2465 = vld [vmem:[%s2464] sm:$0xff]
    %v2466 = vld [vmem:[%s2464 + $0x8] sm:$0xff]
    %v2467 = vld [vmem:[%s2464 + $0x10] sm:$0xff]
    %v2468 = vld [vmem:[%s2464 + $0x18] sm:$0xff]
    %v2469 = vld [vmem:[%s2464 + $0x20] sm:$0xff]
    %v2470 = vld [vmem:[%s2464 + $0x28] sm:$0xff]
    %v2471 = vld [vmem:[%s2464 + $0x30] sm:$0xff]
    %v2472 = vld [vmem:[%s2464 + $0x38] sm:$0xff]
    %v2473 = vld [vmem:[%s2464 + $0x40] sm:$0xff]
    %v2474 = vld [vmem:[%s2464 + $0x48] sm:$0xff]
    %v2475 = vld [vmem:[%s2464 + $0x50] sm:$0xff]
    %v2476 = vld [vmem:[%s2464 + $0x58] sm:$0xff]
    %v2477 = vld [vmem:[%s2464 + $0x60] sm:$0xff]
    %v2478 = vld [vmem:[%s2464 + $0x68] sm:$0xff]
    %v2479 = vld [vmem:[%s2464 + $0x70] sm:$0xff]
    %v2480 = vld [vmem:[%s2464 + $0x78] sm:$0xff]
    %2481 = vmatprep.subr.mxu0 0.0
    %2482 = vmatpush1.msra.mxu0 %v2465
    %2483 = vmatprep.subr.mxu0 0.0
    %2484 = vmatpush1.msra.mxu0 %v2466
    %2485 = vmatprep.subr.mxu0 0.0
    %2486 = vmatpush1.msra.mxu0 %v2467
    %2487 = vmatprep.subr.mxu0 0.0
    %2488 = vmatpush1.msra.mxu0 %v2468
    %2489 = vmatprep.subr.mxu0 0.0
    %2490 = vmatpush1.msra.mxu0 %v2469
    %2491 = vmatprep.subr.mxu0 0.0
    %2492 = vmatpush1.msra.mxu0 %v2470
    %2493 = vmatprep.subr.mxu0 0.0
    %2494 = vmatpush1.msra.mxu0 %v2471
    %2495 = vmatprep.subr.mxu0 0.0
    %2496 = vmatpush1.msra.mxu0 %v2472
    %2497 = vmatprep.subr.mxu0 0.0
    %2498 = vmatpush1.msra.mxu0 %v2473
    %2499 = vmatprep.subr.mxu0 0.0
    %2500 = vmatpush1.msra.mxu0 %v2474
    %2501 = vmatprep.subr.mxu0 0.0
    %2502 = vmatpush1.msra.mxu0 %v2475
    %2503 = vmatprep.subr.mxu0 0.0
    %2504 = vmatpush1.msra.mxu0 %v2476
    %2505 = vmatprep.subr.mxu0 0.0
    %2506 = vmatpush1.msra.mxu0 %v2477
    %2507 = vmatprep.subr.mxu0 0.0
    %2508 = vmatpush1.msra.mxu0 %v2478
    %2509 = vmatprep.subr.mxu0 0.0
    %2510 = vmatpush1.msra.mxu0 %v2479
    %2511 = vmatprep.subr.mxu0 0.0
    %2512 = vmatpush1.msra.mxu0 %v2480
    %2513 = vmatprep.subr.mxu0 0.0
    %2514 = vmatpush1.msra.mxu0 0.0
    %2515 = vmatprep.subr.mxu0 0.0
    %2516 = vmatpush1.msra.mxu0 0.0
    %2517 = vmatprep.subr.mxu0 0.0
    %2518 = vmatpush1.msra.mxu0 0.0
    %2519 = vmatprep.subr.mxu0 0.0
    %2520 = vmatpush1.msra.mxu0 0.0
    %2521 = vmatprep.subr.mxu0 0.0
    %2522 = vmatpush1.msra.mxu0 0.0
    %2523 = vmatprep.subr.mxu0 0.0
    %2524 = vmatpush1.msra.mxu0 0.0
    %2525 = vmatprep.subr.mxu0 0.0
    %2526 = vmatpush1.msra.mxu0 0.0
    %2527 = vmatprep.subr.mxu0 0.0
    %2528 = vmatpush1.msra.mxu0 0.0
    %2529 = vmatprep.subr.mxu0 0.0
    %2530 = vmatpush1.msra.mxu0 0.0
    %2531 = vmatprep.subr.mxu0 0.0
    %2532 = vmatpush1.msra.mxu0 0.0
    %2533 = vmatprep.subr.mxu0 0.0
    %2534 = vmatpush1.msra.mxu0 0.0
    %2535 = vmatprep.subr.mxu0 0.0
    %2536 = vmatpush1.msra.mxu0 0.0
    %2537 = vmatprep.subr.mxu0 0.0
    %2538 = vmatpush1.msra.mxu0 0.0
    %2539 = vmatprep.subr.mxu0 0.0
    %2540 = vmatpush1.msra.mxu0 0.0
    %2541 = vmatprep.subr.mxu0 0.0
    %2542 = vmatpush1.msra.mxu0 0.0
    %2543 = vmatprep.subr.mxu0 0.0
    %2544 = vmatpush1.msra.mxu0 0.0
    %2545 = vmatprep.mubr.f32.mxu0 0.0
    %2546 = vmatmul.mubr.f32.gmra.mrb[0].mxu0 %v2421
    %v2547 = vpop.f32.mrb[0].mxu0
    %v2548 = vadd.f32 0.0, %v2547
    %v2549 = vpop.f32.mrb[0].mxu0
    %2550 = vmatprep.mubr.f32.mxu0 0.0
    %2551 = vmatmul.mubr.f32.gmra.mrb[0].mxu0 %v2426
    %v2552 = vpop.f32.mrb[0].mxu0
    %v2553 = vadd.f32 0.0, %v2552
    %v2554 = vpop.f32.mrb[0].mxu0
    %2555 = vmatprep.mubr.f32.mxu0 0.0
    %2556 = vmatmul.mubr.f32.gmra.mrb[0].mxu0 %v2431
    %v2557 = vpop.f32.mrb[0].mxu0
    %v2558 = vadd.f32 0.0, %v2557
    %v2559 = vpop.f32.mrb[0].mxu0
    %2560 = vmatprep.mubr.f32.mxu0 0.0
    %2561 = vmatmul.mubr.f32.gmra.mrb[0].mxu0 %v2436
    %v2562 = vpop.f32.mrb[0].mxu0
    %v2563 = vadd.f32 0.0, %v2562
    %v2564 = vpop.f32.mrb[0].mxu0
    %2565 = vmatprep.mubr.f32.mxu0 0.0
    %2566 = vmatmul.mubr.f32.gmra.mrb[0].mxu0 %v2441
    %v2567 = vpop.f32.mrb[0].mxu0
    %v2568 = vadd.f32 0.0, %v2567
    %v2569 = vpop.f32.mrb[0].mxu0
    %2570 = vmatprep.mubr.f32.mxu0 0.0
    %2571 = vmatmul.mubr.f32.gmra.mrb[0].mxu0 %v2446
    %v2572 = vpop.f32.mrb[0].mxu0
    %v2573 = vadd.f32 0.0, %v2572
    %v2574 = vpop.f32.mrb[0].mxu0
    %2575 = vmatprep.mubr.f32.mxu0 0.0
    %2576 = vmatmul.mubr.f32.gmra.mrb[0].mxu0 %v2451
    %v2577 = vpop.f32.mrb[0].mxu0
    %v2578 = vadd.f32 0.0, %v2577
    %v2579 = vpop.f32.mrb[0].mxu0
    %2580 = vmatprep.mubr.f32.mxu0 0.0
    %2581 = vmatmul.mubr.f32.gmra.mrb[0].mxu0 %v2456
    %v2582 = vpop.f32.mrb[0].mxu0
    %v2583 = vadd.f32 0.0, %v2582
    %v2584 = vpop.f32.mrb[0].mxu0
    %2585 = vmatprep.mubr.f32.mxu0 0.0
    %2586 = vmatmul.mubr.f32.gmra.mrb[0].mxu0 %v2461
    %v2587 = vpop.f32.mrb[0].mxu0
    %v2588 = vadd.f32 0.0, %v2587
    %v2589 = vpop.f32.mrb[0].mxu0
    %2590 = vdwg.mxu0
    %2591 = vmatprep.subr.mxu0 0.0
    %2592 = vmatpush1.msra.mxu0 %v2301
    %2593 = vmatprep.subr.mxu0 0.0
    %2594 = vmatpush1.msra.mxu0 %v2302
    %2595 = vmatprep.subr.mxu0 0.0
    %2596 = vmatpush1.msra.mxu0 %v2303
    %2597 = vmatprep.subr.mxu0 0.0
    %2598 = vmatpush1.msra.mxu0 %v2304
    %2599 = vmatprep.subr.mxu0 0.0
    %2600 = vmatpush1.msra.mxu0 %v2305
    %2601 = vmatprep.subr.mxu0 0.0
    %2602 = vmatpush1.msra.mxu0 %v2306
    %2603 = vmatprep.subr.mxu0 0.0
    %2604 = vmatpush1.msra.mxu0 %v2307
    %2605 = vmatprep.subr.mxu0 0.0
    %2606 = vmatpush1.msra.mxu0 %v2308
    %2607 = vmatprep.subr.mxu0 0.0
    %2608 = vmatpush1.msra.mxu0 %v2309
    %2609 = vmatprep.subr.mxu0 0.0
    %2610 = vmatpush1.msra.mxu0 %v2310
    %2611 = vmatprep.subr.mxu0 0.0
    %2612 = vmatpush1.msra.mxu0 %v2311
    %2613 = vmatprep.subr.mxu0 0.0
    %2614 = vmatpush1.msra.mxu0 %v2312
    %2615 = vmatprep.subr.mxu0 0.0
    %2616 = vmatpush1.msra.mxu0 %v2313
    %2617 = vmatprep.subr.mxu0 0.0
    %2618 = vmatpush1.msra.mxu0 %v2314
    %2619 = vmatprep.subr.mxu0 0.0
    %2620 = vmatpush1.msra.mxu0 %v2315
    %2621 = vmatprep.subr.mxu0 0.0
    %2622 = vmatpush1.msra.mxu0 %v2316
    %2623 = vmatprep.subr.mxu0 0.0
    %2624 = vmatpush1.msra.mxu0 0.0
    %2625 = vmatprep.subr.mxu0 0.0
    %2626 = vmatpush1.msra.mxu0 0.0
    %2627 = vmatprep.subr.mxu0 0.0
    %2628 = vmatpush1.msra.mxu0 0.0
    %2629 = vmatprep.subr.mxu0 0.0
    %2630 = vmatpush1.msra.mxu0 0.0
    %2631 = vmatprep.subr.mxu0 0.0
    %2632 = vmatpush1.msra.mxu0 0.0
    %2633 = vmatprep.subr.mxu0 0.0
    %2634 = vmatpush1.msra.mxu0 0.0
    %2635 = vmatprep.subr.mxu0 0.0
    %2636 = vmatpush1.msra.mxu0 0.0
    %2637 = vmatprep.subr.mxu0 0.0
    %2638 = vmatpush1.msra.mxu0 0.0
    %2639 = vmatprep.subr.mxu0 0.0
    %2640 = vmatpush1.msra.mxu0 0.0
    %2641 = vmatprep.subr.mxu0 0.0
    %2642 = vmatpush1.msra.mxu0 0.0
    %2643 = vmatprep.subr.mxu0 0.0
    %2644 = vmatpush1.msra.mxu0 0.0
    %2645 = vmatprep.subr.mxu0 0.0
    %2646 = vmatpush1.msra.mxu0 0.0
    %2647 = vmatprep.subr.mxu0 0.0
    %2648 = vmatpush1.msra.mxu0 0.0
    %2649 = vmatprep.subr.mxu0 0.0
    %2650 = vmatpush1.msra.mxu0 0.0
    %2651 = vmatprep.subr.mxu0 0.0
    %2652 = vmatpush1.msra.mxu0 0.0
    %2653 = vmatprep.subr.mxu0 0.0
    %2654 = vmatpush1.msra.mxu0 0.0
    %2655 = vmatprep.mubr.f32.mxu0 0.0
    %2656 = vmatmul.mubr.f32.gmra.mrb[0].mxu0 %v2258
    %v2657 = vpop.f32.mrb[0].mxu0
    %v2658 = vadd.f32 %v2548, %v2657
    %v2659 = vpop.f32.mrb[0].mxu0
    %2660 = vmatprep.mubr.f32.mxu0 0.0
    %2661 = vmatmul.mubr.f32.gmra.mrb[0].mxu0 %v2263
    %v2662 = vpop.f32.mrb[0].mxu0
    %v2663 = vadd.f32 %v2553, %v2662
    %v2664 = vpop.f32.mrb[0].mxu0
    %2665 = vmatprep.mubr.f32.mxu0 0.0
    %2666 = vmatmul.mubr.f32.gmra.mrb[0].mxu0 %v2268
    %v2667 = vpop.f32.mrb[0].mxu0
    %v2668 = vadd.f32 %v2558, %v2667
    %v2669 = vpop.f32.mrb[0].mxu0
    %2670 = vmatprep.mubr.f32.mxu0 0.0
    %2671 = vmatmul.mubr.f32.gmra.mrb[0].mxu0 %v2273
    %v2672 = vpop.f32.mrb[0].mxu0
    %v2673 = vadd.f32 %v2563, %v2672
    %v2674 = vpop.f32.mrb[0].mxu0
    %2675 = vmatprep.mubr.f32.mxu0 0.0
    %2676 = vmatmul.mubr.f32.gmra.mrb[0].mxu0 %v2278
    %v2677 = vpop.f32.mrb[0].mxu0
    %v2678 = vadd.f32 %v2568, %v2677
    %v2679 = vpop.f32.mrb[0].mxu0
    %2680 = vmatprep.mubr.f32.mxu0 0.0
    %2681 = vmatmul.mubr.f32.gmra.mrb[0].mxu0 %v2283
    %v2682 = vpop.f32.mrb[0].mxu0
    %v2683 = vadd.f32 %v2573, %v2682
    %v2684 = vpop.f32.mrb[0].mxu0
    %2685 = vmatprep.mubr.f32.mxu0 0.0
    %2686 = vmatmul.mubr.f32.gmra.mrb[0].mxu0 %v2288
    %v2687 = vpop.f32.mrb[0].mxu0
    %v2688 = vadd.f32 %v2578, %v2687
    %v2689 = vpop.f32.mrb[0].mxu0
    %2690 = vmatprep.mubr.f32.mxu0 0.0
    %2691 = vmatmul.mubr.f32.gmra.mrb[0].mxu0 %v2293
    %v2692 = vpop.f32.mrb[0].mxu0
    %v2693 = vadd.f32 %v2583, %v2692
    %v2694 = vpop.f32.mrb[0].mxu0
    %2695 = vmatprep.mubr.f32.mxu0 0.0
    %2696 = vmatmul.mubr.f32.gmra.mrb[0].mxu0 %v2298
    %v2697 = vpop.f32.mrb[0].mxu0
    %v2698 = vadd.f32 %v2588, %v2697
    %v2699 = vpop.f32.mrb[0].mxu0
    %2700 = vdwg.mxu0
    %s2701 = scalar_lea.vmem %s4, 144
    %v2702 = vld [vmem:[%s2701] sm:$0xff]
    %v2703 = vld [vmem:[%s2701 + $0x8] sm:$0xff]
    %v2704 = vld [vmem:[%s2701 + $0x10] sm:$0xff]
    %v2705 = vld [vmem:[%s2701 + $0x18] sm:$0xff]
    %v2706 = vld [vmem:[%s2701 + $0x20] sm:$0xff]
    %v2707 = vld [vmem:[%s2701 + $0x28] sm:$0xff]
    %v2708 = vld [vmem:[%s2701 + $0x30] sm:$0xff]
    %v2709 = vld [vmem:[%s2701 + $0x38] sm:$0xff]
    %v2710 = vld [vmem:[%s2701 + $0x40] sm:$0xff]
    %v2712 = vsel %vm2160, %v2702, 0
    %v2715 = vsel %vm2160, %v2703, 0
    %v2718 = vsel %vm2160, %v2704, 0
    %v2721 = vsel %vm2160, %v2705, 0
    %v2724 = vsel %vm2160, %v2706, 0
    %v2727 = vsel %vm2160, %v2707, 0
    %v2730 = vsel %vm2160, %v2708, 0
    %v2733 = vsel %vm2160, %v2709, 0
    %v2736 = vsel %vm2160, %v2710, 0
    %2738 = vmatprep.subr.mxu0 0.0
    %2739 = vmatpush1.msra.mxu0 %v2138
    %2740 = vmatprep.subr.mxu0 0.0
    %2741 = vmatpush1.msra.mxu0 %v2139
    %2742 = vmatprep.subr.mxu0 0.0
    %2743 = vmatpush1.msra.mxu0 %v2140
    %2744 = vmatprep.subr.mxu0 0.0
    %2745 = vmatpush1.msra.mxu0 %v2141
    %2746 = vmatprep.subr.mxu0 0.0
    %2747 = vmatpush1.msra.mxu0 %v2142
    %2748 = vmatprep.subr.mxu0 0.0
    %2749 = vmatpush1.msra.mxu0 %v2143
    %2750 = vmatprep.subr.mxu0 0.0
    %2751 = vmatpush1.msra.mxu0 %v2144
    %2752 = vmatprep.subr.mxu0 0.0
    %2753 = vmatpush1.msra.mxu0 %v2145
    %2754 = vmatprep.subr.mxu0 0.0
    %2755 = vmatpush1.msra.mxu0 %v2146
    %2756 = vmatprep.subr.mxu0 0.0
    %2757 = vmatpush1.msra.mxu0 %v2147
    %2758 = vmatprep.subr.mxu0 0.0
    %2759 = vmatpush1.msra.mxu0 %v2148
    %2760 = vmatprep.subr.mxu0 0.0
    %2761 = vmatpush1.msra.mxu0 %v2149
    %2762 = vmatprep.subr.mxu0 0.0
    %2763 = vmatpush1.msra.mxu0 %v2189
    %2764 = vmatprep.subr.mxu0 0.0
    %2765 = vmatpush1.msra.mxu0 0.0
    %2766 = vmatprep.subr.mxu0 0.0
    %2767 = vmatpush1.msra.mxu0 0.0
    %2768 = vmatprep.subr.mxu0 0.0
    %2769 = vmatpush1.msra.mxu0 0.0
    %2770 = vmatprep.subr.mxu0 0.0
    %2771 = vmatpush1.msra.mxu0 0.0
    %2772 = vmatprep.subr.mxu0 0.0
    %2773 = vmatpush1.msra.mxu0 0.0
    %2774 = vmatprep.subr.mxu0 0.0
    %2775 = vmatpush1.msra.mxu0 0.0
    %2776 = vmatprep.subr.mxu0 0.0
    %2777 = vmatpush1.msra.mxu0 0.0
    %2778 = vmatprep.subr.mxu0 0.0
    %2779 = vmatpush1.msra.mxu0 0.0
    %2780 = vmatprep.subr.mxu0 0.0
    %2781 = vmatpush1.msra.mxu0 0.0
    %2782 = vmatprep.subr.mxu0 0.0
    %2783 = vmatpush1.msra.mxu0 0.0
    %2784 = vmatprep.subr.mxu0 0.0
    %2785 = vmatpush1.msra.mxu0 0.0
    %2786 = vmatprep.subr.mxu0 0.0
    %2787 = vmatpush1.msra.mxu0 0.0
    %2788 = vmatprep.subr.mxu0 0.0
    %2789 = vmatpush1.msra.mxu0 0.0
    %2790 = vmatprep.subr.mxu0 0.0
    %2791 = vmatpush1.msra.mxu0 0.0
    %2792 = vmatprep.subr.mxu0 0.0
    %2793 = vmatpush1.msra.mxu0 0.0
    %2794 = vmatprep.subr.mxu0 0.0
    %2795 = vmatpush1.msra.mxu0 0.0
    %2796 = vmatprep.subr.mxu0 0.0
    %2797 = vmatpush1.msra.mxu0 0.0
    %2798 = vmatprep.subr.mxu0 0.0
    %2799 = vmatpush1.msra.mxu0 0.0
    %2800 = vmatprep.subr.mxu0 0.0
    %2801 = vmatpush1.msra.mxu0 0.0
    %2802 = vmatprep.mubr.f32.mxu0 0.0
    %2803 = vmatmul.mubr.f32.gmra.mrb[0].mxu0 %v2712
    %v2804 = vpop.f32.mrb[0].mxu0
    %v2805 = vadd.f32 0.0, %v2804
    %v2806 = vpop.f32.mrb[0].mxu0
    %2807 = vmatprep.mubr.f32.mxu0 0.0
    %2808 = vmatmul.mubr.f32.gmra.mrb[0].mxu0 %v2715
    %v2809 = vpop.f32.mrb[0].mxu0
    %v2810 = vadd.f32 0.0, %v2809
    %v2811 = vpop.f32.mrb[0].mxu0
    %2812 = vmatprep.mubr.f32.mxu0 0.0
    %2813 = vmatmul.mubr.f32.gmra.mrb[0].mxu0 %v2718
    %v2814 = vpop.f32.mrb[0].mxu0
    %v2815 = vadd.f32 0.0, %v2814
    %v2816 = vpop.f32.mrb[0].mxu0
    %2817 = vmatprep.mubr.f32.mxu0 0.0
    %2818 = vmatmul.mubr.f32.gmra.mrb[0].mxu0 %v2721
    %v2819 = vpop.f32.mrb[0].mxu0
    %v2820 = vadd.f32 0.0, %v2819
    %v2821 = vpop.f32.mrb[0].mxu0
    %2822 = vmatprep.mubr.f32.mxu0 0.0
    %2823 = vmatmul.mubr.f32.gmra.mrb[0].mxu0 %v2724
    %v2824 = vpop.f32.mrb[0].mxu0
    %v2825 = vadd.f32 0.0, %v2824
    %v2826 = vpop.f32.mrb[0].mxu0
    %2827 = vmatprep.mubr.f32.mxu0 0.0
    %2828 = vmatmul.mubr.f32.gmra.mrb[0].mxu0 %v2727
    %v2829 = vpop.f32.mrb[0].mxu0
    %v2830 = vadd.f32 0.0, %v2829
    %v2831 = vpop.f32.mrb[0].mxu0
    %2832 = vmatprep.mubr.f32.mxu0 0.0
    %2833 = vmatmul.mubr.f32.gmra.mrb[0].mxu0 %v2730
    %v2834 = vpop.f32.mrb[0].mxu0
    %v2835 = vadd.f32 0.0, %v2834
    %v2836 = vpop.f32.mrb[0].mxu0
    %2837 = vmatprep.mubr.f32.mxu0 0.0
    %2838 = vmatmul.mubr.f32.gmra.mrb[0].mxu0 %v2733
    %v2839 = vpop.f32.mrb[0].mxu0
    %v2840 = vadd.f32 0.0, %v2839
    %v2841 = vpop.f32.mrb[0].mxu0
    %2842 = vmatprep.mubr.f32.mxu0 0.0
    %2843 = vmatmul.mubr.f32.gmra.mrb[0].mxu0 %v2736
    %v2844 = vpop.f32.mrb[0].mxu0
    %v2845 = vadd.f32 0.0, %v2844
    %v2846 = vpop.f32.mrb[0].mxu0
    %2847 = vdwg.mxu0
    %s2848 = scalar_lea.vmem %s5, 256
    %v2849 = vld [vmem:[%s2848] sm:$0xff]
    %v2850 = vld [vmem:[%s2848 + $0x8] sm:$0xff]
    %v2851 = vld [vmem:[%s2848 + $0x10] sm:$0xff]
    %v2852 = vld [vmem:[%s2848 + $0x18] sm:$0xff]
    %v2853 = vld [vmem:[%s2848 + $0x20] sm:$0xff]
    %v2854 = vld [vmem:[%s2848 + $0x28] sm:$0xff]
    %v2855 = vld [vmem:[%s2848 + $0x30] sm:$0xff]
    %v2856 = vld [vmem:[%s2848 + $0x38] sm:$0xff]
    %v2857 = vld [vmem:[%s2848 + $0x40] sm:$0xff]
    %v2858 = vld [vmem:[%s2848 + $0x48] sm:$0xff]
    %v2859 = vld [vmem:[%s2848 + $0x50] sm:$0xff]
    %v2860 = vld [vmem:[%s2848 + $0x58] sm:$0xff]
    %v2861 = vld [vmem:[%s2848 + $0x60] sm:$0xff]
    %v2862 = vld [vmem:[%s2848 + $0x68] sm:$0xff]
    %v2863 = vld [vmem:[%s2848 + $0x70] sm:$0xff]
    %v2864 = vld [vmem:[%s2848 + $0x78] sm:$0xff]
    %2865 = vmatprep.subr.mxu0 0.0
    %2866 = vmatpush1.msra.mxu0 %v2849
    %2867 = vmatprep.subr.mxu0 0.0
    %2868 = vmatpush1.msra.mxu0 %v2850
    %2869 = vmatprep.subr.mxu0 0.0
    %2870 = vmatpush1.msra.mxu0 %v2851
    %2871 = vmatprep.subr.mxu0 0.0
    %2872 = vmatpush1.msra.mxu0 %v2852
    %2873 = vmatprep.subr.mxu0 0.0
    %2874 = vmatpush1.msra.mxu0 %v2853
    %2875 = vmatprep.subr.mxu0 0.0
    %2876 = vmatpush1.msra.mxu0 %v2854
    %2877 = vmatprep.subr.mxu0 0.0
    %2878 = vmatpush1.msra.mxu0 %v2855
    %2879 = vmatprep.subr.mxu0 0.0
    %2880 = vmatpush1.msra.mxu0 %v2856
    %2881 = vmatprep.subr.mxu0 0.0
    %2882 = vmatpush1.msra.mxu0 %v2857
    %2883 = vmatprep.subr.mxu0 0.0
    %2884 = vmatpush1.msra.mxu0 %v2858
    %2885 = vmatprep.subr.mxu0 0.0
    %2886 = vmatpush1.msra.mxu0 %v2859
    %2887 = vmatprep.subr.mxu0 0.0
    %2888 = vmatpush1.msra.mxu0 %v2860
    %2889 = vmatprep.subr.mxu0 0.0
    %2890 = vmatpush1.msra.mxu0 %v2861
    %2891 = vmatprep.subr.mxu0 0.0
    %2892 = vmatpush1.msra.mxu0 %v2862
    %2893 = vmatprep.subr.mxu0 0.0
    %2894 = vmatpush1.msra.mxu0 %v2863
    %2895 = vmatprep.subr.mxu0 0.0
    %2896 = vmatpush1.msra.mxu0 %v2864
    %2897 = vmatprep.subr.mxu0 0.0
    %2898 = vmatpush1.msra.mxu0 0.0
    %2899 = vmatprep.subr.mxu0 0.0
    %2900 = vmatpush1.msra.mxu0 0.0
    %2901 = vmatprep.subr.mxu0 0.0
    %2902 = vmatpush1.msra.mxu0 0.0
    %2903 = vmatprep.subr.mxu0 0.0
    %2904 = vmatpush1.msra.mxu0 0.0
    %2905 = vmatprep.subr.mxu0 0.0
    %2906 = vmatpush1.msra.mxu0 0.0
    %2907 = vmatprep.subr.mxu0 0.0
    %2908 = vmatpush1.msra.mxu0 0.0
    %2909 = vmatprep.subr.mxu0 0.0
    %2910 = vmatpush1.msra.mxu0 0.0
    %2911 = vmatprep.subr.mxu0 0.0
    %2912 = vmatpush1.msra.mxu0 0.0
    %2913 = vmatprep.subr.mxu0 0.0
    %2914 = vmatpush1.msra.mxu0 0.0
    %2915 = vmatprep.subr.mxu0 0.0
    %2916 = vmatpush1.msra.mxu0 0.0
    %2917 = vmatprep.subr.mxu0 0.0
    %2918 = vmatpush1.msra.mxu0 0.0
    %2919 = vmatprep.subr.mxu0 0.0
    %2920 = vmatpush1.msra.mxu0 0.0
    %2921 = vmatprep.subr.mxu0 0.0
    %2922 = vmatpush1.msra.mxu0 0.0
    %2923 = vmatprep.subr.mxu0 0.0
    %2924 = vmatpush1.msra.mxu0 0.0
    %2925 = vmatprep.subr.mxu0 0.0
    %2926 = vmatpush1.msra.mxu0 0.0
    %2927 = vmatprep.subr.mxu0 0.0
    %2928 = vmatpush1.msra.mxu0 0.0
    %2929 = vmatprep.mubr.f32.mxu0 0.0
    %2930 = vmatmul.mubr.f32.gmra.mrb[0].mxu0 %v2805
    %v2931 = vpop.f32.mrb[0].mxu0
    %v2932 = vadd.f32 0.0, %v2931
    %v2933 = vpop.f32.mrb[0].mxu0
    %2934 = vmatprep.mubr.f32.mxu0 0.0
    %2935 = vmatmul.mubr.f32.gmra.mrb[0].mxu0 %v2810
    %v2936 = vpop.f32.mrb[0].mxu0
    %v2937 = vadd.f32 0.0, %v2936
    %v2938 = vpop.f32.mrb[0].mxu0
    %2939 = vmatprep.mubr.f32.mxu0 0.0
    %2940 = vmatmul.mubr.f32.gmra.mrb[0].mxu0 %v2815
    %v2941 = vpop.f32.mrb[0].mxu0
    %v2942 = vadd.f32 0.0, %v2941
    %v2943 = vpop.f32.mrb[0].mxu0
    %2944 = vmatprep.mubr.f32.mxu0 0.0
    %2945 = vmatmul.mubr.f32.gmra.mrb[0].mxu0 %v2820
    %v2946 = vpop.f32.mrb[0].mxu0
    %v2947 = vadd.f32 0.0, %v2946
    %v2948 = vpop.f32.mrb[0].mxu0
    %2949 = vmatprep.mubr.f32.mxu0 0.0
    %2950 = vmatmul.mubr.f32.gmra.mrb[0].mxu0 %v2825
    %v2951 = vpop.f32.mrb[0].mxu0
    %v2952 = vadd.f32 0.0, %v2951
    %v2953 = vpop.f32.mrb[0].mxu0
    %2954 = vmatprep.mubr.f32.mxu0 0.0
    %2955 = vmatmul.mubr.f32.gmra.mrb[0].mxu0 %v2830
    %v2956 = vpop.f32.mrb[0].mxu0
    %v2957 = vadd.f32 0.0, %v2956
    %v2958 = vpop.f32.mrb[0].mxu0
    %2959 = vmatprep.mubr.f32.mxu0 0.0
    %2960 = vmatmul.mubr.f32.gmra.mrb[0].mxu0 %v2835
    %v2961 = vpop.f32.mrb[0].mxu0
    %v2962 = vadd.f32 0.0, %v2961
    %v2963 = vpop.f32.mrb[0].mxu0
    %2964 = vmatprep.mubr.f32.mxu0 0.0
    %2965 = vmatmul.mubr.f32.gmra.mrb[0].mxu0 %v2840
    %v2966 = vpop.f32.mrb[0].mxu0
    %v2967 = vadd.f32 0.0, %v2966
    %v2968 = vpop.f32.mrb[0].mxu0
    %2969 = vmatprep.mubr.f32.mxu0 0.0
    %2970 = vmatmul.mubr.f32.gmra.mrb[0].mxu0 %v2845
    %v2971 = vpop.f32.mrb[0].mxu0
    %v2972 = vadd.f32 0.0, %v2971
    %v2973 = vpop.f32.mrb[0].mxu0
    %2974 = vdwg.mxu0
    %v2975 = vadd.f32 %v2658, %v2932
    %v2976 = vadd.f32 %v2663, %v2937
    %v2977 = vadd.f32 %v2668, %v2942
    %v2978 = vadd.f32 %v2673, %v2947
    %v2979 = vadd.f32 %v2678, %v2952
    %v2980 = vadd.f32 %v2683, %v2957
    %v2981 = vadd.f32 %v2688, %v2962
    %v2982 = vadd.f32 %v2693, %v2967
    %v2983 = vadd.f32 %v2698, %v2972
    %s2984 = scalar_lea.vmem %s4, 216
    %v2985 = vld [vmem:[%s2984] sm:$0xff]
    %v2986 = vld [vmem:[%s2984 + $0x8] sm:$0xff]
    %v2987 = vld [vmem:[%s2984 + $0x10] sm:$0xff]
    %v2988 = vld [vmem:[%s2984 + $0x18] sm:$0xff]
    %v2989 = vld [vmem:[%s2984 + $0x20] sm:$0xff]
    %v2990 = vld [vmem:[%s2984 + $0x28] sm:$0xff]
    %v2991 = vld [vmem:[%s2984 + $0x30] sm:$0xff]
    %v2992 = vld [vmem:[%s2984 + $0x38] sm:$0xff]
    %v2993 = vld [vmem:[%s2984 + $0x40] sm:$0xff]
    %v2995 = vsel %vm2160, %v2985, 0
    %v2998 = vsel %vm2160, %v2986, 0
    %v3001 = vsel %vm2160, %v2987, 0
    %v3004 = vsel %vm2160, %v2988, 0
    %v3007 = vsel %vm2160, %v2989, 0
    %v3010 = vsel %vm2160, %v2990, 0
    %v3013 = vsel %vm2160, %v2991, 0
    %v3016 = vsel %vm2160, %v2992, 0
    %v3019 = vsel %vm2160, %v2993, 0
    %3021 = vmatprep.subr.mxu0 0.0
    %3022 = vmatpush1.msra.mxu0 %v2138
    %3023 = vmatprep.subr.mxu0 0.0
    %3024 = vmatpush1.msra.mxu0 %v2139
    %3025 = vmatprep.subr.mxu0 0.0
    %3026 = vmatpush1.msra.mxu0 %v2140
    %3027 = vmatprep.subr.mxu0 0.0
    %3028 = vmatpush1.msra.mxu0 %v2141
    %3029 = vmatprep.subr.mxu0 0.0
    %3030 = vmatpush1.msra.mxu0 %v2142
    %3031 = vmatprep.subr.mxu0 0.0
    %3032 = vmatpush1.msra.mxu0 %v2143
    %3033 = vmatprep.subr.mxu0 0.0
    %3034 = vmatpush1.msra.mxu0 %v2144
    %3035 = vmatprep.subr.mxu0 0.0
    %3036 = vmatpush1.msra.mxu0 %v2145
    %3037 = vmatprep.subr.mxu0 0.0
    %3038 = vmatpush1.msra.mxu0 %v2146
    %3039 = vmatprep.subr.mxu0 0.0
    %3040 = vmatpush1.msra.mxu0 %v2147
    %3041 = vmatprep.subr.mxu0 0.0
    %3042 = vmatpush1.msra.mxu0 %v2148
    %3043 = vmatprep.subr.mxu0 0.0
    %3044 = vmatpush1.msra.mxu0 %v2149
    %3045 = vmatprep.subr.mxu0 0.0
    %3046 = vmatpush1.msra.mxu0 %v2189
    %3047 = vmatprep.subr.mxu0 0.0
    %3048 = vmatpush1.msra.mxu0 0.0
    %3049 = vmatprep.subr.mxu0 0.0
    %3050 = vmatpush1.msra.mxu0 0.0
    %3051 = vmatprep.subr.mxu0 0.0
    %3052 = vmatpush1.msra.mxu0 0.0
    %3053 = vmatprep.subr.mxu0 0.0
    %3054 = vmatpush1.msra.mxu0 0.0
    %3055 = vmatprep.subr.mxu0 0.0
    %3056 = vmatpush1.msra.mxu0 0.0
    %3057 = vmatprep.subr.mxu0 0.0
    %3058 = vmatpush1.msra.mxu0 0.0
    %3059 = vmatprep.subr.mxu0 0.0
    %3060 = vmatpush1.msra.mxu0 0.0
    %3061 = vmatprep.subr.mxu0 0.0
    %3062 = vmatpush1.msra.mxu0 0.0
    %3063 = vmatprep.subr.mxu0 0.0
    %3064 = vmatpush1.msra.mxu0 0.0
    %3065 = vmatprep.subr.mxu0 0.0
    %3066 = vmatpush1.msra.mxu0 0.0
    %3067 = vmatprep.subr.mxu0 0.0
    %3068 = vmatpush1.msra.mxu0 0.0
    %3069 = vmatprep.subr.mxu0 0.0
    %3070 = vmatpush1.msra.mxu0 0.0
    %3071 = vmatprep.subr.mxu0 0.0
    %3072 = vmatpush1.msra.mxu0 0.0
    %3073 = vmatprep.subr.mxu0 0.0
    %3074 = vmatpush1.msra.mxu0 0.0
    %3075 = vmatprep.subr.mxu0 0.0
    %3076 = vmatpush1.msra.mxu0 0.0
    %3077 = vmatprep.subr.mxu0 0.0
    %3078 = vmatpush1.msra.mxu0 0.0
    %3079 = vmatprep.subr.mxu0 0.0
    %3080 = vmatpush1.msra.mxu0 0.0
    %3081 = vmatprep.subr.mxu0 0.0
    %3082 = vmatpush1.msra.mxu0 0.0
    %3083 = vmatprep.subr.mxu0 0.0
    %3084 = vmatpush1.msra.mxu0 0.0
    %3085 = vmatprep.mubr.f32.mxu0 0.0
    %3086 = vmatmul.mubr.f32.gmra.mrb[0].mxu0 %v2995
    %v3087 = vpop.f32.mrb[0].mxu0
    %v3088 = vadd.f32 0.0, %v3087
    %v3089 = vpop.f32.mrb[0].mxu0
    %3090 = vmatprep.mubr.f32.mxu0 0.0
    %3091 = vmatmul.mubr.f32.gmra.mrb[0].mxu0 %v2998
    %v3092 = vpop.f32.mrb[0].mxu0
    %v3093 = vadd.f32 0.0, %v3092
    %v3094 = vpop.f32.mrb[0].mxu0
    %3095 = vmatprep.mubr.f32.mxu0 0.0
    %3096 = vmatmul.mubr.f32.gmra.mrb[0].mxu0 %v3001
    %v3097 = vpop.f32.mrb[0].mxu0
    %v3098 = vadd.f32 0.0, %v3097
    %v3099 = vpop.f32.mrb[0].mxu0
    %3100 = vmatprep.mubr.f32.mxu0 0.0
    %3101 = vmatmul.mubr.f32.gmra.mrb[0].mxu0 %v3004
    %v3102 = vpop.f32.mrb[0].mxu0
    %v3103 = vadd.f32 0.0, %v3102
    %v3104 = vpop.f32.mrb[0].mxu0
    %3105 = vmatprep.mubr.f32.mxu0 0.0
    %3106 = vmatmul.mubr.f32.gmra.mrb[0].mxu0 %v3007
    %v3107 = vpop.f32.mrb[0].mxu0
    %v3108 = vadd.f32 0.0, %v3107
    %v3109 = vpop.f32.mrb[0].mxu0
    %3110 = vmatprep.mubr.f32.mxu0 0.0
    %3111 = vmatmul.mubr.f32.gmra.mrb[0].mxu0 %v3010
    %v3112 = vpop.f32.mrb[0].mxu0
    %v3113 = vadd.f32 0.0, %v3112
    %v3114 = vpop.f32.mrb[0].mxu0
    %3115 = vmatprep.mubr.f32.mxu0 0.0
    %3116 = vmatmul.mubr.f32.gmra.mrb[0].mxu0 %v3013
    %v3117 = vpop.f32.mrb[0].mxu0
    %v3118 = vadd.f32 0.0, %v3117
    %v3119 = vpop.f32.mrb[0].mxu0
    %3120 = vmatprep.mubr.f32.mxu0 0.0
    %3121 = vmatmul.mubr.f32.gmra.mrb[0].mxu0 %v3016
    %v3122 = vpop.f32.mrb[0].mxu0
    %v3123 = vadd.f32 0.0, %v3122
    %v3124 = vpop.f32.mrb[0].mxu0
    %3125 = vmatprep.mubr.f32.mxu0 0.0
    %3126 = vmatmul.mubr.f32.gmra.mrb[0].mxu0 %v3019
    %v3127 = vpop.f32.mrb[0].mxu0
    %v3128 = vadd.f32 0.0, %v3127
    %v3129 = vpop.f32.mrb[0].mxu0
    %3130 = vdwg.mxu0
    %s3131 = scalar_lea.vmem %s5, 384
    %v3132 = vld [vmem:[%s3131] sm:$0xff]
    %v3133 = vld [vmem:[%s3131 + $0x8] sm:$0xff]
    %v3134 = vld [vmem:[%s3131 + $0x10] sm:$0xff]
    %v3135 = vld [vmem:[%s3131 + $0x18] sm:$0xff]
    %v3136 = vld [vmem:[%s3131 + $0x20] sm:$0xff]
    %v3137 = vld [vmem:[%s3131 + $0x28] sm:$0xff]
    %v3138 = vld [vmem:[%s3131 + $0x30] sm:$0xff]
    %v3139 = vld [vmem:[%s3131 + $0x38] sm:$0xff]
    %v3140 = vld [vmem:[%s3131 + $0x40] sm:$0xff]
    %v3141 = vld [vmem:[%s3131 + $0x48] sm:$0xff]
    %v3142 = vld [vmem:[%s3131 + $0x50] sm:$0xff]
    %v3143 = vld [vmem:[%s3131 + $0x58] sm:$0xff]
    %v3144 = vld [vmem:[%s3131 + $0x60] sm:$0xff]
    %v3145 = vld [vmem:[%s3131 + $0x68] sm:$0xff]
    %v3146 = vld [vmem:[%s3131 + $0x70] sm:$0xff]
    %v3147 = vld [vmem:[%s3131 + $0x78] sm:$0xff]
    %3148 = vmatprep.subr.mxu0 0.0
    %3149 = vmatpush1.msra.mxu0 %v3132
    %3150 = vmatprep.subr.mxu0 0.0
    %3151 = vmatpush1.msra.mxu0 %v3133
    %3152 = vmatprep.subr.mxu0 0.0
    %3153 = vmatpush1.msra.mxu0 %v3134
    %3154 = vmatprep.subr.mxu0 0.0
    %3155 = vmatpush1.msra.mxu0 %v3135
    %3156 = vmatprep.subr.mxu0 0.0
    %3157 = vmatpush1.msra.mxu0 %v3136
    %3158 = vmatprep.subr.mxu0 0.0
    %3159 = vmatpush1.msra.mxu0 %v3137
    %3160 = vmatprep.subr.mxu0 0.0
    %3161 = vmatpush1.msra.mxu0 %v3138
    %3162 = vmatprep.subr.mxu0 0.0
    %3163 = vmatpush1.msra.mxu0 %v3139
    %3164 = vmatprep.subr.mxu0 0.0
    %3165 = vmatpush1.msra.mxu0 %v3140
    %3166 = vmatprep.subr.mxu0 0.0
    %3167 = vmatpush1.msra.mxu0 %v3141
    %3168 = vmatprep.subr.mxu0 0.0
    %3169 = vmatpush1.msra.mxu0 %v3142
    %3170 = vmatprep.subr.mxu0 0.0
    %3171 = vmatpush1.msra.mxu0 %v3143
    %3172 = vmatprep.subr.mxu0 0.0
    %3173 = vmatpush1.msra.mxu0 %v3144
    %3174 = vmatprep.subr.mxu0 0.0
    %3175 = vmatpush1.msra.mxu0 %v3145
    %3176 = vmatprep.subr.mxu0 0.0
    %3177 = vmatpush1.msra.mxu0 %v3146
    %3178 = vmatprep.subr.mxu0 0.0
    %3179 = vmatpush1.msra.mxu0 %v3147
    %3180 = vmatprep.subr.mxu0 0.0
    %3181 = vmatpush1.msra.mxu0 0.0
    %3182 = vmatprep.subr.mxu0 0.0
    %3183 = vmatpush1.msra.mxu0 0.0
    %3184 = vmatprep.subr.mxu0 0.0
    %3185 = vmatpush1.msra.mxu0 0.0
    %3186 = vmatprep.subr.mxu0 0.0
    %3187 = vmatpush1.msra.mxu0 0.0
    %3188 = vmatprep.subr.mxu0 0.0
    %3189 = vmatpush1.msra.mxu0 0.0
    %3190 = vmatprep.subr.mxu0 0.0
    %3191 = vmatpush1.msra.mxu0 0.0
    %3192 = vmatprep.subr.mxu0 0.0
    %3193 = vmatpush1.msra.mxu0 0.0
    %3194 = vmatprep.subr.mxu0 0.0
    %3195 = vmatpush1.msra.mxu0 0.0
    %3196 = vmatprep.subr.mxu0 0.0
    %3197 = vmatpush1.msra.mxu0 0.0
    %3198 = vmatprep.subr.mxu0 0.0
    %3199 = vmatpush1.msra.mxu0 0.0
    %3200 = vmatprep.subr.mxu0 0.0
    %3201 = vmatpush1.msra.mxu0 0.0
    %3202 = vmatprep.subr.mxu0 0.0
    %3203 = vmatpush1.msra.mxu0 0.0
    %3204 = vmatprep.subr.mxu0 0.0
    %3205 = vmatpush1.msra.mxu0 0.0
    %3206 = vmatprep.subr.mxu0 0.0
    %3207 = vmatpush1.msra.mxu0 0.0
    %3208 = vmatprep.subr.mxu0 0.0
    %3209 = vmatpush1.msra.mxu0 0.0
    %3210 = vmatprep.subr.mxu0 0.0
    %3211 = vmatpush1.msra.mxu0 0.0
    %3212 = vmatprep.mubr.f32.mxu0 0.0
    %3213 = vmatmul.mubr.f32.gmra.mrb[0].mxu0 %v3088
    %v3214 = vpop.f32.mrb[0].mxu0
    %v3215 = vadd.f32 0.0, %v3214
    %v3216 = vpop.f32.mrb[0].mxu0
    %3217 = vmatprep.mubr.f32.mxu0 0.0
    %3218 = vmatmul.mubr.f32.gmra.mrb[0].mxu0 %v3093
    %v3219 = vpop.f32.mrb[0].mxu0
    %v3220 = vadd.f32 0.0, %v3219
    %v3221 = vpop.f32.mrb[0].mxu0
    %3222 = vmatprep.mubr.f32.mxu0 0.0
    %3223 = vmatmul.mubr.f32.gmra.mrb[0].mxu0 %v3098
    %v3224 = vpop.f32.mrb[0].mxu0
    %v3225 = vadd.f32 0.0, %v3224
    %v3226 = vpop.f32.mrb[0].mxu0
    %3227 = vmatprep.mubr.f32.mxu0 0.0
    %3228 = vmatmul.mubr.f32.gmra.mrb[0].mxu0 %v3103
    %v3229 = vpop.f32.mrb[0].mxu0
    %v3230 = vadd.f32 0.0, %v3229
    %v3231 = vpop.f32.mrb[0].mxu0
    %3232 = vmatprep.mubr.f32.mxu0 0.0
    %3233 = vmatmul.mubr.f32.gmra.mrb[0].mxu0 %v3108
    %v3234 = vpop.f32.mrb[0].mxu0
    %v3235 = vadd.f32 0.0, %v3234
    %v3236 = vpop.f32.mrb[0].mxu0
    %3237 = vmatprep.mubr.f32.mxu0 0.0
    %3238 = vmatmul.mubr.f32.gmra.mrb[0].mxu0 %v3113
    %v3239 = vpop.f32.mrb[0].mxu0
    %v3240 = vadd.f32 0.0, %v3239
    %v3241 = vpop.f32.mrb[0].mxu0
    %3242 = vmatprep.mubr.f32.mxu0 0.0
    %3243 = vmatmul.mubr.f32.gmra.mrb[0].mxu0 %v3118
    %v3244 = vpop.f32.mrb[0].mxu0
    %v3245 = vadd.f32 0.0, %v3244
    %v3246 = vpop.f32.mrb[0].mxu0
    %3247 = vmatprep.mubr.f32.mxu0 0.0
    %3248 = vmatmul.mubr.f32.gmra.mrb[0].mxu0 %v3123
    %v3249 = vpop.f32.mrb[0].mxu0
    %v3250 = vadd.f32 0.0, %v3249
    %v3251 = vpop.f32.mrb[0].mxu0
    %3252 = vmatprep.mubr.f32.mxu0 0.0
    %3253 = vmatmul.mubr.f32.gmra.mrb[0].mxu0 %v3128
    %v3254 = vpop.f32.mrb[0].mxu0
    %v3255 = vadd.f32 0.0, %v3254
    %v3256 = vpop.f32.mrb[0].mxu0
    %3257 = vdwg.mxu0
    %v3258 = vadd.f32 %v2975, %v3215
    %v3259 = vadd.f32 %v2976, %v3220
    %v3260 = vadd.f32 %v2977, %v3225
    %v3261 = vadd.f32 %v2978, %v3230
    %v3262 = vadd.f32 %v2979, %v3235
    %v3263 = vadd.f32 %v2980, %v3240
    %v3264 = vadd.f32 %v2981, %v3245
    %v3265 = vadd.f32 %v2982, %v3250
    %v3266 = vadd.f32 %v2983, %v3255
    %v3267 = vld [vmem:[%s6] sm:$0x1]
    %v3269 = vlaneseq
    %v3270 = vshrl.u32 %v3269, 7
    %v3271 = vsub.s32 0, %v3270
    %v3272 = vrot.slane %v3267, %v3271
    %v3274 = vadd.f32 %v3258, %v3272
    %v3275 = vadd.f32 %v3259, %v3272
    %v3276 = vadd.f32 %v3260, %v3272
    %v3277 = vadd.f32 %v3261, %v3272
    %v3278 = vadd.f32 %v3262, %v3272
    %v3279 = vadd.f32 %v3263, %v3272
    %v3280 = vadd.f32 %v3264, %v3272
    %v3281 = vadd.f32 %v3265, %v3272
    %v3282 = vadd.f32 %v3266, %v3272
    %v3283 = vmax.f32 %v3274, 0.0
    %v3284 = vmax.f32 %v3275, 0.0
    %v3285 = vmax.f32 %v3276, 0.0
    %v3286 = vmax.f32 %v3277, 0.0
    %v3287 = vmax.f32 %v3278, 0.0
    %v3288 = vmax.f32 %v3279, 0.0
    %v3289 = vmax.f32 %v3280, 0.0
    %v3290 = vmax.f32 %v3281, 0.0
    %v3291 = vmax.f32 %v3282, 0.0
    %v3292 = vld [vmem:[%s7] sm:$0xff]
    %v3293 = vld [vmem:[%s7 + $0x8] sm:$0xff]
    %v3294 = vld [vmem:[%s7 + $0x10] sm:$0x3]
    %vm3295 = vcmask 588800
    %v3297 = vsel %vm3295, %v3292, 0
    %v3300 = vsel %vm3295, %v3293, 0
    %v3303 = vsel %vm3295, %v3294, 0
    %3305 = vmatprep.subr.mxu0 0.0
    %3306 = vmatpush1.msra.mxu0 %v3283
    %3307 = vmatprep.subr.mxu0 0.0
    %3308 = vmatpush1.msra.mxu0 %v3284
    %3309 = vmatprep.subr.mxu0 0.0
    %3310 = vmatpush1.msra.mxu0 %v3285
    %3311 = vmatprep.subr.mxu0 0.0
    %3312 = vmatpush1.msra.mxu0 %v3286
    %3313 = vmatprep.subr.mxu0 0.0
    %3314 = vmatpush1.msra.mxu0 %v3287
    %3315 = vmatprep.subr.mxu0 0.0
    %3316 = vmatpush1.msra.mxu0 %v3288
    %3317 = vmatprep.subr.mxu0 0.0
    %3318 = vmatpush1.msra.mxu0 %v3289
    %3319 = vmatprep.subr.mxu0 0.0
    %3320 = vmatpush1.msra.mxu0 %v3290
    %3321 = vmatprep.subr.mxu0 0.0
    %3322 = vmatpush1.msra.mxu0 %v3291
    %3323 = vmatprep.subr.mxu0 0.0
    %3324 = vmatpush1.msra.mxu0 0.0
    %3325 = vmatprep.subr.mxu0 0.0
    %3326 = vmatpush1.msra.mxu0 0.0
    %3327 = vmatprep.subr.mxu0 0.0
    %3328 = vmatpush1.msra.mxu0 0.0
    %3329 = vmatprep.subr.mxu0 0.0
    %3330 = vmatpush1.msra.mxu0 0.0
    %3331 = vmatprep.subr.mxu0 0.0
    %3332 = vmatpush1.msra.mxu0 0.0
    %3333 = vmatprep.subr.mxu0 0.0
    %3334 = vmatpush1.msra.mxu0 0.0
    %3335 = vmatprep.subr.mxu0 0.0
    %3336 = vmatpush1.msra.mxu0 0.0
    %3337 = vmatprep.subr.mxu0 0.0
    %3338 = vmatpush1.msra.mxu0 0.0
    %3339 = vmatprep.subr.mxu0 0.0
    %3340 = vmatpush1.msra.mxu0 0.0
    %3341 = vmatprep.subr.mxu0 0.0
    %3342 = vmatpush1.msra.mxu0 0.0
    %3343 = vmatprep.subr.mxu0 0.0
    %3344 = vmatpush1.msra.mxu0 0.0
    %3345 = vmatprep.subr.mxu0 0.0
    %3346 = vmatpush1.msra.mxu0 0.0
    %3347 = vmatprep.subr.mxu0 0.0
    %3348 = vmatpush1.msra.mxu0 0.0
    %3349 = vmatprep.subr.mxu0 0.0
    %3350 = vmatpush1.msra.mxu0 0.0
    %3351 = vmatprep.subr.mxu0 0.0
    %3352 = vmatpush1.msra.mxu0 0.0
    %3353 = vmatprep.subr.mxu0 0.0
    %3354 = vmatpush1.msra.mxu0 0.0
    %3355 = vmatprep.subr.mxu0 0.0
    %3356 = vmatpush1.msra.mxu0 0.0
    %3357 = vmatprep.subr.mxu0 0.0
    %3358 = vmatpush1.msra.mxu0 0.0
    %3359 = vmatprep.subr.mxu0 0.0
    %3360 = vmatpush1.msra.mxu0 0.0
    %3361 = vmatprep.subr.mxu0 0.0
    %3362 = vmatpush1.msra.mxu0 0.0
    %3363 = vmatprep.subr.mxu0 0.0
    %3364 = vmatpush1.msra.mxu0 0.0
    %3365 = vmatprep.subr.mxu0 0.0
    %3366 = vmatpush1.msra.mxu0 0.0
    %3367 = vmatprep.subr.mxu0 0.0
    %3368 = vmatpush1.msra.mxu0 0.0
    %3369 = vmatprep.mubr.f32.mxu0 0.0
    %3370 = vmatmul.mubr.f32.gmra.mrb[0].mxu0 %v3297
    %v3371 = vpop.f32.mrb[0].mxu0
    %v3372 = vadd.f32 0.0, %v3371
    %v3373 = vpop.f32.mrb[0].mxu0
    %3374 = vmatprep.mubr.f32.mxu0 0.0
    %3375 = vmatmul.mubr.f32.gmra.mrb[0].mxu0 %v3300
    %v3376 = vpop.f32.mrb[0].mxu0
    %v3377 = vadd.f32 0.0, %v3376
    %v3378 = vpop.f32.mrb[0].mxu0
    %3379 = vmatprep.mubr.f32.mxu0 0.0
    %3380 = vmatmul.mubr.f32.gmra.mrb[0].mxu0 %v3303
    %v3381 = vpop.f32.mrb[0].mxu0
    %v3382 = vadd.f32 0.0, %v3381
    %v3383 = vpop.f32.mrb[0].mxu0
    %3384 = vdwg.mxu0
    %s3385 = scalar_lea.vmem %s7, 24
    %v3386 = vld [vmem:[%s3385] sm:$0xff]
    %v3387 = vld [vmem:[%s3385 + $0x8] sm:$0xff]
    %v3388 = vld [vmem:[%s3385 + $0x10] sm:$0x3]
    %v3390 = vsel %vm3295, %v3386, 0
    %v3393 = vsel %vm3295, %v3387, 0
    %v3396 = vsel %vm3295, %v3388, 0
    %3398 = vmatprep.subr.mxu0 0.0
    %3399 = vmatpush1.msra.mxu0 %v3283
    %3400 = vmatprep.subr.mxu0 0.0
    %3401 = vmatpush1.msra.mxu0 %v3284
    %3402 = vmatprep.subr.mxu0 0.0
    %3403 = vmatpush1.msra.mxu0 %v3285
    %3404 = vmatprep.subr.mxu0 0.0
    %3405 = vmatpush1.msra.mxu0 %v3286
    %3406 = vmatprep.subr.mxu0 0.0
    %3407 = vmatpush1.msra.mxu0 %v3287
    %3408 = vmatprep.subr.mxu0 0.0
    %3409 = vmatpush1.msra.mxu0 %v3288
    %3410 = vmatprep.subr.mxu0 0.0
    %3411 = vmatpush1.msra.mxu0 %v3289
    %3412 = vmatprep.subr.mxu0 0.0
    %3413 = vmatpush1.msra.mxu0 %v3290
    %3414 = vmatprep.subr.mxu0 0.0
    %3415 = vmatpush1.msra.mxu0 %v3291
    %3416 = vmatprep.subr.mxu0 0.0
    %3417 = vmatpush1.msra.mxu0 0.0
    %3418 = vmatprep.subr.mxu0 0.0
    %3419 = vmatpush1.msra.mxu0 0.0
    %3420 = vmatprep.subr.mxu0 0.0
    %3421 = vmatpush1.msra.mxu0 0.0
    %3422 = vmatprep.subr.mxu0 0.0
    %3423 = vmatpush1.msra.mxu0 0.0
    %3424 = vmatprep.subr.mxu0 0.0
    %3425 = vmatpush1.msra.mxu0 0.0
    %3426 = vmatprep.subr.mxu0 0.0
    %3427 = vmatpush1.msra.mxu0 0.0
    %3428 = vmatprep.subr.mxu0 0.0
    %3429 = vmatpush1.msra.mxu0 0.0
    %3430 = vmatprep.subr.mxu0 0.0
    %3431 = vmatpush1.msra.mxu0 0.0
    %3432 = vmatprep.subr.mxu0 0.0
    %3433 = vmatpush1.msra.mxu0 0.0
    %3434 = vmatprep.subr.mxu0 0.0
    %3435 = vmatpush1.msra.mxu0 0.0
    %3436 = vmatprep.subr.mxu0 0.0
    %3437 = vmatpush1.msra.mxu0 0.0
    %3438 = vmatprep.subr.mxu0 0.0
    %3439 = vmatpush1.msra.mxu0 0.0
    %3440 = vmatprep.subr.mxu0 0.0
    %3441 = vmatpush1.msra.mxu0 0.0
    %3442 = vmatprep.subr.mxu0 0.0
    %3443 = vmatpush1.msra.mxu0 0.0
    %3444 = vmatprep.subr.mxu0 0.0
    %3445 = vmatpush1.msra.mxu0 0.0
    %3446 = vmatprep.subr.mxu0 0.0
    %3447 = vmatpush1.msra.mxu0 0.0
    %3448 = vmatprep.subr.mxu0 0.0
    %3449 = vmatpush1.msra.mxu0 0.0
    %3450 = vmatprep.subr.mxu0 0.0
    %3451 = vmatpush1.msra.mxu0 0.0
    %3452 = vmatprep.subr.mxu0 0.0
    %3453 = vmatpush1.msra.mxu0 0.0
    %3454 = vmatprep.subr.mxu0 0.0
    %3455 = vmatpush1.msra.mxu0 0.0
    %3456 = vmatprep.subr.mxu0 0.0
    %3457 = vmatpush1.msra.mxu0 0.0
    %3458 = vmatprep.subr.mxu0 0.0
    %3459 = vmatpush1.msra.mxu0 0.0
    %3460 = vmatprep.subr.mxu0 0.0
    %3461 = vmatpush1.msra.mxu0 0.0
    %3462 = vmatprep.mubr.f32.mxu0 0.0
    %3463 = vmatmul.mubr.f32.gmra.mrb[0].mxu0 %v3390
    %v3464 = vpop.f32.mrb[0].mxu0
    %v3465 = vadd.f32 0.0, %v3464
    %v3466 = vpop.f32.mrb[0].mxu0
    %3467 = vmatprep.mubr.f32.mxu0 0.0
    %3468 = vmatmul.mubr.f32.gmra.mrb[0].mxu0 %v3393
    %v3469 = vpop.f32.mrb[0].mxu0
    %v3470 = vadd.f32 0.0, %v3469
    %v3471 = vpop.f32.mrb[0].mxu0
    %3472 = vmatprep.mubr.f32.mxu0 0.0
    %3473 = vmatmul.mubr.f32.gmra.mrb[0].mxu0 %v3396
    %v3474 = vpop.f32.mrb[0].mxu0
    %v3475 = vadd.f32 0.0, %v3474
    %v3476 = vpop.f32.mrb[0].mxu0
    %3477 = vdwg.mxu0
    %v3478 = vmax.f32 %v3372, %v3465
    %v3479 = vmax.f32 %v3377, %v3470
    %v3480 = vmax.f32 %v3382, %v3475
    %s3481 = scalar_lea.vmem %s7, 48
    %v3482 = vld [vmem:[%s3481] sm:$0xff]
    %v3483 = vld [vmem:[%s3481 + $0x8] sm:$0xff]
    %v3484 = vld [vmem:[%s3481 + $0x10] sm:$0x3]
    %v3486 = vsel %vm3295, %v3482, 0
    %v3489 = vsel %vm3295, %v3483, 0
    %v3492 = vsel %vm3295, %v3484, 0
    %3494 = vmatprep.subr.mxu0 0.0
    %3495 = vmatpush1.msra.mxu0 %v3283
    %3496 = vmatprep.subr.mxu0 0.0
    %3497 = vmatpush1.msra.mxu0 %v3284
    %3498 = vmatprep.subr.mxu0 0.0
    %3499 = vmatpush1.msra.mxu0 %v3285
    %3500 = vmatprep.subr.mxu0 0.0
    %3501 = vmatpush1.msra.mxu0 %v3286
    %3502 = vmatprep.subr.mxu0 0.0
    %3503 = vmatpush1.msra.mxu0 %v3287
    %3504 = vmatprep.subr.mxu0 0.0
    %3505 = vmatpush1.msra.mxu0 %v3288
    %3506 = vmatprep.subr.mxu0 0.0
    %3507 = vmatpush1.msra.mxu0 %v3289
    %3508 = vmatprep.subr.mxu0 0.0
    %3509 = vmatpush1.msra.mxu0 %v3290
    %3510 = vmatprep.subr.mxu0 0.0
    %3511 = vmatpush1.msra.mxu0 %v3291
    %3512 = vmatprep.subr.mxu0 0.0
    %3513 = vmatpush1.msra.mxu0 0.0
    %3514 = vmatprep.subr.mxu0 0.0
    %3515 = vmatpush1.msra.mxu0 0.0
    %3516 = vmatprep.subr.mxu0 0.0
    %3517 = vmatpush1.msra.mxu0 0.0
    %3518 = vmatprep.subr.mxu0 0.0
    %3519 = vmatpush1.msra.mxu0 0.0
    %3520 = vmatprep.subr.mxu0 0.0
    %3521 = vmatpush1.msra.mxu0 0.0
    %3522 = vmatprep.subr.mxu0 0.0
    %3523 = vmatpush1.msra.mxu0 0.0
    %3524 = vmatprep.subr.mxu0 0.0
    %3525 = vmatpush1.msra.mxu0 0.0
    %3526 = vmatprep.subr.mxu0 0.0
    %3527 = vmatpush1.msra.mxu0 0.0
    %3528 = vmatprep.subr.mxu0 0.0
    %3529 = vmatpush1.msra.mxu0 0.0
    %3530 = vmatprep.subr.mxu0 0.0
    %3531 = vmatpush1.msra.mxu0 0.0
    %3532 = vmatprep.subr.mxu0 0.0
    %3533 = vmatpush1.msra.mxu0 0.0
    %3534 = vmatprep.subr.mxu0 0.0
    %3535 = vmatpush1.msra.mxu0 0.0
    %3536 = vmatprep.subr.mxu0 0.0
    %3537 = vmatpush1.msra.mxu0 0.0
    %3538 = vmatprep.subr.mxu0 0.0
    %3539 = vmatpush1.msra.mxu0 0.0
    %3540 = vmatprep.subr.mxu0 0.0
    %3541 = vmatpush1.msra.mxu0 0.0
    %3542 = vmatprep.subr.mxu0 0.0
    %3543 = vmatpush1.msra.mxu0 0.0
    %3544 = vmatprep.subr.mxu0 0.0
    %3545 = vmatpush1.msra.mxu0 0.0
    %3546 = vmatprep.subr.mxu0 0.0
    %3547 = vmatpush1.msra.mxu0 0.0
    %3548 = vmatprep.subr.mxu0 0.0
    %3549 = vmatpush1.msra.mxu0 0.0
    %3550 = vmatprep.subr.mxu0 0.0
    %3551 = vmatpush1.msra.mxu0 0.0
    %3552 = vmatprep.subr.mxu0 0.0
    %3553 = vmatpush1.msra.mxu0 0.0
    %3554 = vmatprep.subr.mxu0 0.0
    %3555 = vmatpush1.msra.mxu0 0.0
    %3556 = vmatprep.subr.mxu0 0.0
    %3557 = vmatpush1.msra.mxu0 0.0
    %3558 = vmatprep.mubr.f32.mxu0 0.0
    %3559 = vmatmul.mubr.f32.gmra.mrb[0].mxu0 %v3486
    %v3560 = vpop.f32.mrb[0].mxu0
    %v3561 = vadd.f32 0.0, %v3560
    %v3562 = vpop.f32.mrb[0].mxu0
    %3563 = vmatprep.mubr.f32.mxu0 0.0
    %3564 = vmatmul.mubr.f32.gmra.mrb[0].mxu0 %v3489
    %v3565 = vpop.f32.mrb[0].mxu0
    %v3566 = vadd.f32 0.0, %v3565
    %v3567 = vpop.f32.mrb[0].mxu0
    %3568 = vmatprep.mubr.f32.mxu0 0.0
    %3569 = vmatmul.mubr.f32.gmra.mrb[0].mxu0 %v3492
    %v3570 = vpop.f32.mrb[0].mxu0
    %v3571 = vadd.f32 0.0, %v3570
    %v3572 = vpop.f32.mrb[0].mxu0
    %3573 = vdwg.mxu0
    %v3574 = vmax.f32 %v3478, %v3561
    %v3575 = vmax.f32 %v3479, %v3566
    %v3576 = vmax.f32 %v3480, %v3571
    %s3577 = scalar_lea.vmem %s7, 72
    %v3578 = vld [vmem:[%s3577] sm:$0xff]
    %v3579 = vld [vmem:[%s3577 + $0x8] sm:$0xff]
    %v3580 = vld [vmem:[%s3577 + $0x10] sm:$0x3]
    %v3582 = vsel %vm3295, %v3578, 0
    %v3585 = vsel %vm3295, %v3579, 0
    %v3588 = vsel %vm3295, %v3580, 0
    %3590 = vmatprep.subr.mxu0 0.0
    %3591 = vmatpush1.msra.mxu0 %v3283
    %3592 = vmatprep.subr.mxu0 0.0
    %3593 = vmatpush1.msra.mxu0 %v3284
    %3594 = vmatprep.subr.mxu0 0.0
    %3595 = vmatpush1.msra.mxu0 %v3285
    %3596 = vmatprep.subr.mxu0 0.0
    %3597 = vmatpush1.msra.mxu0 %v3286
    %3598 = vmatprep.subr.mxu0 0.0
    %3599 = vmatpush1.msra.mxu0 %v3287
    %3600 = vmatprep.subr.mxu0 0.0
    %3601 = vmatpush1.msra.mxu0 %v3288
    %3602 = vmatprep.subr.mxu0 0.0
    %3603 = vmatpush1.msra.mxu0 %v3289
    %3604 = vmatprep.subr.mxu0 0.0
    %3605 = vmatpush1.msra.mxu0 %v3290
    %3606 = vmatprep.subr.mxu0 0.0
    %3607 = vmatpush1.msra.mxu0 %v3291
    %3608 = vmatprep.subr.mxu0 0.0
    %3609 = vmatpush1.msra.mxu0 0.0
    %3610 = vmatprep.subr.mxu0 0.0
    %3611 = vmatpush1.msra.mxu0 0.0
    %3612 = vmatprep.subr.mxu0 0.0
    %3613 = vmatpush1.msra.mxu0 0.0
    %3614 = vmatprep.subr.mxu0 0.0
    %3615 = vmatpush1.msra.mxu0 0.0
    %3616 = vmatprep.subr.mxu0 0.0
    %3617 = vmatpush1.msra.mxu0 0.0
    %3618 = vmatprep.subr.mxu0 0.0
    %3619 = vmatpush1.msra.mxu0 0.0
    %3620 = vmatprep.subr.mxu0 0.0
    %3621 = vmatpush1.msra.mxu0 0.0
    %3622 = vmatprep.subr.mxu0 0.0
    %3623 = vmatpush1.msra.mxu0 0.0
    %3624 = vmatprep.subr.mxu0 0.0
    %3625 = vmatpush1.msra.mxu0 0.0
    %3626 = vmatprep.subr.mxu0 0.0
    %3627 = vmatpush1.msra.mxu0 0.0
    %3628 = vmatprep.subr.mxu0 0.0
    %3629 = vmatpush1.msra.mxu0 0.0
    %3630 = vmatprep.subr.mxu0 0.0
    %3631 = vmatpush1.msra.mxu0 0.0
    %3632 = vmatprep.subr.mxu0 0.0
    %3633 = vmatpush1.msra.mxu0 0.0
    %3634 = vmatprep.subr.mxu0 0.0
    %3635 = vmatpush1.msra.mxu0 0.0
    %3636 = vmatprep.subr.mxu0 0.0
    %3637 = vmatpush1.msra.mxu0 0.0
    %3638 = vmatprep.subr.mxu0 0.0
    %3639 = vmatpush1.msra.mxu0 0.0
    %3640 = vmatprep.subr.mxu0 0.0
    %3641 = vmatpush1.msra.mxu0 0.0
    %3642 = vmatprep.subr.mxu0 0.0
    %3643 = vmatpush1.msra.mxu0 0.0
    %3644 = vmatprep.subr.mxu0 0.0
    %3645 = vmatpush1.msra.mxu0 0.0
    %3646 = vmatprep.subr.mxu0 0.0
    %3647 = vmatpush1.msra.mxu0 0.0
    %3648 = vmatprep.subr.mxu0 0.0
    %3649 = vmatpush1.msra.mxu0 0.0
    %3650 = vmatprep.subr.mxu0 0.0
    %3651 = vmatpush1.msra.mxu0 0.0
    %3652 = vmatprep.subr.mxu0 0.0
    %3653 = vmatpush1.msra.mxu0 0.0
    %3654 = vmatprep.mubr.f32.mxu0 0.0
    %3655 = vmatmul.mubr.f32.gmra.mrb[0].mxu0 %v3582
    %v3656 = vpop.f32.mrb[0].mxu0
    %v3657 = vadd.f32 0.0, %v3656
    %v3658 = vpop.f32.mrb[0].mxu0
    %3659 = vmatprep.mubr.f32.mxu0 0.0
    %3660 = vmatmul.mubr.f32.gmra.mrb[0].mxu0 %v3585
    %v3661 = vpop.f32.mrb[0].mxu0
    %v3662 = vadd.f32 0.0, %v3661
    %v3663 = vpop.f32.mrb[0].mxu0
    %3664 = vmatprep.mubr.f32.mxu0 0.0
    %3665 = vmatmul.mubr.f32.gmra.mrb[0].mxu0 %v3588
    %v3666 = vpop.f32.mrb[0].mxu0
    %v3667 = vadd.f32 0.0, %v3666
    %v3668 = vpop.f32.mrb[0].mxu0
    %3669 = vdwg.mxu0
    %v3670 = vmax.f32 %v3574, %v3657
    %v3671 = vmax.f32 %v3575, %v3662
    %v3672 = vmax.f32 %v3576, %v3667
    %v3673 = vld [vmem:[%s8] sm:$0x3]
    %vm3674 = vcmask 146432
    %v3676 = vsel %vm3674, %v3673, 0
    %v3679 = vsel %vm792, %v3672, 0
    %3681 = vmatprep.subr.mxu0 0.0
    %3682 = vmatpush1.msra.mxu0 %v3670
    %3683 = vmatprep.subr.mxu0 0.0
    %3684 = vmatpush1.msra.mxu0 %v3671
    %3685 = vmatprep.subr.mxu0 0.0
    %3686 = vmatpush1.msra.mxu0 %v3679
    %3687 = vmatprep.subr.mxu0 0.0
    %3688 = vmatpush1.msra.mxu0 0.0
    %3689 = vmatprep.subr.mxu0 0.0
    %3690 = vmatpush1.msra.mxu0 0.0
    %3691 = vmatprep.subr.mxu0 0.0
    %3692 = vmatpush1.msra.mxu0 0.0
    %3693 = vmatprep.subr.mxu0 0.0
    %3694 = vmatpush1.msra.mxu0 0.0
    %3695 = vmatprep.subr.mxu0 0.0
    %3696 = vmatpush1.msra.mxu0 0.0
    %3697 = vmatprep.subr.mxu0 0.0
    %3698 = vmatpush1.msra.mxu0 0.0
    %3699 = vmatprep.subr.mxu0 0.0
    %3700 = vmatpush1.msra.mxu0 0.0
    %3701 = vmatprep.subr.mxu0 0.0
    %3702 = vmatpush1.msra.mxu0 0.0
    %3703 = vmatprep.subr.mxu0 0.0
    %3704 = vmatpush1.msra.mxu0 0.0
    %3705 = vmatprep.subr.mxu0 0.0
    %3706 = vmatpush1.msra.mxu0 0.0
    %3707 = vmatprep.subr.mxu0 0.0
    %3708 = vmatpush1.msra.mxu0 0.0
    %3709 = vmatprep.subr.mxu0 0.0
    %3710 = vmatpush1.msra.mxu0 0.0
    %3711 = vmatprep.subr.mxu0 0.0
    %3712 = vmatpush1.msra.mxu0 0.0
    %3713 = vmatprep.subr.mxu0 0.0
    %3714 = vmatpush1.msra.mxu0 0.0
    %3715 = vmatprep.subr.mxu0 0.0
    %3716 = vmatpush1.msra.mxu0 0.0
    %3717 = vmatprep.subr.mxu0 0.0
    %3718 = vmatpush1.msra.mxu0 0.0
    %3719 = vmatprep.subr.mxu0 0.0
    %3720 = vmatpush1.msra.mxu0 0.0
    %3721 = vmatprep.subr.mxu0 0.0
    %3722 = vmatpush1.msra.mxu0 0.0
    %3723 = vmatprep.subr.mxu0 0.0
    %3724 = vmatpush1.msra.mxu0 0.0
    %3725 = vmatprep.subr.mxu0 0.0
    %3726 = vmatpush1.msra.mxu0 0.0
    %3727 = vmatprep.subr.mxu0 0.0
    %3728 = vmatpush1.msra.mxu0 0.0
    %3729 = vmatprep.subr.mxu0 0.0
    %3730 = vmatpush1.msra.mxu0 0.0
    %3731 = vmatprep.subr.mxu0 0.0
    %3732 = vmatpush1.msra.mxu0 0.0
    %3733 = vmatprep.subr.mxu0 0.0
    %3734 = vmatpush1.msra.mxu0 0.0
    %3735 = vmatprep.subr.mxu0 0.0
    %3736 = vmatpush1.msra.mxu0 0.0
    %3737 = vmatprep.subr.mxu0 0.0
    %3738 = vmatpush1.msra.mxu0 0.0
    %3739 = vmatprep.subr.mxu0 0.0
    %3740 = vmatpush1.msra.mxu0 0.0
    %3741 = vmatprep.subr.mxu0 0.0
    %3742 = vmatpush1.msra.mxu0 0.0
    %3743 = vmatprep.subr.mxu0 0.0
    %3744 = vmatpush1.msra.mxu0 0.0
    %3745 = vmatprep.mubr.f32.mxu0 0.0
    %3746 = vmatmul.mubr.f32.gmra.mrb[0].mxu0 %v3676
    %v3747 = vpop.f32.mrb[0].mxu0
    %v3748 = vadd.f32 0.0, %v3747
    %v3749 = vpop.f32.mrb[0].mxu0
    %3750 = vdwg.mxu0
    %v3751 = vld [vmem:[%s9] sm:$0xff]
    %v3752 = vld [vmem:[%s9 + $0x8] sm:$0xff]
    %v3753 = vld [vmem:[%s9 + $0x10] sm:$0xff]
    %v3754 = vld [vmem:[%s9 + $0x18] sm:$0xff]
    %v3755 = vld [vmem:[%s9 + $0x20] sm:$0xff]
    %v3756 = vld [vmem:[%s9 + $0x28] sm:$0xff]
    %v3757 = vld [vmem:[%s9 + $0x30] sm:$0xff]
    %v3758 = vld [vmem:[%s9 + $0x38] sm:$0xff]
    %v3759 = vld [vmem:[%s9 + $0x40] sm:$0xff]
    %v3760 = vld [vmem:[%s9 + $0x48] sm:$0xff]
    %v3761 = vld [vmem:[%s9 + $0x50] sm:$0xff]
    %v3762 = vld [vmem:[%s9 + $0x58] sm:$0xff]
    %v3763 = vld [vmem:[%s9 + $0x60] sm:$0xff]
    %v3764 = vld [vmem:[%s9 + $0x68] sm:$0xff]
    %v3765 = vld [vmem:[%s9 + $0x70] sm:$0xff]
    %v3766 = vld [vmem:[%s9 + $0x78] sm:$0xff]
    %v3767 = vld [vmem:[%s9 + $0x80] sm:$0xff]
    %v3768 = vld [vmem:[%s9 + $0x88] sm:$0xff]
    %v3769 = vld [vmem:[%s9 + $0x90] sm:$0xff]
    %v3770 = vld [vmem:[%s9 + $0x98] sm:$0xff]
    %v3771 = vld [vmem:[%s9 + $0xa0] sm:$0xff]
    %v3772 = vld [vmem:[%s9 + $0xa8] sm:$0xff]
    %v3773 = vld [vmem:[%s9 + $0xb0] sm:$0xff]
    %v3774 = vld [vmem:[%s9 + $0xb8] sm:$0xff]
    %v3775 = vld [vmem:[%s9 + $0xc0] sm:$0xff]
    %v3776 = vld [vmem:[%s9 + $0xc8] sm:$0xff]
    %v3777 = vld [vmem:[%s9 + $0xd0] sm:$0xff]
    %v3778 = vld [vmem:[%s9 + $0xd8] sm:$0xff]
    %v3779 = vld [vmem:[%s9 + $0xe0] sm:$0xff]
    %v3780 = vld [vmem:[%s9 + $0xe8] sm:$0xff]
    %v3781 = vld [vmem:[%s9 + $0xf0] sm:$0xff]
    %v3782 = vld [vmem:[%s9 + $0xf8] sm:$0xff]
    %s3783 = scalar_lea.vmem %s8, 2
    %v3784 = vld [vmem:[%s3783] sm:$0x3]
    %v3786 = vsel %vm3674, %v3784, 0
    %3788 = vmatprep.subr.mxu0 0.0
    %3789 = vmatpush1.msra.mxu0 %v3670
    %3790 = vmatprep.subr.mxu0 0.0
    %3791 = vmatpush1.msra.mxu0 %v3671
    %3792 = vmatprep.subr.mxu0 0.0
    %3793 = vmatpush1.msra.mxu0 %v3679
    %3794 = vmatprep.subr.mxu0 0.0
    %3795 = vmatpush1.msra.mxu0 0.0
    %3796 = vmatprep.subr.mxu0 0.0
    %3797 = vmatpush1.msra.mxu0 0.0
    %3798 = vmatprep.subr.mxu0 0.0
    %3799 = vmatpush1.msra.mxu0 0.0
    %3800 = vmatprep.subr.mxu0 0.0
    %3801 = vmatpush1.msra.mxu0 0.0
    %3802 = vmatprep.subr.mxu0 0.0
    %3803 = vmatpush1.msra.mxu0 0.0
    %3804 = vmatprep.subr.mxu0 0.0
    %3805 = vmatpush1.msra.mxu0 0.0
    %3806 = vmatprep.subr.mxu0 0.0
    %3807 = vmatpush1.msra.mxu0 0.0
    %3808 = vmatprep.subr.mxu0 0.0
    %3809 = vmatpush1.msra.mxu0 0.0
    %3810 = vmatprep.subr.mxu0 0.0
    %3811 = vmatpush1.msra.mxu0 0.0
    %3812 = vmatprep.subr.mxu0 0.0
    %3813 = vmatpush1.msra.mxu0 0.0
    %3814 = vmatprep.subr.mxu0 0.0
    %3815 = vmatpush1.msra.mxu0 0.0
    %3816 = vmatprep.subr.mxu0 0.0
    %3817 = vmatpush1.msra.mxu0 0.0
    %3818 = vmatprep.subr.mxu0 0.0
    %3819 = vmatpush1.msra.mxu0 0.0
    %3820 = vmatprep.subr.mxu0 0.0
    %3821 = vmatpush1.msra.mxu0 0.0
    %3822 = vmatprep.subr.mxu0 0.0
    %3823 = vmatpush1.msra.mxu0 0.0
    %3824 = vmatprep.subr.mxu0 0.0
    %3825 = vmatpush1.msra.mxu0 0.0
    %3826 = vmatprep.subr.mxu0 0.0
    %3827 = vmatpush1.msra.mxu0 0.0
    %3828 = vmatprep.subr.mxu0 0.0
    %3829 = vmatpush1.msra.mxu0 0.0
    %3830 = vmatprep.subr.mxu0 0.0
    %3831 = vmatpush1.msra.mxu0 0.0
    %3832 = vmatprep.subr.mxu0 0.0
    %3833 = vmatpush1.msra.mxu0 0.0
    %3834 = vmatprep.subr.mxu0 0.0
    %3835 = vmatpush1.msra.mxu0 0.0
    %3836 = vmatprep.subr.mxu0 0.0
    %3837 = vmatpush1.msra.mxu0 0.0
    %3838 = vmatprep.subr.mxu0 0.0
    %3839 = vmatpush1.msra.mxu0 0.0
    %3840 = vmatprep.subr.mxu0 0.0
    %3841 = vmatpush1.msra.mxu0 0.0
    %3842 = vmatprep.subr.mxu0 0.0
    %3843 = vmatpush1.msra.mxu0 0.0
    %3844 = vmatprep.subr.mxu0 0.0
    %3845 = vmatpush1.msra.mxu0 0.0
    %3846 = vmatprep.subr.mxu0 0.0
    %3847 = vmatpush1.msra.mxu0 0.0
    %3848 = vmatprep.subr.mxu0 0.0
    %3849 = vmatpush1.msra.mxu0 0.0
    %3850 = vmatprep.subr.mxu0 0.0
    %3851 = vmatpush1.msra.mxu0 0.0
    %3852 = vmatprep.mubr.f32.mxu0 0.0
    %3853 = vmatmul.mubr.f32.gmra.mrb[0].mxu0 %v3786
    %v3854 = vpop.f32.mrb[0].mxu0
    %v3855 = vadd.f32 0.0, %v3854
    %v3856 = vpop.f32.mrb[0].mxu0
    %3857 = vdwg.mxu0
    %s3858 = scalar_lea.vmem %s9, 256
    %v3859 = vld [vmem:[%s3858] sm:$0xff]
    %v3860 = vld [vmem:[%s3858 + $0x8] sm:$0xff]
    %v3861 = vld [vmem:[%s3858 + $0x10] sm:$0xff]
    %v3862 = vld [vmem:[%s3858 + $0x18] sm:$0xff]
    %v3863 = vld [vmem:[%s3858 + $0x20] sm:$0xff]
    %v3864 = vld [vmem:[%s3858 + $0x28] sm:$0xff]
    %v3865 = vld [vmem:[%s3858 + $0x30] sm:$0xff]
    %v3866 = vld [vmem:[%s3858 + $0x38] sm:$0xff]
    %v3867 = vld [vmem:[%s3858 + $0x40] sm:$0xff]
    %v3868 = vld [vmem:[%s3858 + $0x48] sm:$0xff]
    %v3869 = vld [vmem:[%s3858 + $0x50] sm:$0xff]
    %v3870 = vld [vmem:[%s3858 + $0x58] sm:$0xff]
    %v3871 = vld [vmem:[%s3858 + $0x60] sm:$0xff]
    %v3872 = vld [vmem:[%s3858 + $0x68] sm:$0xff]
    %v3873 = vld [vmem:[%s3858 + $0x70] sm:$0xff]
    %v3874 = vld [vmem:[%s3858 + $0x78] sm:$0xff]
    %v3875 = vld [vmem:[%s3858 + $0x80] sm:$0xff]
    %v3876 = vld [vmem:[%s3858 + $0x88] sm:$0xff]
    %v3877 = vld [vmem:[%s3858 + $0x90] sm:$0xff]
    %v3878 = vld [vmem:[%s3858 + $0x98] sm:$0xff]
    %v3879 = vld [vmem:[%s3858 + $0xa0] sm:$0xff]
    %v3880 = vld [vmem:[%s3858 + $0xa8] sm:$0xff]
    %v3881 = vld [vmem:[%s3858 + $0xb0] sm:$0xff]
    %v3882 = vld [vmem:[%s3858 + $0xb8] sm:$0xff]
    %v3883 = vld [vmem:[%s3858 + $0xc0] sm:$0xff]
    %v3884 = vld [vmem:[%s3858 + $0xc8] sm:$0xff]
    %v3885 = vld [vmem:[%s3858 + $0xd0] sm:$0xff]
    %v3886 = vld [vmem:[%s3858 + $0xd8] sm:$0xff]
    %v3887 = vld [vmem:[%s3858 + $0xe0] sm:$0xff]
    %v3888 = vld [vmem:[%s3858 + $0xe8] sm:$0xff]
    %v3889 = vld [vmem:[%s3858 + $0xf0] sm:$0xff]
    %v3890 = vld [vmem:[%s3858 + $0xf8] sm:$0xff]
    %3891 = vmatprep.subr.mxu0 %v3860
    %3892 = vmatpush1.msra.mxu0 %v3859
    %3893 = vmatprep.subr.mxu0 %v3862
    %3894 = vmatpush1.msra.mxu0 %v3861
    %3895 = vmatprep.subr.mxu0 %v3864
    %3896 = vmatpush1.msra.mxu0 %v3863
    %3897 = vmatprep.subr.mxu0 %v3866
    %3898 = vmatpush1.msra.mxu0 %v3865
    %3899 = vmatprep.subr.mxu0 %v3868
    %3900 = vmatpush1.msra.mxu0 %v3867
    %3901 = vmatprep.subr.mxu0 %v3870
    %3902 = vmatpush1.msra.mxu0 %v3869
    %3903 = vmatprep.subr.mxu0 %v3872
    %3904 = vmatpush1.msra.mxu0 %v3871
    %3905 = vmatprep.subr.mxu0 %v3874
    %3906 = vmatpush1.msra.mxu0 %v3873
    %3907 = vmatprep.subr.mxu0 %v3876
    %3908 = vmatpush1.msra.mxu0 %v3875
    %3909 = vmatprep.subr.mxu0 %v3878
    %3910 = vmatpush1.msra.mxu0 %v3877
    %3911 = vmatprep.subr.mxu0 %v3880
    %3912 = vmatpush1.msra.mxu0 %v3879
    %3913 = vmatprep.subr.mxu0 %v3882
    %3914 = vmatpush1.msra.mxu0 %v3881
    %3915 = vmatprep.subr.mxu0 %v3884
    %3916 = vmatpush1.msra.mxu0 %v3883
    %3917 = vmatprep.subr.mxu0 %v3886
    %3918 = vmatpush1.msra.mxu0 %v3885
    %3919 = vmatprep.subr.mxu0 %v3888
    %3920 = vmatpush1.msra.mxu0 %v3887
    %3921 = vmatprep.subr.mxu0 %v3890
    %3922 = vmatpush1.msra.mxu0 %v3889
    %3923 = vmatprep.subr.mxu0 0.0
    %3924 = vmatpush1.msra.mxu0 0.0
    %3925 = vmatprep.subr.mxu0 0.0
    %3926 = vmatpush1.msra.mxu0 0.0
    %3927 = vmatprep.subr.mxu0 0.0
    %3928 = vmatpush1.msra.mxu0 0.0
    %3929 = vmatprep.subr.mxu0 0.0
    %3930 = vmatpush1.msra.mxu0 0.0
    %3931 = vmatprep.subr.mxu0 0.0
    %3932 = vmatpush1.msra.mxu0 0.0
    %3933 = vmatprep.subr.mxu0 0.0
    %3934 = vmatpush1.msra.mxu0 0.0
    %3935 = vmatprep.subr.mxu0 0.0
    %3936 = vmatpush1.msra.mxu0 0.0
    %3937 = vmatprep.subr.mxu0 0.0
    %3938 = vmatpush1.msra.mxu0 0.0
    %3939 = vmatprep.subr.mxu0 0.0
    %3940 = vmatpush1.msra.mxu0 0.0
    %3941 = vmatprep.subr.mxu0 0.0
    %3942 = vmatpush1.msra.mxu0 0.0
    %3943 = vmatprep.subr.mxu0 0.0
    %3944 = vmatpush1.msra.mxu0 0.0
    %3945 = vmatprep.subr.mxu0 0.0
    %3946 = vmatpush1.msra.mxu0 0.0
    %3947 = vmatprep.subr.mxu0 0.0
    %3948 = vmatpush1.msra.mxu0 0.0
    %3949 = vmatprep.subr.mxu0 0.0
    %3950 = vmatpush1.msra.mxu0 0.0
    %3951 = vmatprep.subr.mxu0 0.0
    %3952 = vmatpush1.msra.mxu0 0.0
    %3953 = vmatprep.subr.mxu0 0.0
    %3954 = vmatpush1.msra.mxu0 0.0
    %3955 = vmatprep.mubr.f32.mxu0 0.0
    %3956 = vmatmul.mubr.f32.gmra.mrb[0].mxu0 %v3855
    %v3957 = vpop.f32.mrb[0].mxu0
    %v3958 = vadd.f32 0.0, %v3957
    %v3959 = vpop.f32.mrb[0].mxu0
    %v3960 = vadd.f32 0.0, %v3959
    %3961 = vdwg.mxu0
    %3962 = vmatprep.subr.mxu0 %v3752
    %3963 = vmatpush1.msra.mxu0 %v3751
    %3964 = vmatprep.subr.mxu0 %v3754
    %3965 = vmatpush1.msra.mxu0 %v3753
    %3966 = vmatprep.subr.mxu0 %v3756
    %3967 = vmatpush1.msra.mxu0 %v3755
    %3968 = vmatprep.subr.mxu0 %v3758
    %3969 = vmatpush1.msra.mxu0 %v3757
    %3970 = vmatprep.subr.mxu0 %v3760
    %3971 = vmatpush1.msra.mxu0 %v3759
    %3972 = vmatprep.subr.mxu0 %v3762
    %3973 = vmatpush1.msra.mxu0 %v3761
    %3974 = vmatprep.subr.mxu0 %v3764
    %3975 = vmatpush1.msra.mxu0 %v3763
    %3976 = vmatprep.subr.mxu0 %v3766
    %3977 = vmatpush1.msra.mxu0 %v3765
    %3978 = vmatprep.subr.mxu0 %v3768
    %3979 = vmatpush1.msra.mxu0 %v3767
    %3980 = vmatprep.subr.mxu0 %v3770
    %3981 = vmatpush1.msra.mxu0 %v3769
    %3982 = vmatprep.subr.mxu0 %v3772
    %3983 = vmatpush1.msra.mxu0 %v3771
    %3984 = vmatprep.subr.mxu0 %v3774
    %3985 = vmatpush1.msra.mxu0 %v3773
    %3986 = vmatprep.subr.mxu0 %v3776
    %3987 = vmatpush1.msra.mxu0 %v3775
    %3988 = vmatprep.subr.mxu0 %v3778
    %3989 = vmatpush1.msra.mxu0 %v3777
    %3990 = vmatprep.subr.mxu0 %v3780
    %3991 = vmatpush1.msra.mxu0 %v3779
    %3992 = vmatprep.subr.mxu0 %v3782
    %3993 = vmatpush1.msra.mxu0 %v3781
    %3994 = vmatprep.subr.mxu0 0.0
    %3995 = vmatpush1.msra.mxu0 0.0
    %3996 = vmatprep.subr.mxu0 0.0
    %3997 = vmatpush1.msra.mxu0 0.0
    %3998 = vmatprep.subr.mxu0 0.0
    %3999 = vmatpush1.msra.mxu0 0.0
    %4000 = vmatprep.subr.mxu0 0.0
    %4001 = vmatpush1.msra.mxu0 0.0
    %4002 = vmatprep.subr.mxu0 0.0
    %4003 = vmatpush1.msra.mxu0 0.0
    %4004 = vmatprep.subr.mxu0 0.0
    %4005 = vmatpush1.msra.mxu0 0.0
    %4006 = vmatprep.subr.mxu0 0.0
    %4007 = vmatpush1.msra.mxu0 0.0
    %4008 = vmatprep.subr.mxu0 0.0
    %4009 = vmatpush1.msra.mxu0 0.0
    %4010 = vmatprep.subr.mxu0 0.0
    %4011 = vmatpush1.msra.mxu0 0.0
    %4012 = vmatprep.subr.mxu0 0.0
    %4013 = vmatpush1.msra.mxu0 0.0
    %4014 = vmatprep.subr.mxu0 0.0
    %4015 = vmatpush1.msra.mxu0 0.0
    %4016 = vmatprep.subr.mxu0 0.0
    %4017 = vmatpush1.msra.mxu0 0.0
    %4018 = vmatprep.subr.mxu0 0.0
    %4019 = vmatpush1.msra.mxu0 0.0
    %4020 = vmatprep.subr.mxu0 0.0
    %4021 = vmatpush1.msra.mxu0 0.0
    %4022 = vmatprep.subr.mxu0 0.0
    %4023 = vmatpush1.msra.mxu0 0.0
    %4024 = vmatprep.subr.mxu0 0.0
    %4025 = vmatpush1.msra.mxu0 0.0
    %4026 = vmatprep.mubr.f32.mxu0 0.0
    %4027 = vmatmul.mubr.f32.gmra.mrb[0].mxu0 %v3748
    %v4028 = vpop.f32.mrb[0].mxu0
    %v4029 = vadd.f32 %v3958, %v4028
    %v4030 = vpop.f32.mrb[0].mxu0
    %v4031 = vadd.f32 %v3960, %v4030
    %4032 = vdwg.mxu0
    %s4033 = scalar_lea.vmem %s8, 4
    %v4034 = vld [vmem:[%s4033] sm:$0x3]
    %v4036 = vsel %vm3674, %v4034, 0
    %4038 = vmatprep.subr.mxu0 0.0
    %4039 = vmatpush1.msra.mxu0 %v3670
    %4040 = vmatprep.subr.mxu0 0.0
    %4041 = vmatpush1.msra.mxu0 %v3671
    %4042 = vmatprep.subr.mxu0 0.0
    %4043 = vmatpush1.msra.mxu0 %v3679
    %4044 = vmatprep.subr.mxu0 0.0
    %4045 = vmatpush1.msra.mxu0 0.0
    %4046 = vmatprep.subr.mxu0 0.0
    %4047 = vmatpush1.msra.mxu0 0.0
    %4048 = vmatprep.subr.mxu0 0.0
    %4049 = vmatpush1.msra.mxu0 0.0
    %4050 = vmatprep.subr.mxu0 0.0
    %4051 = vmatpush1.msra.mxu0 0.0
    %4052 = vmatprep.subr.mxu0 0.0
    %4053 = vmatpush1.msra.mxu0 0.0
    %4054 = vmatprep.subr.mxu0 0.0
    %4055 = vmatpush1.msra.mxu0 0.0
    %4056 = vmatprep.subr.mxu0 0.0
    %4057 = vmatpush1.msra.mxu0 0.0
    %4058 = vmatprep.subr.mxu0 0.0
    %4059 = vmatpush1.msra.mxu0 0.0
    %4060 = vmatprep.subr.mxu0 0.0
    %4061 = vmatpush1.msra.mxu0 0.0
    %4062 = vmatprep.subr.mxu0 0.0
    %4063 = vmatpush1.msra.mxu0 0.0
    %4064 = vmatprep.subr.mxu0 0.0
    %4065 = vmatpush1.msra.mxu0 0.0
    %4066 = vmatprep.subr.mxu0 0.0
    %4067 = vmatpush1.msra.mxu0 0.0
    %4068 = vmatprep.subr.mxu0 0.0
    %4069 = vmatpush1.msra.mxu0 0.0
    %4070 = vmatprep.subr.mxu0 0.0
    %4071 = vmatpush1.msra.mxu0 0.0
    %4072 = vmatprep.subr.mxu0 0.0
    %4073 = vmatpush1.msra.mxu0 0.0
    %4074 = vmatprep.subr.mxu0 0.0
    %4075 = vmatpush1.msra.mxu0 0.0
    %4076 = vmatprep.subr.mxu0 0.0
    %4077 = vmatpush1.msra.mxu0 0.0
    %4078 = vmatprep.subr.mxu0 0.0
    %4079 = vmatpush1.msra.mxu0 0.0
    %4080 = vmatprep.subr.mxu0 0.0
    %4081 = vmatpush1.msra.mxu0 0.0
    %4082 = vmatprep.subr.mxu0 0.0
    %4083 = vmatpush1.msra.mxu0 0.0
    %4084 = vmatprep.subr.mxu0 0.0
    %4085 = vmatpush1.msra.mxu0 0.0
    %4086 = vmatprep.subr.mxu0 0.0
    %4087 = vmatpush1.msra.mxu0 0.0
    %4088 = vmatprep.subr.mxu0 0.0
    %4089 = vmatpush1.msra.mxu0 0.0
    %4090 = vmatprep.subr.mxu0 0.0
    %4091 = vmatpush1.msra.mxu0 0.0
    %4092 = vmatprep.subr.mxu0 0.0
    %4093 = vmatpush1.msra.mxu0 0.0
    %4094 = vmatprep.subr.mxu0 0.0
    %4095 = vmatpush1.msra.mxu0 0.0
    %4096 = vmatprep.subr.mxu0 0.0
    %4097 = vmatpush1.msra.mxu0 0.0
    %4098 = vmatprep.subr.mxu0 0.0
    %4099 = vmatpush1.msra.mxu0 0.0
    %4100 = vmatprep.subr.mxu0 0.0
    %4101 = vmatpush1.msra.mxu0 0.0
    %4102 = vmatprep.mubr.f32.mxu0 0.0
    %4103 = vmatmul.mubr.f32.gmra.mrb[0].mxu0 %v4036
    %v4104 = vpop.f32.mrb[0].mxu0
    %v4105 = vadd.f32 0.0, %v4104
    %v4106 = vpop.f32.mrb[0].mxu0
    %4107 = vdwg.mxu0
    %s4108 = scalar_lea.vmem %s9, 512
    %v4109 = vld [vmem:[%s4108] sm:$0xff]
    %v4110 = vld [vmem:[%s4108 + $0x8] sm:$0xff]
    %v4111 = vld [vmem:[%s4108 + $0x10] sm:$0xff]
    %v4112 = vld [vmem:[%s4108 + $0x18] sm:$0xff]
    %v4113 = vld [vmem:[%s4108 + $0x20] sm:$0xff]
    %v4114 = vld [vmem:[%s4108 + $0x28] sm:$0xff]
    %v4115 = vld [vmem:[%s4108 + $0x30] sm:$0xff]
    %v4116 = vld [vmem:[%s4108 + $0x38] sm:$0xff]
    %v4117 = vld [vmem:[%s4108 + $0x40] sm:$0xff]
    %v4118 = vld [vmem:[%s4108 + $0x48] sm:$0xff]
    %v4119 = vld [vmem:[%s4108 + $0x50] sm:$0xff]
    %v4120 = vld [vmem:[%s4108 + $0x58] sm:$0xff]
    %v4121 = vld [vmem:[%s4108 + $0x60] sm:$0xff]
    %v4122 = vld [vmem:[%s4108 + $0x68] sm:$0xff]
    %v4123 = vld [vmem:[%s4108 + $0x70] sm:$0xff]
    %v4124 = vld [vmem:[%s4108 + $0x78] sm:$0xff]
    %v4125 = vld [vmem:[%s4108 + $0x80] sm:$0xff]
    %v4126 = vld [vmem:[%s4108 + $0x88] sm:$0xff]
    %v4127 = vld [vmem:[%s4108 + $0x90] sm:$0xff]
    %v4128 = vld [vmem:[%s4108 + $0x98] sm:$0xff]
    %v4129 = vld [vmem:[%s4108 + $0xa0] sm:$0xff]
    %v4130 = vld [vmem:[%s4108 + $0xa8] sm:$0xff]
    %v4131 = vld [vmem:[%s4108 + $0xb0] sm:$0xff]
    %v4132 = vld [vmem:[%s4108 + $0xb8] sm:$0xff]
    %v4133 = vld [vmem:[%s4108 + $0xc0] sm:$0xff]
    %v4134 = vld [vmem:[%s4108 + $0xc8] sm:$0xff]
    %v4135 = vld [vmem:[%s4108 + $0xd0] sm:$0xff]
    %v4136 = vld [vmem:[%s4108 + $0xd8] sm:$0xff]
    %v4137 = vld [vmem:[%s4108 + $0xe0] sm:$0xff]
    %v4138 = vld [vmem:[%s4108 + $0xe8] sm:$0xff]
    %v4139 = vld [vmem:[%s4108 + $0xf0] sm:$0xff]
    %v4140 = vld [vmem:[%s4108 + $0xf8] sm:$0xff]
    %4141 = vmatprep.subr.mxu0 %v4110
    %4142 = vmatpush1.msra.mxu0 %v4109
    %4143 = vmatprep.subr.mxu0 %v4112
    %4144 = vmatpush1.msra.mxu0 %v4111
    %4145 = vmatprep.subr.mxu0 %v4114
    %4146 = vmatpush1.msra.mxu0 %v4113
    %4147 = vmatprep.subr.mxu0 %v4116
    %4148 = vmatpush1.msra.mxu0 %v4115
    %4149 = vmatprep.subr.mxu0 %v4118
    %4150 = vmatpush1.msra.mxu0 %v4117
    %4151 = vmatprep.subr.mxu0 %v4120
    %4152 = vmatpush1.msra.mxu0 %v4119
    %4153 = vmatprep.subr.mxu0 %v4122
    %4154 = vmatpush1.msra.mxu0 %v4121
    %4155 = vmatprep.subr.mxu0 %v4124
    %4156 = vmatpush1.msra.mxu0 %v4123
    %4157 = vmatprep.subr.mxu0 %v4126
    %4158 = vmatpush1.msra.mxu0 %v4125
    %4159 = vmatprep.subr.mxu0 %v4128
    %4160 = vmatpush1.msra.mxu0 %v4127
    %4161 = vmatprep.subr.mxu0 %v4130
    %4162 = vmatpush1.msra.mxu0 %v4129
    %4163 = vmatprep.subr.mxu0 %v4132
    %4164 = vmatpush1.msra.mxu0 %v4131
    %4165 = vmatprep.subr.mxu0 %v4134
    %4166 = vmatpush1.msra.mxu0 %v4133
    %4167 = vmatprep.subr.mxu0 %v4136
    %4168 = vmatpush1.msra.mxu0 %v4135
    %4169 = vmatprep.subr.mxu0 %v4138
    %4170 = vmatpush1.msra.mxu0 %v4137
    %4171 = vmatprep.subr.mxu0 %v4140
    %4172 = vmatpush1.msra.mxu0 %v4139
    %4173 = vmatprep.subr.mxu0 0.0
    %4174 = vmatpush1.msra.mxu0 0.0
    %4175 = vmatprep.subr.mxu0 0.0
    %4176 = vmatpush1.msra.mxu0 0.0
    %4177 = vmatprep.subr.mxu0 0.0
    %4178 = vmatpush1.msra.mxu0 0.0
    %4179 = vmatprep.subr.mxu0 0.0
    %4180 = vmatpush1.msra.mxu0 0.0
    %4181 = vmatprep.subr.mxu0 0.0
    %4182 = vmatpush1.msra.mxu0 0.0
    %4183 = vmatprep.subr.mxu0 0.0
    %4184 = vmatpush1.msra.mxu0 0.0
    %4185 = vmatprep.subr.mxu0 0.0
    %4186 = vmatpush1.msra.mxu0 0.0
    %4187 = vmatprep.subr.mxu0 0.0
    %4188 = vmatpush1.msra.mxu0 0.0
    %4189 = vmatprep.subr.mxu0 0.0
    %4190 = vmatpush1.msra.mxu0 0.0
    %4191 = vmatprep.subr.mxu0 0.0
    %4192 = vmatpush1.msra.mxu0 0.0
    %4193 = vmatprep.subr.mxu0 0.0
    %4194 = vmatpush1.msra.mxu0 0.0
    %4195 = vmatprep.subr.mxu0 0.0
    %4196 = vmatpush1.msra.mxu0 0.0
    %4197 = vmatprep.subr.mxu0 0.0
    %4198 = vmatpush1.msra.mxu0 0.0
    %4199 = vmatprep.subr.mxu0 0.0
    %4200 = vmatpush1.msra.mxu0 0.0
    %4201 = vmatprep.subr.mxu0 0.0
    %4202 = vmatpush1.msra.mxu0 0.0
    %4203 = vmatprep.subr.mxu0 0.0
    %4204 = vmatpush1.msra.mxu0 0.0
    %4205 = vmatprep.mubr.f32.mxu0 0.0
    %4206 = vmatmul.mubr.f32.gmra.mrb[0].mxu0 %v4105
    %v4207 = vpop.f32.mrb[0].mxu0
    %v4208 = vadd.f32 0.0, %v4207
    %v4209 = vpop.f32.mrb[0].mxu0
    %v4210 = vadd.f32 0.0, %v4209
    %4211 = vdwg.mxu0
    %v4212 = vadd.f32 %v4029, %v4208
    %v4213 = vadd.f32 %v4031, %v4210
    %s4214 = scalar_lea.vmem %s8, 6
    %v4215 = vld [vmem:[%s4214] sm:$0x3]
    %v4217 = vsel %vm3674, %v4215, 0
    %4219 = vmatprep.subr.mxu0 0.0
    %4220 = vmatpush1.msra.mxu0 %v3670
    %4221 = vmatprep.subr.mxu0 0.0
    %4222 = vmatpush1.msra.mxu0 %v3671
    %4223 = vmatprep.subr.mxu0 0.0
    %4224 = vmatpush1.msra.mxu0 %v3679
    %4225 = vmatprep.subr.mxu0 0.0
    %4226 = vmatpush1.msra.mxu0 0.0
    %4227 = vmatprep.subr.mxu0 0.0
    %4228 = vmatpush1.msra.mxu0 0.0
    %4229 = vmatprep.subr.mxu0 0.0
    %4230 = vmatpush1.msra.mxu0 0.0
    %4231 = vmatprep.subr.mxu0 0.0
    %4232 = vmatpush1.msra.mxu0 0.0
    %4233 = vmatprep.subr.mxu0 0.0
    %4234 = vmatpush1.msra.mxu0 0.0
    %4235 = vmatprep.subr.mxu0 0.0
    %4236 = vmatpush1.msra.mxu0 0.0
    %4237 = vmatprep.subr.mxu0 0.0
    %4238 = vmatpush1.msra.mxu0 0.0
    %4239 = vmatprep.subr.mxu0 0.0
    %4240 = vmatpush1.msra.mxu0 0.0
    %4241 = vmatprep.subr.mxu0 0.0
    %4242 = vmatpush1.msra.mxu0 0.0
    %4243 = vmatprep.subr.mxu0 0.0
    %4244 = vmatpush1.msra.mxu0 0.0
    %4245 = vmatprep.subr.mxu0 0.0
    %4246 = vmatpush1.msra.mxu0 0.0
    %4247 = vmatprep.subr.mxu0 0.0
    %4248 = vmatpush1.msra.mxu0 0.0
    %4249 = vmatprep.subr.mxu0 0.0
    %4250 = vmatpush1.msra.mxu0 0.0
    %4251 = vmatprep.subr.mxu0 0.0
    %4252 = vmatpush1.msra.mxu0 0.0
    %4253 = vmatprep.subr.mxu0 0.0
    %4254 = vmatpush1.msra.mxu0 0.0
    %4255 = vmatprep.subr.mxu0 0.0
    %4256 = vmatpush1.msra.mxu0 0.0
    %4257 = vmatprep.subr.mxu0 0.0
    %4258 = vmatpush1.msra.mxu0 0.0
    %4259 = vmatprep.subr.mxu0 0.0
    %4260 = vmatpush1.msra.mxu0 0.0
    %4261 = vmatprep.subr.mxu0 0.0
    %4262 = vmatpush1.msra.mxu0 0.0
    %4263 = vmatprep.subr.mxu0 0.0
    %4264 = vmatpush1.msra.mxu0 0.0
    %4265 = vmatprep.subr.mxu0 0.0
    %4266 = vmatpush1.msra.mxu0 0.0
    %4267 = vmatprep.subr.mxu0 0.0
    %4268 = vmatpush1.msra.mxu0 0.0
    %4269 = vmatprep.subr.mxu0 0.0
    %4270 = vmatpush1.msra.mxu0 0.0
    %4271 = vmatprep.subr.mxu0 0.0
    %4272 = vmatpush1.msra.mxu0 0.0
    %4273 = vmatprep.subr.mxu0 0.0
    %4274 = vmatpush1.msra.mxu0 0.0
    %4275 = vmatprep.subr.mxu0 0.0
    %4276 = vmatpush1.msra.mxu0 0.0
    %4277 = vmatprep.subr.mxu0 0.0
    %4278 = vmatpush1.msra.mxu0 0.0
    %4279 = vmatprep.subr.mxu0 0.0
    %4280 = vmatpush1.msra.mxu0 0.0
    %4281 = vmatprep.subr.mxu0 0.0
    %4282 = vmatpush1.msra.mxu0 0.0
    %4283 = vmatprep.mubr.f32.mxu0 0.0
    %4284 = vmatmul.mubr.f32.gmra.mrb[0].mxu0 %v4217
    %v4285 = vpop.f32.mrb[0].mxu0
    %v4286 = vadd.f32 0.0, %v4285
    %v4287 = vpop.f32.mrb[0].mxu0
    %4288 = vdwg.mxu0
    %s4289 = scalar_lea.vmem %s9, 768
    %v4290 = vld [vmem:[%s4289] sm:$0xff]
    %v4291 = vld [vmem:[%s4289 + $0x8] sm:$0xff]
    %v4292 = vld [vmem:[%s4289 + $0x10] sm:$0xff]
    %v4293 = vld [vmem:[%s4289 + $0x18] sm:$0xff]
    %v4294 = vld [vmem:[%s4289 + $0x20] sm:$0xff]
    %v4295 = vld [vmem:[%s4289 + $0x28] sm:$0xff]
    %v4296 = vld [vmem:[%s4289 + $0x30] sm:$0xff]
    %v4297 = vld [vmem:[%s4289 + $0x38] sm:$0xff]
    %v4298 = vld [vmem:[%s4289 + $0x40] sm:$0xff]
    %v4299 = vld [vmem:[%s4289 + $0x48] sm:$0xff]
    %v4300 = vld [vmem:[%s4289 + $0x50] sm:$0xff]
    %v4301 = vld [vmem:[%s4289 + $0x58] sm:$0xff]
    %v4302 = vld [vmem:[%s4289 + $0x60] sm:$0xff]
    %v4303 = vld [vmem:[%s4289 + $0x68] sm:$0xff]
    %v4304 = vld [vmem:[%s4289 + $0x70] sm:$0xff]
    %v4305 = vld [vmem:[%s4289 + $0x78] sm:$0xff]
    %v4306 = vld [vmem:[%s4289 + $0x80] sm:$0xff]
    %v4307 = vld [vmem:[%s4289 + $0x88] sm:$0xff]
    %v4308 = vld [vmem:[%s4289 + $0x90] sm:$0xff]
    %v4309 = vld [vmem:[%s4289 + $0x98] sm:$0xff]
    %v4310 = vld [vmem:[%s4289 + $0xa0] sm:$0xff]
    %v4311 = vld [vmem:[%s4289 + $0xa8] sm:$0xff]
    %v4312 = vld [vmem:[%s4289 + $0xb0] sm:$0xff]
    %v4313 = vld [vmem:[%s4289 + $0xb8] sm:$0xff]
    %v4314 = vld [vmem:[%s4289 + $0xc0] sm:$0xff]
    %v4315 = vld [vmem:[%s4289 + $0xc8] sm:$0xff]
    %v4316 = vld [vmem:[%s4289 + $0xd0] sm:$0xff]
    %v4317 = vld [vmem:[%s4289 + $0xd8] sm:$0xff]
    %v4318 = vld [vmem:[%s4289 + $0xe0] sm:$0xff]
    %v4319 = vld [vmem:[%s4289 + $0xe8] sm:$0xff]
    %v4320 = vld [vmem:[%s4289 + $0xf0] sm:$0xff]
    %v4321 = vld [vmem:[%s4289 + $0xf8] sm:$0xff]
    %4322 = vmatprep.subr.mxu0 %v4291
    %4323 = vmatpush1.msra.mxu0 %v4290
    %4324 = vmatprep.subr.mxu0 %v4293
    %4325 = vmatpush1.msra.mxu0 %v4292
    %4326 = vmatprep.subr.mxu0 %v4295
    %4327 = vmatpush1.msra.mxu0 %v4294
    %4328 = vmatprep.subr.mxu0 %v4297
    %4329 = vmatpush1.msra.mxu0 %v4296
    %4330 = vmatprep.subr.mxu0 %v4299
    %4331 = vmatpush1.msra.mxu0 %v4298
    %4332 = vmatprep.subr.mxu0 %v4301
    %4333 = vmatpush1.msra.mxu0 %v4300
    %4334 = vmatprep.subr.mxu0 %v4303
    %4335 = vmatpush1.msra.mxu0 %v4302
    %4336 = vmatprep.subr.mxu0 %v4305
    %4337 = vmatpush1.msra.mxu0 %v4304
    %4338 = vmatprep.subr.mxu0 %v4307
    %4339 = vmatpush1.msra.mxu0 %v4306
    %4340 = vmatprep.subr.mxu0 %v4309
    %4341 = vmatpush1.msra.mxu0 %v4308
    %4342 = vmatprep.subr.mxu0 %v4311
    %4343 = vmatpush1.msra.mxu0 %v4310
    %4344 = vmatprep.subr.mxu0 %v4313
    %4345 = vmatpush1.msra.mxu0 %v4312
    %4346 = vmatprep.subr.mxu0 %v4315
    %4347 = vmatpush1.msra.mxu0 %v4314
    %4348 = vmatprep.subr.mxu0 %v4317
    %4349 = vmatpush1.msra.mxu0 %v4316
    %4350 = vmatprep.subr.mxu0 %v4319
    %4351 = vmatpush1.msra.mxu0 %v4318
    %4352 = vmatprep.subr.mxu0 %v4321
    %4353 = vmatpush1.msra.mxu0 %v4320
    %4354 = vmatprep.subr.mxu0 0.0
    %4355 = vmatpush1.msra.mxu0 0.0
    %4356 = vmatprep.subr.mxu0 0.0
    %4357 = vmatpush1.msra.mxu0 0.0
    %4358 = vmatprep.subr.mxu0 0.0
    %4359 = vmatpush1.msra.mxu0 0.0
    %4360 = vmatprep.subr.mxu0 0.0
    %4361 = vmatpush1.msra.mxu0 0.0
    %4362 = vmatprep.subr.mxu0 0.0
    %4363 = vmatpush1.msra.mxu0 0.0
    %4364 = vmatprep.subr.mxu0 0.0
    %4365 = vmatpush1.msra.mxu0 0.0
    %4366 = vmatprep.subr.mxu0 0.0
    %4367 = vmatpush1.msra.mxu0 0.0
    %4368 = vmatprep.subr.mxu0 0.0
    %4369 = vmatpush1.msra.mxu0 0.0
    %4370 = vmatprep.subr.mxu0 0.0
    %4371 = vmatpush1.msra.mxu0 0.0
    %4372 = vmatprep.subr.mxu0 0.0
    %4373 = vmatpush1.msra.mxu0 0.0
    %4374 = vmatprep.subr.mxu0 0.0
    %4375 = vmatpush1.msra.mxu0 0.0
    %4376 = vmatprep.subr.mxu0 0.0
    %4377 = vmatpush1.msra.mxu0 0.0
    %4378 = vmatprep.subr.mxu0 0.0
    %4379 = vmatpush1.msra.mxu0 0.0
    %4380 = vmatprep.subr.mxu0 0.0
    %4381 = vmatpush1.msra.mxu0 0.0
    %4382 = vmatprep.subr.mxu0 0.0
    %4383 = vmatpush1.msra.mxu0 0.0
    %4384 = vmatprep.subr.mxu0 0.0
    %4385 = vmatpush1.msra.mxu0 0.0
    %4386 = vmatprep.mubr.f32.mxu0 0.0
    %4387 = vmatmul.mubr.f32.gmra.mrb[0].mxu0 %v4286
    %v4388 = vpop.f32.mrb[0].mxu0
    %v4389 = vadd.f32 0.0, %v4388
    %v4390 = vpop.f32.mrb[0].mxu0
    %v4391 = vadd.f32 0.0, %v4390
    %4392 = vdwg.mxu0
    %v4393 = vadd.f32 %v4212, %v4389
    %v4394 = vadd.f32 %v4213, %v4391
    %s4395 = scalar_lea.vmem %s8, 8
    %v4396 = vld [vmem:[%s4395] sm:$0x3]
    %v4398 = vsel %vm3674, %v4396, 0
    %4400 = vmatprep.subr.mxu0 0.0
    %4401 = vmatpush1.msra.mxu0 %v3670
    %4402 = vmatprep.subr.mxu0 0.0
    %4403 = vmatpush1.msra.mxu0 %v3671
    %4404 = vmatprep.subr.mxu0 0.0
    %4405 = vmatpush1.msra.mxu0 %v3679
    %4406 = vmatprep.subr.mxu0 0.0
    %4407 = vmatpush1.msra.mxu0 0.0
    %4408 = vmatprep.subr.mxu0 0.0
    %4409 = vmatpush1.msra.mxu0 0.0
    %4410 = vmatprep.subr.mxu0 0.0
    %4411 = vmatpush1.msra.mxu0 0.0
    %4412 = vmatprep.subr.mxu0 0.0
    %4413 = vmatpush1.msra.mxu0 0.0
    %4414 = vmatprep.subr.mxu0 0.0
    %4415 = vmatpush1.msra.mxu0 0.0
    %4416 = vmatprep.subr.mxu0 0.0
    %4417 = vmatpush1.msra.mxu0 0.0
    %4418 = vmatprep.subr.mxu0 0.0
    %4419 = vmatpush1.msra.mxu0 0.0
    %4420 = vmatprep.subr.mxu0 0.0
    %4421 = vmatpush1.msra.mxu0 0.0
    %4422 = vmatprep.subr.mxu0 0.0
    %4423 = vmatpush1.msra.mxu0 0.0
    %4424 = vmatprep.subr.mxu0 0.0
    %4425 = vmatpush1.msra.mxu0 0.0
    %4426 = vmatprep.subr.mxu0 0.0
    %4427 = vmatpush1.msra.mxu0 0.0
    %4428 = vmatprep.subr.mxu0 0.0
    %4429 = vmatpush1.msra.mxu0 0.0
    %4430 = vmatprep.subr.mxu0 0.0
    %4431 = vmatpush1.msra.mxu0 0.0
    %4432 = vmatprep.subr.mxu0 0.0
    %4433 = vmatpush1.msra.mxu0 0.0
    %4434 = vmatprep.subr.mxu0 0.0
    %4435 = vmatpush1.msra.mxu0 0.0
    %4436 = vmatprep.subr.mxu0 0.0
    %4437 = vmatpush1.msra.mxu0 0.0
    %4438 = vmatprep.subr.mxu0 0.0
    %4439 = vmatpush1.msra.mxu0 0.0
    %4440 = vmatprep.subr.mxu0 0.0
    %4441 = vmatpush1.msra.mxu0 0.0
    %4442 = vmatprep.subr.mxu0 0.0
    %4443 = vmatpush1.msra.mxu0 0.0
    %4444 = vmatprep.subr.mxu0 0.0
    %4445 = vmatpush1.msra.mxu0 0.0
    %4446 = vmatprep.subr.mxu0 0.0
    %4447 = vmatpush1.msra.mxu0 0.0
    %4448 = vmatprep.subr.mxu0 0.0
    %4449 = vmatpush1.msra.mxu0 0.0
    %4450 = vmatprep.subr.mxu0 0.0
    %4451 = vmatpush1.msra.mxu0 0.0
    %4452 = vmatprep.subr.mxu0 0.0
    %4453 = vmatpush1.msra.mxu0 0.0
    %4454 = vmatprep.subr.mxu0 0.0
    %4455 = vmatpush1.msra.mxu0 0.0
    %4456 = vmatprep.subr.mxu0 0.0
    %4457 = vmatpush1.msra.mxu0 0.0
    %4458 = vmatprep.subr.mxu0 0.0
    %4459 = vmatpush1.msra.mxu0 0.0
    %4460 = vmatprep.subr.mxu0 0.0
    %4461 = vmatpush1.msra.mxu0 0.0
    %4462 = vmatprep.subr.mxu0 0.0
    %4463 = vmatpush1.msra.mxu0 0.0
    %4464 = vmatprep.mubr.f32.mxu0 0.0
    %4465 = vmatmul.mubr.f32.gmra.mrb[0].mxu0 %v4398
    %v4466 = vpop.f32.mrb[0].mxu0
    %v4467 = vadd.f32 0.0, %v4466
    %v4468 = vpop.f32.mrb[0].mxu0
    %4469 = vdwg.mxu0
    %s4470 = scalar_lea.vmem %s9, 1024
    %v4471 = vld [vmem:[%s4470] sm:$0xff]
    %v4472 = vld [vmem:[%s4470 + $0x8] sm:$0xff]
    %v4473 = vld [vmem:[%s4470 + $0x10] sm:$0xff]
    %v4474 = vld [vmem:[%s4470 + $0x18] sm:$0xff]
    %v4475 = vld [vmem:[%s4470 + $0x20] sm:$0xff]
    %v4476 = vld [vmem:[%s4470 + $0x28] sm:$0xff]
    %v4477 = vld [vmem:[%s4470 + $0x30] sm:$0xff]
    %v4478 = vld [vmem:[%s4470 + $0x38] sm:$0xff]
    %v4479 = vld [vmem:[%s4470 + $0x40] sm:$0xff]
    %v4480 = vld [vmem:[%s4470 + $0x48] sm:$0xff]
    %v4481 = vld [vmem:[%s4470 + $0x50] sm:$0xff]
    %v4482 = vld [vmem:[%s4470 + $0x58] sm:$0xff]
    %v4483 = vld [vmem:[%s4470 + $0x60] sm:$0xff]
    %v4484 = vld [vmem:[%s4470 + $0x68] sm:$0xff]
    %v4485 = vld [vmem:[%s4470 + $0x70] sm:$0xff]
    %v4486 = vld [vmem:[%s4470 + $0x78] sm:$0xff]
    %v4487 = vld [vmem:[%s4470 + $0x80] sm:$0xff]
    %v4488 = vld [vmem:[%s4470 + $0x88] sm:$0xff]
    %v4489 = vld [vmem:[%s4470 + $0x90] sm:$0xff]
    %v4490 = vld [vmem:[%s4470 + $0x98] sm:$0xff]
    %v4491 = vld [vmem:[%s4470 + $0xa0] sm:$0xff]
    %v4492 = vld [vmem:[%s4470 + $0xa8] sm:$0xff]
    %v4493 = vld [vmem:[%s4470 + $0xb0] sm:$0xff]
    %v4494 = vld [vmem:[%s4470 + $0xb8] sm:$0xff]
    %v4495 = vld [vmem:[%s4470 + $0xc0] sm:$0xff]
    %v4496 = vld [vmem:[%s4470 + $0xc8] sm:$0xff]
    %v4497 = vld [vmem:[%s4470 + $0xd0] sm:$0xff]
    %v4498 = vld [vmem:[%s4470 + $0xd8] sm:$0xff]
    %v4499 = vld [vmem:[%s4470 + $0xe0] sm:$0xff]
    %v4500 = vld [vmem:[%s4470 + $0xe8] sm:$0xff]
    %v4501 = vld [vmem:[%s4470 + $0xf0] sm:$0xff]
    %v4502 = vld [vmem:[%s4470 + $0xf8] sm:$0xff]
    %4503 = vmatprep.subr.mxu0 %v4472
    %4504 = vmatpush1.msra.mxu0 %v4471
    %4505 = vmatprep.subr.mxu0 %v4474
    %4506 = vmatpush1.msra.mxu0 %v4473
    %4507 = vmatprep.subr.mxu0 %v4476
    %4508 = vmatpush1.msra.mxu0 %v4475
    %4509 = vmatprep.subr.mxu0 %v4478
    %4510 = vmatpush1.msra.mxu0 %v4477
    %4511 = vmatprep.subr.mxu0 %v4480
    %4512 = vmatpush1.msra.mxu0 %v4479
    %4513 = vmatprep.subr.mxu0 %v4482
    %4514 = vmatpush1.msra.mxu0 %v4481
    %4515 = vmatprep.subr.mxu0 %v4484
    %4516 = vmatpush1.msra.mxu0 %v4483
    %4517 = vmatprep.subr.mxu0 %v4486
    %4518 = vmatpush1.msra.mxu0 %v4485
    %4519 = vmatprep.subr.mxu0 %v4488
    %4520 = vmatpush1.msra.mxu0 %v4487
    %4521 = vmatprep.subr.mxu0 %v4490
    %4522 = vmatpush1.msra.mxu0 %v4489
    %4523 = vmatprep.subr.mxu0 %v4492
    %4524 = vmatpush1.msra.mxu0 %v4491
    %4525 = vmatprep.subr.mxu0 %v4494
    %4526 = vmatpush1.msra.mxu0 %v4493
    %4527 = vmatprep.subr.mxu0 %v4496
    %4528 = vmatpush1.msra.mxu0 %v4495
    %4529 = vmatprep.subr.mxu0 %v4498
    %4530 = vmatpush1.msra.mxu0 %v4497
    %4531 = vmatprep.subr.mxu0 %v4500
    %4532 = vmatpush1.msra.mxu0 %v4499
    %4533 = vmatprep.subr.mxu0 %v4502
    %4534 = vmatpush1.msra.mxu0 %v4501
    %4535 = vmatprep.subr.mxu0 0.0
    %4536 = vmatpush1.msra.mxu0 0.0
    %4537 = vmatprep.subr.mxu0 0.0
    %4538 = vmatpush1.msra.mxu0 0.0
    %4539 = vmatprep.subr.mxu0 0.0
    %4540 = vmatpush1.msra.mxu0 0.0
    %4541 = vmatprep.subr.mxu0 0.0
    %4542 = vmatpush1.msra.mxu0 0.0
    %4543 = vmatprep.subr.mxu0 0.0
    %4544 = vmatpush1.msra.mxu0 0.0
    %4545 = vmatprep.subr.mxu0 0.0
    %4546 = vmatpush1.msra.mxu0 0.0
    %4547 = vmatprep.subr.mxu0 0.0
    %4548 = vmatpush1.msra.mxu0 0.0
    %4549 = vmatprep.subr.mxu0 0.0
    %4550 = vmatpush1.msra.mxu0 0.0
    %4551 = vmatprep.subr.mxu0 0.0
    %4552 = vmatpush1.msra.mxu0 0.0
    %4553 = vmatprep.subr.mxu0 0.0
    %4554 = vmatpush1.msra.mxu0 0.0
    %4555 = vmatprep.subr.mxu0 0.0
    %4556 = vmatpush1.msra.mxu0 0.0
    %4557 = vmatprep.subr.mxu0 0.0
    %4558 = vmatpush1.msra.mxu0 0.0
    %4559 = vmatprep.subr.mxu0 0.0
    %4560 = vmatpush1.msra.mxu0 0.0
    %4561 = vmatprep.subr.mxu0 0.0
    %4562 = vmatpush1.msra.mxu0 0.0
    %4563 = vmatprep.subr.mxu0 0.0
    %4564 = vmatpush1.msra.mxu0 0.0
    %4565 = vmatprep.subr.mxu0 0.0
    %4566 = vmatpush1.msra.mxu0 0.0
    %4567 = vmatprep.mubr.f32.mxu0 0.0
    %4568 = vmatmul.mubr.f32.gmra.mrb[0].mxu0 %v4467
    %v4569 = vpop.f32.mrb[0].mxu0
    %v4570 = vadd.f32 0.0, %v4569
    %v4571 = vpop.f32.mrb[0].mxu0
    %v4572 = vadd.f32 0.0, %v4571
    %4573 = vdwg.mxu0
    %v4574 = vadd.f32 %v4393, %v4570
    %v4575 = vadd.f32 %v4394, %v4572
    %s4576 = scalar_lea.vmem %s8, 10
    %v4577 = vld [vmem:[%s4576] sm:$0x3]
    %v4579 = vsel %vm3674, %v4577, 0
    %4581 = vmatprep.subr.mxu0 0.0
    %4582 = vmatpush1.msra.mxu0 %v3670
    %4583 = vmatprep.subr.mxu0 0.0
    %4584 = vmatpush1.msra.mxu0 %v3671
    %4585 = vmatprep.subr.mxu0 0.0
    %4586 = vmatpush1.msra.mxu0 %v3679
    %4587 = vmatprep.subr.mxu0 0.0
    %4588 = vmatpush1.msra.mxu0 0.0
    %4589 = vmatprep.subr.mxu0 0.0
    %4590 = vmatpush1.msra.mxu0 0.0
    %4591 = vmatprep.subr.mxu0 0.0
    %4592 = vmatpush1.msra.mxu0 0.0
    %4593 = vmatprep.subr.mxu0 0.0
    %4594 = vmatpush1.msra.mxu0 0.0
    %4595 = vmatprep.subr.mxu0 0.0
    %4596 = vmatpush1.msra.mxu0 0.0
    %4597 = vmatprep.subr.mxu0 0.0
    %4598 = vmatpush1.msra.mxu0 0.0
    %4599 = vmatprep.subr.mxu0 0.0
    %4600 = vmatpush1.msra.mxu0 0.0
    %4601 = vmatprep.subr.mxu0 0.0
    %4602 = vmatpush1.msra.mxu0 0.0
    %4603 = vmatprep.subr.mxu0 0.0
    %4604 = vmatpush1.msra.mxu0 0.0
    %4605 = vmatprep.subr.mxu0 0.0
    %4606 = vmatpush1.msra.mxu0 0.0
    %4607 = vmatprep.subr.mxu0 0.0
    %4608 = vmatpush1.msra.mxu0 0.0
    %4609 = vmatprep.subr.mxu0 0.0
    %4610 = vmatpush1.msra.mxu0 0.0
    %4611 = vmatprep.subr.mxu0 0.0
    %4612 = vmatpush1.msra.mxu0 0.0
    %4613 = vmatprep.subr.mxu0 0.0
    %4614 = vmatpush1.msra.mxu0 0.0
    %4615 = vmatprep.subr.mxu0 0.0
    %4616 = vmatpush1.msra.mxu0 0.0
    %4617 = vmatprep.subr.mxu0 0.0
    %4618 = vmatpush1.msra.mxu0 0.0
    %4619 = vmatprep.subr.mxu0 0.0
    %4620 = vmatpush1.msra.mxu0 0.0
    %4621 = vmatprep.subr.mxu0 0.0
    %4622 = vmatpush1.msra.mxu0 0.0
    %4623 = vmatprep.subr.mxu0 0.0
    %4624 = vmatpush1.msra.mxu0 0.0
    %4625 = vmatprep.subr.mxu0 0.0
    %4626 = vmatpush1.msra.mxu0 0.0
    %4627 = vmatprep.subr.mxu0 0.0
    %4628 = vmatpush1.msra.mxu0 0.0
    %4629 = vmatprep.subr.mxu0 0.0
    %4630 = vmatpush1.msra.mxu0 0.0
    %4631 = vmatprep.subr.mxu0 0.0
    %4632 = vmatpush1.msra.mxu0 0.0
    %4633 = vmatprep.subr.mxu0 0.0
    %4634 = vmatpush1.msra.mxu0 0.0
    %4635 = vmatprep.subr.mxu0 0.0
    %4636 = vmatpush1.msra.mxu0 0.0
    %4637 = vmatprep.subr.mxu0 0.0
    %4638 = vmatpush1.msra.mxu0 0.0
    %4639 = vmatprep.subr.mxu0 0.0
    %4640 = vmatpush1.msra.mxu0 0.0
    %4641 = vmatprep.subr.mxu0 0.0
    %4642 = vmatpush1.msra.mxu0 0.0
    %4643 = vmatprep.subr.mxu0 0.0
    %4644 = vmatpush1.msra.mxu0 0.0
    %4645 = vmatprep.mubr.f32.mxu0 0.0
    %4646 = vmatmul.mubr.f32.gmra.mrb[0].mxu0 %v4579
    %v4647 = vpop.f32.mrb[0].mxu0
    %v4648 = vadd.f32 0.0, %v4647
    %v4649 = vpop.f32.mrb[0].mxu0
    %4650 = vdwg.mxu0
    %s4651 = scalar_lea.vmem %s9, 1280
    %v4652 = vld [vmem:[%s4651] sm:$0xff]
    %v4653 = vld [vmem:[%s4651 + $0x8] sm:$0xff]
    %v4654 = vld [vmem:[%s4651 + $0x10] sm:$0xff]
    %v4655 = vld [vmem:[%s4651 + $0x18] sm:$0xff]
    %v4656 = vld [vmem:[%s4651 + $0x20] sm:$0xff]
    %v4657 = vld [vmem:[%s4651 + $0x28] sm:$0xff]
    %v4658 = vld [vmem:[%s4651 + $0x30] sm:$0xff]
    %v4659 = vld [vmem:[%s4651 + $0x38] sm:$0xff]
    %v4660 = vld [vmem:[%s4651 + $0x40] sm:$0xff]
    %v4661 = vld [vmem:[%s4651 + $0x48] sm:$0xff]
    %v4662 = vld [vmem:[%s4651 + $0x50] sm:$0xff]
    %v4663 = vld [vmem:[%s4651 + $0x58] sm:$0xff]
    %v4664 = vld [vmem:[%s4651 + $0x60] sm:$0xff]
    %v4665 = vld [vmem:[%s4651 + $0x68] sm:$0xff]
    %v4666 = vld [vmem:[%s4651 + $0x70] sm:$0xff]
    %v4667 = vld [vmem:[%s4651 + $0x78] sm:$0xff]
    %v4668 = vld [vmem:[%s4651 + $0x80] sm:$0xff]
    %v4669 = vld [vmem:[%s4651 + $0x88] sm:$0xff]
    %v4670 = vld [vmem:[%s4651 + $0x90] sm:$0xff]
    %v4671 = vld [vmem:[%s4651 + $0x98] sm:$0xff]
    %v4672 = vld [vmem:[%s4651 + $0xa0] sm:$0xff]
    %v4673 = vld [vmem:[%s4651 + $0xa8] sm:$0xff]
    %v4674 = vld [vmem:[%s4651 + $0xb0] sm:$0xff]
    %v4675 = vld [vmem:[%s4651 + $0xb8] sm:$0xff]
    %v4676 = vld [vmem:[%s4651 + $0xc0] sm:$0xff]
    %v4677 = vld [vmem:[%s4651 + $0xc8] sm:$0xff]
    %v4678 = vld [vmem:[%s4651 + $0xd0] sm:$0xff]
    %v4679 = vld [vmem:[%s4651 + $0xd8] sm:$0xff]
    %v4680 = vld [vmem:[%s4651 + $0xe0] sm:$0xff]
    %v4681 = vld [vmem:[%s4651 + $0xe8] sm:$0xff]
    %v4682 = vld [vmem:[%s4651 + $0xf0] sm:$0xff]
    %v4683 = vld [vmem:[%s4651 + $0xf8] sm:$0xff]
    %4684 = vmatprep.subr.mxu0 %v4653
    %4685 = vmatpush1.msra.mxu0 %v4652
    %4686 = vmatprep.subr.mxu0 %v4655
    %4687 = vmatpush1.msra.mxu0 %v4654
    %4688 = vmatprep.subr.mxu0 %v4657
    %4689 = vmatpush1.msra.mxu0 %v4656
    %4690 = vmatprep.subr.mxu0 %v4659
    %4691 = vmatpush1.msra.mxu0 %v4658
    %4692 = vmatprep.subr.mxu0 %v4661
    %4693 = vmatpush1.msra.mxu0 %v4660
    %4694 = vmatprep.subr.mxu0 %v4663
    %4695 = vmatpush1.msra.mxu0 %v4662
    %4696 = vmatprep.subr.mxu0 %v4665
    %4697 = vmatpush1.msra.mxu0 %v4664
    %4698 = vmatprep.subr.mxu0 %v4667
    %4699 = vmatpush1.msra.mxu0 %v4666
    %4700 = vmatprep.subr.mxu0 %v4669
    %4701 = vmatpush1.msra.mxu0 %v4668
    %4702 = vmatprep.subr.mxu0 %v4671
    %4703 = vmatpush1.msra.mxu0 %v4670
    %4704 = vmatprep.subr.mxu0 %v4673
    %4705 = vmatpush1.msra.mxu0 %v4672
    %4706 = vmatprep.subr.mxu0 %v4675
    %4707 = vmatpush1.msra.mxu0 %v4674
    %4708 = vmatprep.subr.mxu0 %v4677
    %4709 = vmatpush1.msra.mxu0 %v4676
    %4710 = vmatprep.subr.mxu0 %v4679
    %4711 = vmatpush1.msra.mxu0 %v4678
    %4712 = vmatprep.subr.mxu0 %v4681
    %4713 = vmatpush1.msra.mxu0 %v4680
    %4714 = vmatprep.subr.mxu0 %v4683
    %4715 = vmatpush1.msra.mxu0 %v4682
    %4716 = vmatprep.subr.mxu0 0.0
    %4717 = vmatpush1.msra.mxu0 0.0
    %4718 = vmatprep.subr.mxu0 0.0
    %4719 = vmatpush1.msra.mxu0 0.0
    %4720 = vmatprep.subr.mxu0 0.0
    %4721 = vmatpush1.msra.mxu0 0.0
    %4722 = vmatprep.subr.mxu0 0.0
    %4723 = vmatpush1.msra.mxu0 0.0
    %4724 = vmatprep.subr.mxu0 0.0
    %4725 = vmatpush1.msra.mxu0 0.0
    %4726 = vmatprep.subr.mxu0 0.0
    %4727 = vmatpush1.msra.mxu0 0.0
    %4728 = vmatprep.subr.mxu0 0.0
    %4729 = vmatpush1.msra.mxu0 0.0
    %4730 = vmatprep.subr.mxu0 0.0
    %4731 = vmatpush1.msra.mxu0 0.0
    %4732 = vmatprep.subr.mxu0 0.0
    %4733 = vmatpush1.msra.mxu0 0.0
    %4734 = vmatprep.subr.mxu0 0.0
    %4735 = vmatpush1.msra.mxu0 0.0
    %4736 = vmatprep.subr.mxu0 0.0
    %4737 = vmatpush1.msra.mxu0 0.0
    %4738 = vmatprep.subr.mxu0 0.0
    %4739 = vmatpush1.msra.mxu0 0.0
    %4740 = vmatprep.subr.mxu0 0.0
    %4741 = vmatpush1.msra.mxu0 0.0
    %4742 = vmatprep.subr.mxu0 0.0
    %4743 = vmatpush1.msra.mxu0 0.0
    %4744 = vmatprep.subr.mxu0 0.0
    %4745 = vmatpush1.msra.mxu0 0.0
    %4746 = vmatprep.subr.mxu0 0.0
    %4747 = vmatpush1.msra.mxu0 0.0
    %4748 = vmatprep.mubr.f32.mxu0 0.0
    %4749 = vmatmul.mubr.f32.gmra.mrb[0].mxu0 %v4648
    %v4750 = vpop.f32.mrb[0].mxu0
    %v4751 = vadd.f32 0.0, %v4750
    %v4752 = vpop.f32.mrb[0].mxu0
    %v4753 = vadd.f32 0.0, %v4752
    %4754 = vdwg.mxu0
    %v4755 = vadd.f32 %v4574, %v4751
    %v4756 = vadd.f32 %v4575, %v4753
    %s4757 = scalar_lea.vmem %s8, 12
    %v4758 = vld [vmem:[%s4757] sm:$0x3]
    %v4760 = vsel %vm3674, %v4758, 0
    %4762 = vmatprep.subr.mxu0 0.0
    %4763 = vmatpush1.msra.mxu0 %v3670
    %4764 = vmatprep.subr.mxu0 0.0
    %4765 = vmatpush1.msra.mxu0 %v3671
    %4766 = vmatprep.subr.mxu0 0.0
    %4767 = vmatpush1.msra.mxu0 %v3679
    %4768 = vmatprep.subr.mxu0 0.0
    %4769 = vmatpush1.msra.mxu0 0.0
    %4770 = vmatprep.subr.mxu0 0.0
    %4771 = vmatpush1.msra.mxu0 0.0
    %4772 = vmatprep.subr.mxu0 0.0
    %4773 = vmatpush1.msra.mxu0 0.0
    %4774 = vmatprep.subr.mxu0 0.0
    %4775 = vmatpush1.msra.mxu0 0.0
    %4776 = vmatprep.subr.mxu0 0.0
    %4777 = vmatpush1.msra.mxu0 0.0
    %4778 = vmatprep.subr.mxu0 0.0
    %4779 = vmatpush1.msra.mxu0 0.0
    %4780 = vmatprep.subr.mxu0 0.0
    %4781 = vmatpush1.msra.mxu0 0.0
    %4782 = vmatprep.subr.mxu0 0.0
    %4783 = vmatpush1.msra.mxu0 0.0
    %4784 = vmatprep.subr.mxu0 0.0
    %4785 = vmatpush1.msra.mxu0 0.0
    %4786 = vmatprep.subr.mxu0 0.0
    %4787 = vmatpush1.msra.mxu0 0.0
    %4788 = vmatprep.subr.mxu0 0.0
    %4789 = vmatpush1.msra.mxu0 0.0
    %4790 = vmatprep.subr.mxu0 0.0
    %4791 = vmatpush1.msra.mxu0 0.0
    %4792 = vmatprep.subr.mxu0 0.0
    %4793 = vmatpush1.msra.mxu0 0.0
    %4794 = vmatprep.subr.mxu0 0.0
    %4795 = vmatpush1.msra.mxu0 0.0
    %4796 = vmatprep.subr.mxu0 0.0
    %4797 = vmatpush1.msra.mxu0 0.0
    %4798 = vmatprep.subr.mxu0 0.0
    %4799 = vmatpush1.msra.mxu0 0.0
    %4800 = vmatprep.subr.mxu0 0.0
    %4801 = vmatpush1.msra.mxu0 0.0
    %4802 = vmatprep.subr.mxu0 0.0
    %4803 = vmatpush1.msra.mxu0 0.0
    %4804 = vmatprep.subr.mxu0 0.0
    %4805 = vmatpush1.msra.mxu0 0.0
    %4806 = vmatprep.subr.mxu0 0.0
    %4807 = vmatpush1.msra.mxu0 0.0
    %4808 = vmatprep.subr.mxu0 0.0
    %4809 = vmatpush1.msra.mxu0 0.0
    %4810 = vmatprep.subr.mxu0 0.0
    %4811 = vmatpush1.msra.mxu0 0.0
    %4812 = vmatprep.subr.mxu0 0.0
    %4813 = vmatpush1.msra.mxu0 0.0
    %4814 = vmatprep.subr.mxu0 0.0
    %4815 = vmatpush1.msra.mxu0 0.0
    %4816 = vmatprep.subr.mxu0 0.0
    %4817 = vmatpush1.msra.mxu0 0.0
    %4818 = vmatprep.subr.mxu0 0.0
    %4819 = vmatpush1.msra.mxu0 0.0
    %4820 = vmatprep.subr.mxu0 0.0
    %4821 = vmatpush1.msra.mxu0 0.0
    %4822 = vmatprep.subr.mxu0 0.0
    %4823 = vmatpush1.msra.mxu0 0.0
    %4824 = vmatprep.subr.mxu0 0.0
    %4825 = vmatpush1.msra.mxu0 0.0
    %4826 = vmatprep.mubr.f32.mxu0 0.0
    %4827 = vmatmul.mubr.f32.gmra.mrb[0].mxu0 %v4760
    %v4828 = vpop.f32.mrb[0].mxu0
    %v4829 = vadd.f32 0.0, %v4828
    %v4830 = vpop.f32.mrb[0].mxu0
    %4831 = vdwg.mxu0
    %s4832 = scalar_lea.vmem %s9, 1536
    %v4833 = vld [vmem:[%s4832] sm:$0xff]
    %v4834 = vld [vmem:[%s4832 + $0x8] sm:$0xff]
    %v4835 = vld [vmem:[%s4832 + $0x10] sm:$0xff]
    %v4836 = vld [vmem:[%s4832 + $0x18] sm:$0xff]
    %v4837 = vld [vmem:[%s4832 + $0x20] sm:$0xff]
    %v4838 = vld [vmem:[%s4832 + $0x28] sm:$0xff]
    %v4839 = vld [vmem:[%s4832 + $0x30] sm:$0xff]
    %v4840 = vld [vmem:[%s4832 + $0x38] sm:$0xff]
    %v4841 = vld [vmem:[%s4832 + $0x40] sm:$0xff]
    %v4842 = vld [vmem:[%s4832 + $0x48] sm:$0xff]
    %v4843 = vld [vmem:[%s4832 + $0x50] sm:$0xff]
    %v4844 = vld [vmem:[%s4832 + $0x58] sm:$0xff]
    %v4845 = vld [vmem:[%s4832 + $0x60] sm:$0xff]
    %v4846 = vld [vmem:[%s4832 + $0x68] sm:$0xff]
    %v4847 = vld [vmem:[%s4832 + $0x70] sm:$0xff]
    %v4848 = vld [vmem:[%s4832 + $0x78] sm:$0xff]
    %v4849 = vld [vmem:[%s4832 + $0x80] sm:$0xff]
    %v4850 = vld [vmem:[%s4832 + $0x88] sm:$0xff]
    %v4851 = vld [vmem:[%s4832 + $0x90] sm:$0xff]
    %v4852 = vld [vmem:[%s4832 + $0x98] sm:$0xff]
    %v4853 = vld [vmem:[%s4832 + $0xa0] sm:$0xff]
    %v4854 = vld [vmem:[%s4832 + $0xa8] sm:$0xff]
    %v4855 = vld [vmem:[%s4832 + $0xb0] sm:$0xff]
    %v4856 = vld [vmem:[%s4832 + $0xb8] sm:$0xff]
    %v4857 = vld [vmem:[%s4832 + $0xc0] sm:$0xff]
    %v4858 = vld [vmem:[%s4832 + $0xc8] sm:$0xff]
    %v4859 = vld [vmem:[%s4832 + $0xd0] sm:$0xff]
    %v4860 = vld [vmem:[%s4832 + $0xd8] sm:$0xff]
    %v4861 = vld [vmem:[%s4832 + $0xe0] sm:$0xff]
    %v4862 = vld [vmem:[%s4832 + $0xe8] sm:$0xff]
    %v4863 = vld [vmem:[%s4832 + $0xf0] sm:$0xff]
    %v4864 = vld [vmem:[%s4832 + $0xf8] sm:$0xff]
    %4865 = vmatprep.subr.mxu0 %v4834
    %4866 = vmatpush1.msra.mxu0 %v4833
    %4867 = vmatprep.subr.mxu0 %v4836
    %4868 = vmatpush1.msra.mxu0 %v4835
    %4869 = vmatprep.subr.mxu0 %v4838
    %4870 = vmatpush1.msra.mxu0 %v4837
    %4871 = vmatprep.subr.mxu0 %v4840
    %4872 = vmatpush1.msra.mxu0 %v4839
    %4873 = vmatprep.subr.mxu0 %v4842
    %4874 = vmatpush1.msra.mxu0 %v4841
    %4875 = vmatprep.subr.mxu0 %v4844
    %4876 = vmatpush1.msra.mxu0 %v4843
    %4877 = vmatprep.subr.mxu0 %v4846
    %4878 = vmatpush1.msra.mxu0 %v4845
    %4879 = vmatprep.subr.mxu0 %v4848
    %4880 = vmatpush1.msra.mxu0 %v4847
    %4881 = vmatprep.subr.mxu0 %v4850
    %4882 = vmatpush1.msra.mxu0 %v4849
    %4883 = vmatprep.subr.mxu0 %v4852
    %4884 = vmatpush1.msra.mxu0 %v4851
    %4885 = vmatprep.subr.mxu0 %v4854
    %4886 = vmatpush1.msra.mxu0 %v4853
    %4887 = vmatprep.subr.mxu0 %v4856
    %4888 = vmatpush1.msra.mxu0 %v4855
    %4889 = vmatprep.subr.mxu0 %v4858
    %4890 = vmatpush1.msra.mxu0 %v4857
    %4891 = vmatprep.subr.mxu0 %v4860
    %4892 = vmatpush1.msra.mxu0 %v4859
    %4893 = vmatprep.subr.mxu0 %v4862
    %4894 = vmatpush1.msra.mxu0 %v4861
    %4895 = vmatprep.subr.mxu0 %v4864
    %4896 = vmatpush1.msra.mxu0 %v4863
    %4897 = vmatprep.subr.mxu0 0.0
    %4898 = vmatpush1.msra.mxu0 0.0
    %4899 = vmatprep.subr.mxu0 0.0
    %4900 = vmatpush1.msra.mxu0 0.0
    %4901 = vmatprep.subr.mxu0 0.0
    %4902 = vmatpush1.msra.mxu0 0.0
    %4903 = vmatprep.subr.mxu0 0.0
    %4904 = vmatpush1.msra.mxu0 0.0
    %4905 = vmatprep.subr.mxu0 0.0
    %4906 = vmatpush1.msra.mxu0 0.0
    %4907 = vmatprep.subr.mxu0 0.0
    %4908 = vmatpush1.msra.mxu0 0.0
    %4909 = vmatprep.subr.mxu0 0.0
    %4910 = vmatpush1.msra.mxu0 0.0
    %4911 = vmatprep.subr.mxu0 0.0
    %4912 = vmatpush1.msra.mxu0 0.0
    %4913 = vmatprep.subr.mxu0 0.0
    %4914 = vmatpush1.msra.mxu0 0.0
    %4915 = vmatprep.subr.mxu0 0.0
    %4916 = vmatpush1.msra.mxu0 0.0
    %4917 = vmatprep.subr.mxu0 0.0
    %4918 = vmatpush1.msra.mxu0 0.0
    %4919 = vmatprep.subr.mxu0 0.0
    %4920 = vmatpush1.msra.mxu0 0.0
    %4921 = vmatprep.subr.mxu0 0.0
    %4922 = vmatpush1.msra.mxu0 0.0
    %4923 = vmatprep.subr.mxu0 0.0
    %4924 = vmatpush1.msra.mxu0 0.0
    %4925 = vmatprep.subr.mxu0 0.0
    %4926 = vmatpush1.msra.mxu0 0.0
    %4927 = vmatprep.subr.mxu0 0.0
    %4928 = vmatpush1.msra.mxu0 0.0
    %4929 = vmatprep.mubr.f32.mxu0 0.0
    %4930 = vmatmul.mubr.f32.gmra.mrb[0].mxu0 %v4829
    %v4931 = vpop.f32.mrb[0].mxu0
    %v4932 = vadd.f32 0.0, %v4931
    %v4933 = vpop.f32.mrb[0].mxu0
    %v4934 = vadd.f32 0.0, %v4933
    %4935 = vdwg.mxu0
    %v4936 = vadd.f32 %v4755, %v4932
    %v4937 = vadd.f32 %v4756, %v4934
    %s4938 = scalar_lea.vmem %s8, 14
    %v4939 = vld [vmem:[%s4938] sm:$0x3]
    %v4941 = vsel %vm3674, %v4939, 0
    %4943 = vmatprep.subr.mxu0 0.0
    %4944 = vmatpush1.msra.mxu0 %v3670
    %4945 = vmatprep.subr.mxu0 0.0
    %4946 = vmatpush1.msra.mxu0 %v3671
    %4947 = vmatprep.subr.mxu0 0.0
    %4948 = vmatpush1.msra.mxu0 %v3679
    %4949 = vmatprep.subr.mxu0 0.0
    %4950 = vmatpush1.msra.mxu0 0.0
    %4951 = vmatprep.subr.mxu0 0.0
    %4952 = vmatpush1.msra.mxu0 0.0
    %4953 = vmatprep.subr.mxu0 0.0
    %4954 = vmatpush1.msra.mxu0 0.0
    %4955 = vmatprep.subr.mxu0 0.0
    %4956 = vmatpush1.msra.mxu0 0.0
    %4957 = vmatprep.subr.mxu0 0.0
    %4958 = vmatpush1.msra.mxu0 0.0
    %4959 = vmatprep.subr.mxu0 0.0
    %4960 = vmatpush1.msra.mxu0 0.0
    %4961 = vmatprep.subr.mxu0 0.0
    %4962 = vmatpush1.msra.mxu0 0.0
    %4963 = vmatprep.subr.mxu0 0.0
    %4964 = vmatpush1.msra.mxu0 0.0
    %4965 = vmatprep.subr.mxu0 0.0
    %4966 = vmatpush1.msra.mxu0 0.0
    %4967 = vmatprep.subr.mxu0 0.0
    %4968 = vmatpush1.msra.mxu0 0.0
    %4969 = vmatprep.subr.mxu0 0.0
    %4970 = vmatpush1.msra.mxu0 0.0
    %4971 = vmatprep.subr.mxu0 0.0
    %4972 = vmatpush1.msra.mxu0 0.0
    %4973 = vmatprep.subr.mxu0 0.0
    %4974 = vmatpush1.msra.mxu0 0.0
    %4975 = vmatprep.subr.mxu0 0.0
    %4976 = vmatpush1.msra.mxu0 0.0
    %4977 = vmatprep.subr.mxu0 0.0
    %4978 = vmatpush1.msra.mxu0 0.0
    %4979 = vmatprep.subr.mxu0 0.0
    %4980 = vmatpush1.msra.mxu0 0.0
    %4981 = vmatprep.subr.mxu0 0.0
    %4982 = vmatpush1.msra.mxu0 0.0
    %4983 = vmatprep.subr.mxu0 0.0
    %4984 = vmatpush1.msra.mxu0 0.0
    %4985 = vmatprep.subr.mxu0 0.0
    %4986 = vmatpush1.msra.mxu0 0.0
    %4987 = vmatprep.subr.mxu0 0.0
    %4988 = vmatpush1.msra.mxu0 0.0
    %4989 = vmatprep.subr.mxu0 0.0
    %4990 = vmatpush1.msra.mxu0 0.0
    %4991 = vmatprep.subr.mxu0 0.0
    %4992 = vmatpush1.msra.mxu0 0.0
    %4993 = vmatprep.subr.mxu0 0.0
    %4994 = vmatpush1.msra.mxu0 0.0
    %4995 = vmatprep.subr.mxu0 0.0
    %4996 = vmatpush1.msra.mxu0 0.0
    %4997 = vmatprep.subr.mxu0 0.0
    %4998 = vmatpush1.msra.mxu0 0.0
    %4999 = vmatprep.subr.mxu0 0.0
    %5000 = vmatpush1.msra.mxu0 0.0
    %5001 = vmatprep.subr.mxu0 0.0
    %5002 = vmatpush1.msra.mxu0 0.0
    %5003 = vmatprep.subr.mxu0 0.0
    %5004 = vmatpush1.msra.mxu0 0.0
    %5005 = vmatprep.subr.mxu0 0.0
    %5006 = vmatpush1.msra.mxu0 0.0
    %5007 = vmatprep.mubr.f32.mxu0 0.0
    %5008 = vmatmul.mubr.f32.gmra.mrb[0].mxu0 %v4941
    %v5009 = vpop.f32.mrb[0].mxu0
    %v5010 = vadd.f32 0.0, %v5009
    %v5011 = vpop.f32.mrb[0].mxu0
    %5012 = vdwg.mxu0
    %s5013 = scalar_lea.vmem %s9, 1792
    %v5014 = vld [vmem:[%s5013] sm:$0xff]
    %v5015 = vld [vmem:[%s5013 + $0x8] sm:$0xff]
    %v5016 = vld [vmem:[%s5013 + $0x10] sm:$0xff]
    %v5017 = vld [vmem:[%s5013 + $0x18] sm:$0xff]
    %v5018 = vld [vmem:[%s5013 + $0x20] sm:$0xff]
    %v5019 = vld [vmem:[%s5013 + $0x28] sm:$0xff]
    %v5020 = vld [vmem:[%s5013 + $0x30] sm:$0xff]
    %v5021 = vld [vmem:[%s5013 + $0x38] sm:$0xff]
    %v5022 = vld [vmem:[%s5013 + $0x40] sm:$0xff]
    %v5023 = vld [vmem:[%s5013 + $0x48] sm:$0xff]
    %v5024 = vld [vmem:[%s5013 + $0x50] sm:$0xff]
    %v5025 = vld [vmem:[%s5013 + $0x58] sm:$0xff]
    %v5026 = vld [vmem:[%s5013 + $0x60] sm:$0xff]
    %v5027 = vld [vmem:[%s5013 + $0x68] sm:$0xff]
    %v5028 = vld [vmem:[%s5013 + $0x70] sm:$0xff]
    %v5029 = vld [vmem:[%s5013 + $0x78] sm:$0xff]
    %v5030 = vld [vmem:[%s5013 + $0x80] sm:$0xff]
    %v5031 = vld [vmem:[%s5013 + $0x88] sm:$0xff]
    %v5032 = vld [vmem:[%s5013 + $0x90] sm:$0xff]
    %v5033 = vld [vmem:[%s5013 + $0x98] sm:$0xff]
    %v5034 = vld [vmem:[%s5013 + $0xa0] sm:$0xff]
    %v5035 = vld [vmem:[%s5013 + $0xa8] sm:$0xff]
    %v5036 = vld [vmem:[%s5013 + $0xb0] sm:$0xff]
    %v5037 = vld [vmem:[%s5013 + $0xb8] sm:$0xff]
    %v5038 = vld [vmem:[%s5013 + $0xc0] sm:$0xff]
    %v5039 = vld [vmem:[%s5013 + $0xc8] sm:$0xff]
    %v5040 = vld [vmem:[%s5013 + $0xd0] sm:$0xff]
    %v5041 = vld [vmem:[%s5013 + $0xd8] sm:$0xff]
    %v5042 = vld [vmem:[%s5013 + $0xe0] sm:$0xff]
    %v5043 = vld [vmem:[%s5013 + $0xe8] sm:$0xff]
    %v5044 = vld [vmem:[%s5013 + $0xf0] sm:$0xff]
    %v5045 = vld [vmem:[%s5013 + $0xf8] sm:$0xff]
    %5046 = vmatprep.subr.mxu0 %v5015
    %5047 = vmatpush1.msra.mxu0 %v5014
    %5048 = vmatprep.subr.mxu0 %v5017
    %5049 = vmatpush1.msra.mxu0 %v5016
    %5050 = vmatprep.subr.mxu0 %v5019
    %5051 = vmatpush1.msra.mxu0 %v5018
    %5052 = vmatprep.subr.mxu0 %v5021
    %5053 = vmatpush1.msra.mxu0 %v5020
    %5054 = vmatprep.subr.mxu0 %v5023
    %5055 = vmatpush1.msra.mxu0 %v5022
    %5056 = vmatprep.subr.mxu0 %v5025
    %5057 = vmatpush1.msra.mxu0 %v5024
    %5058 = vmatprep.subr.mxu0 %v5027
    %5059 = vmatpush1.msra.mxu0 %v5026
    %5060 = vmatprep.subr.mxu0 %v5029
    %5061 = vmatpush1.msra.mxu0 %v5028
    %5062 = vmatprep.subr.mxu0 %v5031
    %5063 = vmatpush1.msra.mxu0 %v5030
    %5064 = vmatprep.subr.mxu0 %v5033
    %5065 = vmatpush1.msra.mxu0 %v5032
    %5066 = vmatprep.subr.mxu0 %v5035
    %5067 = vmatpush1.msra.mxu0 %v5034
    %5068 = vmatprep.subr.mxu0 %v5037
    %5069 = vmatpush1.msra.mxu0 %v5036
    %5070 = vmatprep.subr.mxu0 %v5039
    %5071 = vmatpush1.msra.mxu0 %v5038
    %5072 = vmatprep.subr.mxu0 %v5041
    %5073 = vmatpush1.msra.mxu0 %v5040
    %5074 = vmatprep.subr.mxu0 %v5043
    %5075 = vmatpush1.msra.mxu0 %v5042
    %5076 = vmatprep.subr.mxu0 %v5045
    %5077 = vmatpush1.msra.mxu0 %v5044
    %5078 = vmatprep.subr.mxu0 0.0
    %5079 = vmatpush1.msra.mxu0 0.0
    %5080 = vmatprep.subr.mxu0 0.0
    %5081 = vmatpush1.msra.mxu0 0.0
    %5082 = vmatprep.subr.mxu0 0.0
    %5083 = vmatpush1.msra.mxu0 0.0
    %5084 = vmatprep.subr.mxu0 0.0
    %5085 = vmatpush1.msra.mxu0 0.0
    %5086 = vmatprep.subr.mxu0 0.0
    %5087 = vmatpush1.msra.mxu0 0.0
    %5088 = vmatprep.subr.mxu0 0.0
    %5089 = vmatpush1.msra.mxu0 0.0
    %5090 = vmatprep.subr.mxu0 0.0
    %5091 = vmatpush1.msra.mxu0 0.0
    %5092 = vmatprep.subr.mxu0 0.0
    %5093 = vmatpush1.msra.mxu0 0.0
    %5094 = vmatprep.subr.mxu0 0.0
    %5095 = vmatpush1.msra.mxu0 0.0
    %5096 = vmatprep.subr.mxu0 0.0
    %5097 = vmatpush1.msra.mxu0 0.0
    %5098 = vmatprep.subr.mxu0 0.0
    %5099 = vmatpush1.msra.mxu0 0.0
    %5100 = vmatprep.subr.mxu0 0.0
    %5101 = vmatpush1.msra.mxu0 0.0
    %5102 = vmatprep.subr.mxu0 0.0
    %5103 = vmatpush1.msra.mxu0 0.0
    %5104 = vmatprep.subr.mxu0 0.0
    %5105 = vmatpush1.msra.mxu0 0.0
    %5106 = vmatprep.subr.mxu0 0.0
    %5107 = vmatpush1.msra.mxu0 0.0
    %5108 = vmatprep.subr.mxu0 0.0
    %5109 = vmatpush1.msra.mxu0 0.0
    %5110 = vmatprep.mubr.f32.mxu0 0.0
    %5111 = vmatmul.mubr.f32.gmra.mrb[0].mxu0 %v5010
    %v5112 = vpop.f32.mrb[0].mxu0
    %v5113 = vadd.f32 0.0, %v5112
    %v5114 = vpop.f32.mrb[0].mxu0
    %v5115 = vadd.f32 0.0, %v5114
    %5116 = vdwg.mxu0
    %v5117 = vadd.f32 %v4936, %v5113
    %v5118 = vadd.f32 %v4937, %v5115
    %s5119 = scalar_lea.vmem %s8, 16
    %v5120 = vld [vmem:[%s5119] sm:$0x3]
    %v5122 = vsel %vm3674, %v5120, 0
    %5124 = vmatprep.subr.mxu0 0.0
    %5125 = vmatpush1.msra.mxu0 %v3670
    %5126 = vmatprep.subr.mxu0 0.0
    %5127 = vmatpush1.msra.mxu0 %v3671
    %5128 = vmatprep.subr.mxu0 0.0
    %5129 = vmatpush1.msra.mxu0 %v3679
    %5130 = vmatprep.subr.mxu0 0.0
    %5131 = vmatpush1.msra.mxu0 0.0
    %5132 = vmatprep.subr.mxu0 0.0
    %5133 = vmatpush1.msra.mxu0 0.0
    %5134 = vmatprep.subr.mxu0 0.0
    %5135 = vmatpush1.msra.mxu0 0.0
    %5136 = vmatprep.subr.mxu0 0.0
    %5137 = vmatpush1.msra.mxu0 0.0
    %5138 = vmatprep.subr.mxu0 0.0
    %5139 = vmatpush1.msra.mxu0 0.0
    %5140 = vmatprep.subr.mxu0 0.0
    %5141 = vmatpush1.msra.mxu0 0.0
    %5142 = vmatprep.subr.mxu0 0.0
    %5143 = vmatpush1.msra.mxu0 0.0
    %5144 = vmatprep.subr.mxu0 0.0
    %5145 = vmatpush1.msra.mxu0 0.0
    %5146 = vmatprep.subr.mxu0 0.0
    %5147 = vmatpush1.msra.mxu0 0.0
    %5148 = vmatprep.subr.mxu0 0.0
    %5149 = vmatpush1.msra.mxu0 0.0
    %5150 = vmatprep.subr.mxu0 0.0
    %5151 = vmatpush1.msra.mxu0 0.0
    %5152 = vmatprep.subr.mxu0 0.0
    %5153 = vmatpush1.msra.mxu0 0.0
    %5154 = vmatprep.subr.mxu0 0.0
    %5155 = vmatpush1.msra.mxu0 0.0
    %5156 = vmatprep.subr.mxu0 0.0
    %5157 = vmatpush1.msra.mxu0 0.0
    %5158 = vmatprep.subr.mxu0 0.0
    %5159 = vmatpush1.msra.mxu0 0.0
    %5160 = vmatprep.subr.mxu0 0.0
    %5161 = vmatpush1.msra.mxu0 0.0
    %5162 = vmatprep.subr.mxu0 0.0
    %5163 = vmatpush1.msra.mxu0 0.0
    %5164 = vmatprep.subr.mxu0 0.0
    %5165 = vmatpush1.msra.mxu0 0.0
    %5166 = vmatprep.subr.mxu0 0.0
    %5167 = vmatpush1.msra.mxu0 0.0
    %5168 = vmatprep.subr.mxu0 0.0
    %5169 = vmatpush1.msra.mxu0 0.0
    %5170 = vmatprep.subr.mxu0 0.0
    %5171 = vmatpush1.msra.mxu0 0.0
    %5172 = vmatprep.subr.mxu0 0.0
    %5173 = vmatpush1.msra.mxu0 0.0
    %5174 = vmatprep.subr.mxu0 0.0
    %5175 = vmatpush1.msra.mxu0 0.0
    %5176 = vmatprep.subr.mxu0 0.0
    %5177 = vmatpush1.msra.mxu0 0.0
    %5178 = vmatprep.subr.mxu0 0.0
    %5179 = vmatpush1.msra.mxu0 0.0
    %5180 = vmatprep.subr.mxu0 0.0
    %5181 = vmatpush1.msra.mxu0 0.0
    %5182 = vmatprep.subr.mxu0 0.0
    %5183 = vmatpush1.msra.mxu0 0.0
    %5184 = vmatprep.subr.mxu0 0.0
    %5185 = vmatpush1.msra.mxu0 0.0
    %5186 = vmatprep.subr.mxu0 0.0
    %5187 = vmatpush1.msra.mxu0 0.0
    %5188 = vmatprep.mubr.f32.mxu0 0.0
    %5189 = vmatmul.mubr.f32.gmra.mrb[0].mxu0 %v5122
    %v5190 = vpop.f32.mrb[0].mxu0
    %v5191 = vadd.f32 0.0, %v5190
    %v5192 = vpop.f32.mrb[0].mxu0
    %5193 = vdwg.mxu0
    %s5194 = scalar_lea.vmem %s9, 2048
    %v5195 = vld [vmem:[%s5194] sm:$0xff]
    %v5196 = vld [vmem:[%s5194 + $0x8] sm:$0xff]
    %v5197 = vld [vmem:[%s5194 + $0x10] sm:$0xff]
    %v5198 = vld [vmem:[%s5194 + $0x18] sm:$0xff]
    %v5199 = vld [vmem:[%s5194 + $0x20] sm:$0xff]
    %v5200 = vld [vmem:[%s5194 + $0x28] sm:$0xff]
    %v5201 = vld [vmem:[%s5194 + $0x30] sm:$0xff]
    %v5202 = vld [vmem:[%s5194 + $0x38] sm:$0xff]
    %v5203 = vld [vmem:[%s5194 + $0x40] sm:$0xff]
    %v5204 = vld [vmem:[%s5194 + $0x48] sm:$0xff]
    %v5205 = vld [vmem:[%s5194 + $0x50] sm:$0xff]
    %v5206 = vld [vmem:[%s5194 + $0x58] sm:$0xff]
    %v5207 = vld [vmem:[%s5194 + $0x60] sm:$0xff]
    %v5208 = vld [vmem:[%s5194 + $0x68] sm:$0xff]
    %v5209 = vld [vmem:[%s5194 + $0x70] sm:$0xff]
    %v5210 = vld [vmem:[%s5194 + $0x78] sm:$0xff]
    %v5211 = vld [vmem:[%s5194 + $0x80] sm:$0xff]
    %v5212 = vld [vmem:[%s5194 + $0x88] sm:$0xff]
    %v5213 = vld [vmem:[%s5194 + $0x90] sm:$0xff]
    %v5214 = vld [vmem:[%s5194 + $0x98] sm:$0xff]
    %v5215 = vld [vmem:[%s5194 + $0xa0] sm:$0xff]
    %v5216 = vld [vmem:[%s5194 + $0xa8] sm:$0xff]
    %v5217 = vld [vmem:[%s5194 + $0xb0] sm:$0xff]
    %v5218 = vld [vmem:[%s5194 + $0xb8] sm:$0xff]
    %v5219 = vld [vmem:[%s5194 + $0xc0] sm:$0xff]
    %v5220 = vld [vmem:[%s5194 + $0xc8] sm:$0xff]
    %v5221 = vld [vmem:[%s5194 + $0xd0] sm:$0xff]
    %v5222 = vld [vmem:[%s5194 + $0xd8] sm:$0xff]
    %v5223 = vld [vmem:[%s5194 + $0xe0] sm:$0xff]
    %v5224 = vld [vmem:[%s5194 + $0xe8] sm:$0xff]
    %v5225 = vld [vmem:[%s5194 + $0xf0] sm:$0xff]
    %v5226 = vld [vmem:[%s5194 + $0xf8] sm:$0xff]
    %5227 = vmatprep.subr.mxu0 %v5196
    %5228 = vmatpush1.msra.mxu0 %v5195
    %5229 = vmatprep.subr.mxu0 %v5198
    %5230 = vmatpush1.msra.mxu0 %v5197
    %5231 = vmatprep.subr.mxu0 %v5200
    %5232 = vmatpush1.msra.mxu0 %v5199
    %5233 = vmatprep.subr.mxu0 %v5202
    %5234 = vmatpush1.msra.mxu0 %v5201
    %5235 = vmatprep.subr.mxu0 %v5204
    %5236 = vmatpush1.msra.mxu0 %v5203
    %5237 = vmatprep.subr.mxu0 %v5206
    %5238 = vmatpush1.msra.mxu0 %v5205
    %5239 = vmatprep.subr.mxu0 %v5208
    %5240 = vmatpush1.msra.mxu0 %v5207
    %5241 = vmatprep.subr.mxu0 %v5210
    %5242 = vmatpush1.msra.mxu0 %v5209
    %5243 = vmatprep.subr.mxu0 %v5212
    %5244 = vmatpush1.msra.mxu0 %v5211
    %5245 = vmatprep.subr.mxu0 %v5214
    %5246 = vmatpush1.msra.mxu0 %v5213
    %5247 = vmatprep.subr.mxu0 %v5216
    %5248 = vmatpush1.msra.mxu0 %v5215
    %5249 = vmatprep.subr.mxu0 %v5218
    %5250 = vmatpush1.msra.mxu0 %v5217
    %5251 = vmatprep.subr.mxu0 %v5220
    %5252 = vmatpush1.msra.mxu0 %v5219
    %5253 = vmatprep.subr.mxu0 %v5222
    %5254 = vmatpush1.msra.mxu0 %v5221
    %5255 = vmatprep.subr.mxu0 %v5224
    %5256 = vmatpush1.msra.mxu0 %v5223
    %5257 = vmatprep.subr.mxu0 %v5226
    %5258 = vmatpush1.msra.mxu0 %v5225
    %5259 = vmatprep.subr.mxu0 0.0
    %5260 = vmatpush1.msra.mxu0 0.0
    %5261 = vmatprep.subr.mxu0 0.0
    %5262 = vmatpush1.msra.mxu0 0.0
    %5263 = vmatprep.subr.mxu0 0.0
    %5264 = vmatpush1.msra.mxu0 0.0
    %5265 = vmatprep.subr.mxu0 0.0
    %5266 = vmatpush1.msra.mxu0 0.0
    %5267 = vmatprep.subr.mxu0 0.0
    %5268 = vmatpush1.msra.mxu0 0.0
    %5269 = vmatprep.subr.mxu0 0.0
    %5270 = vmatpush1.msra.mxu0 0.0
    %5271 = vmatprep.subr.mxu0 0.0
    %5272 = vmatpush1.msra.mxu0 0.0
    %5273 = vmatprep.subr.mxu0 0.0
    %5274 = vmatpush1.msra.mxu0 0.0
    %5275 = vmatprep.subr.mxu0 0.0
    %5276 = vmatpush1.msra.mxu0 0.0
    %5277 = vmatprep.subr.mxu0 0.0
    %5278 = vmatpush1.msra.mxu0 0.0
    %5279 = vmatprep.subr.mxu0 0.0
    %5280 = vmatpush1.msra.mxu0 0.0
    %5281 = vmatprep.subr.mxu0 0.0
    %5282 = vmatpush1.msra.mxu0 0.0
    %5283 = vmatprep.subr.mxu0 0.0
    %5284 = vmatpush1.msra.mxu0 0.0
    %5285 = vmatprep.subr.mxu0 0.0
    %5286 = vmatpush1.msra.mxu0 0.0
    %5287 = vmatprep.subr.mxu0 0.0
    %5288 = vmatpush1.msra.mxu0 0.0
    %5289 = vmatprep.subr.mxu0 0.0
    %5290 = vmatpush1.msra.mxu0 0.0
    %5291 = vmatprep.mubr.f32.mxu0 0.0
    %5292 = vmatmul.mubr.f32.gmra.mrb[0].mxu0 %v5191
    %v5293 = vpop.f32.mrb[0].mxu0
    %v5294 = vadd.f32 0.0, %v5293
    %v5295 = vpop.f32.mrb[0].mxu0
    %v5296 = vadd.f32 0.0, %v5295
    %5297 = vdwg.mxu0
    %v5298 = vadd.f32 %v5117, %v5294
    %v5299 = vadd.f32 %v5118, %v5296
    %v5300 = vld [vmem:[%s10] sm:$0x3]
    %v5302 = vlaneseq
    %v5303 = vshrl.u32 %v5302, 7
    %v5304 = vsub.s32 0, %v5303
    %v5305 = vrot.slane %v5300, %v5304
    %v5306 = vlaneseq
    %v5307 = vshrl.u32 %v5306, 7
    %v5308 = vsub.s32 1, %v5307
    %v5309 = vrot.slane %v5300, %v5308
    %v5312 = vadd.f32 %v5298, %v5305
    %v5313 = vadd.f32 %v5299, %v5309
    %v5314 = vmax.f32 %v5312, 0.0
    %v5315 = vmax.f32 %v5313, 0.0
    %v5316 = vld [vmem:[%s11] sm:$0xff]
    %v5317 = vld [vmem:[%s11 + $0x8] sm:$0xff]
    %v5318 = vld [vmem:[%s11 + $0x10] sm:$0xff]
    %v5319 = vld [vmem:[%s11 + $0x18] sm:$0xff]
    %v5320 = vld [vmem:[%s11 + $0x20] sm:$0xff]
    %v5321 = vld [vmem:[%s11 + $0x28] sm:$0xff]
    %v5322 = vld [vmem:[%s11 + $0x30] sm:$0xff]
    %v5323 = vld [vmem:[%s11 + $0x38] sm:$0xff]
    %v5324 = vld [vmem:[%s11 + $0x40] sm:$0xff]
    %v5325 = vld [vmem:[%s11 + $0x48] sm:$0xff]
    %v5326 = vld [vmem:[%s11 + $0x50] sm:$0xff]
    %v5327 = vld [vmem:[%s11 + $0x58] sm:$0xff]
    %v5328 = vld [vmem:[%s11 + $0x60] sm:$0xff]
    %v5329 = vld [vmem:[%s11 + $0x68] sm:$0xff]
    %v5330 = vld [vmem:[%s11 + $0x70] sm:$0xff]
    %v5331 = vld [vmem:[%s11 + $0x78] sm:$0xff]
    %v5332 = vld [vmem:[%s11 + $0x80] sm:$0xff]
    %v5333 = vld [vmem:[%s11 + $0x88] sm:$0xff]
    %v5334 = vld [vmem:[%s11 + $0x90] sm:$0xff]
    %v5335 = vld [vmem:[%s11 + $0x98] sm:$0xff]
    %v5336 = vld [vmem:[%s11 + $0xa0] sm:$0xff]
    %v5337 = vld [vmem:[%s11 + $0xa8] sm:$0xff]
    %v5338 = vld [vmem:[%s11 + $0xb0] sm:$0xff]
    %v5339 = vld [vmem:[%s11 + $0xb8] sm:$0xff]
    %v5340 = vld [vmem:[%s11 + $0xc0] sm:$0xff]
    %v5341 = vld [vmem:[%s11 + $0xc8] sm:$0xff]
    %v5342 = vld [vmem:[%s11 + $0xd0] sm:$0xff]
    %v5343 = vld [vmem:[%s11 + $0xd8] sm:$0xff]
    %v5344 = vld [vmem:[%s11 + $0xe0] sm:$0xff]
    %v5345 = vld [vmem:[%s11 + $0xe8] sm:$0xff]
    %v5346 = vld [vmem:[%s11 + $0xf0] sm:$0xff]
    %v5347 = vld [vmem:[%s11 + $0xf8] sm:$0xff]
    %v5348 = vld [vmem:[%s12] sm:$0x1]
    %v5350 = vlaneseq
    %v5351 = vshrl.u32 %v5350, 7
    %v5352 = vsub.s32 0, %v5351
    %v5353 = vrot.slane %v5348, %v5352
    %5355 = vmatprep.subr.mxu0 0.0
    %5356 = vmatpush1.msra.mxu0 %v5316
    %5357 = vmatprep.subr.mxu0 0.0
    %5358 = vmatpush1.msra.mxu0 %v5317
    %5359 = vmatprep.subr.mxu0 0.0
    %5360 = vmatpush1.msra.mxu0 %v5318
    %5361 = vmatprep.subr.mxu0 0.0
    %5362 = vmatpush1.msra.mxu0 %v5319
    %5363 = vmatprep.subr.mxu0 0.0
    %5364 = vmatpush1.msra.mxu0 %v5320
    %5365 = vmatprep.subr.mxu0 0.0
    %5366 = vmatpush1.msra.mxu0 %v5321
    %5367 = vmatprep.subr.mxu0 0.0
    %5368 = vmatpush1.msra.mxu0 %v5322
    %5369 = vmatprep.subr.mxu0 0.0
    %5370 = vmatpush1.msra.mxu0 %v5323
    %5371 = vmatprep.subr.mxu0 0.0
    %5372 = vmatpush1.msra.mxu0 %v5324
    %5373 = vmatprep.subr.mxu0 0.0
    %5374 = vmatpush1.msra.mxu0 %v5325
    %5375 = vmatprep.subr.mxu0 0.0
    %5376 = vmatpush1.msra.mxu0 %v5326
    %5377 = vmatprep.subr.mxu0 0.0
    %5378 = vmatpush1.msra.mxu0 %v5327
    %5379 = vmatprep.subr.mxu0 0.0
    %5380 = vmatpush1.msra.mxu0 %v5328
    %5381 = vmatprep.subr.mxu0 0.0
    %5382 = vmatpush1.msra.mxu0 %v5329
    %5383 = vmatprep.subr.mxu0 0.0
    %5384 = vmatpush1.msra.mxu0 %v5330
    %5385 = vmatprep.subr.mxu0 0.0
    %5386 = vmatpush1.msra.mxu0 %v5331
    %5387 = vmatprep.subr.mxu0 0.0
    %5388 = vmatpush1.msra.mxu0 %v5332
    %5389 = vmatprep.subr.mxu0 0.0
    %5390 = vmatpush1.msra.mxu0 %v5333
    %5391 = vmatprep.subr.mxu0 0.0
    %5392 = vmatpush1.msra.mxu0 %v5334
    %5393 = vmatprep.subr.mxu0 0.0
    %5394 = vmatpush1.msra.mxu0 %v5335
    %5395 = vmatprep.subr.mxu0 0.0
    %5396 = vmatpush1.msra.mxu0 %v5336
    %5397 = vmatprep.subr.mxu0 0.0
    %5398 = vmatpush1.msra.mxu0 %v5337
    %5399 = vmatprep.subr.mxu0 0.0
    %5400 = vmatpush1.msra.mxu0 %v5338
    %5401 = vmatprep.subr.mxu0 0.0
    %5402 = vmatpush1.msra.mxu0 %v5339
    %5403 = vmatprep.subr.mxu0 0.0
    %5404 = vmatpush1.msra.mxu0 %v5340
    %5405 = vmatprep.subr.mxu0 0.0
    %5406 = vmatpush1.msra.mxu0 %v5341
    %5407 = vmatprep.subr.mxu0 0.0
    %5408 = vmatpush1.msra.mxu0 %v5342
    %5409 = vmatprep.subr.mxu0 0.0
    %5410 = vmatpush1.msra.mxu0 %v5343
    %5411 = vmatprep.subr.mxu0 0.0
    %5412 = vmatpush1.msra.mxu0 %v5344
    %5413 = vmatprep.subr.mxu0 0.0
    %5414 = vmatpush1.msra.mxu0 %v5345
    %5415 = vmatprep.subr.mxu0 0.0
    %5416 = vmatpush1.msra.mxu0 %v5346
    %5417 = vmatprep.subr.mxu0 0.0
    %5418 = vmatpush1.msra.mxu0 %v5347
    %5419 = vmatprep.mubr.f32.mxu0 %v5315
    %5420 = vmatmul.mubr.f32.gmra.mrb[0].mxu0 %v5314
    %v5421 = vpop.f32.mrb[0].mxu0
    %v5422 = vadd.f32 %v5353, %v5421
    %v5423 = vpop.f32.mrb[0].mxu0
    %5424 = vdwg.mxu0
    %v5425 = vmax.f32 %v5422, 0.0
    %v5426 = vld [vmem:[%s13] sm:$0xff]
    %v5427 = vld [vmem:[%s13 + $0x8] sm:$0xff]
    %v5428 = vld [vmem:[%s13 + $0x10] sm:$0xff]
    %v5429 = vld [vmem:[%s13 + $0x18] sm:$0xff]
    %v5430 = vld [vmem:[%s13 + $0x20] sm:$0xff]
    %v5431 = vld [vmem:[%s13 + $0x28] sm:$0xff]
    %v5432 = vld [vmem:[%s13 + $0x30] sm:$0xff]
    %v5433 = vld [vmem:[%s13 + $0x38] sm:$0xff]
    %v5434 = vld [vmem:[%s13 + $0x40] sm:$0xff]
    %v5435 = vld [vmem:[%s13 + $0x48] sm:$0xff]
    %v5436 = vld [vmem:[%s13 + $0x50] sm:$0xff]
    %v5437 = vld [vmem:[%s13 + $0x58] sm:$0xff]
    %v5438 = vld [vmem:[%s13 + $0x60] sm:$0xff]
    %v5439 = vld [vmem:[%s13 + $0x68] sm:$0xff]
    %v5440 = vld [vmem:[%s13 + $0x70] sm:$0xff]
    %v5441 = vld [vmem:[%s13 + $0x78] sm:$0xff]
    %v5442 = vld [vmem:[%s14] sm:$0x1]
    %v5444 = vlaneseq
    %v5445 = vshrl.u32 %v5444, 7
    %v5446 = vsub.s32 0, %v5445
    %v5447 = vrot.slane %v5442, %v5446
    %5449 = vmatprep.subr.mxu0 0.0
    %5450 = vmatpush1.msra.mxu0 %v5426
    %5451 = vmatprep.subr.mxu0 0.0
    %5452 = vmatpush1.msra.mxu0 %v5427
    %5453 = vmatprep.subr.mxu0 0.0
    %5454 = vmatpush1.msra.mxu0 %v5428
    %5455 = vmatprep.subr.mxu0 0.0
    %5456 = vmatpush1.msra.mxu0 %v5429
    %5457 = vmatprep.subr.mxu0 0.0
    %5458 = vmatpush1.msra.mxu0 %v5430
    %5459 = vmatprep.subr.mxu0 0.0
    %5460 = vmatpush1.msra.mxu0 %v5431
    %5461 = vmatprep.subr.mxu0 0.0
    %5462 = vmatpush1.msra.mxu0 %v5432
    %5463 = vmatprep.subr.mxu0 0.0
    %5464 = vmatpush1.msra.mxu0 %v5433
    %5465 = vmatprep.subr.mxu0 0.0
    %5466 = vmatpush1.msra.mxu0 %v5434
    %5467 = vmatprep.subr.mxu0 0.0
    %5468 = vmatpush1.msra.mxu0 %v5435
    %5469 = vmatprep.subr.mxu0 0.0
    %5470 = vmatpush1.msra.mxu0 %v5436
    %5471 = vmatprep.subr.mxu0 0.0
    %5472 = vmatpush1.msra.mxu0 %v5437
    %5473 = vmatprep.subr.mxu0 0.0
    %5474 = vmatpush1.msra.mxu0 %v5438
    %5475 = vmatprep.subr.mxu0 0.0
    %5476 = vmatpush1.msra.mxu0 %v5439
    %5477 = vmatprep.subr.mxu0 0.0
    %5478 = vmatpush1.msra.mxu0 %v5440
    %5479 = vmatprep.subr.mxu0 0.0
    %5480 = vmatpush1.msra.mxu0 %v5441
    %5481 = vmatprep.subr.mxu0 0.0
    %5482 = vmatpush1.msra.mxu0 0.0
    %5483 = vmatprep.subr.mxu0 0.0
    %5484 = vmatpush1.msra.mxu0 0.0
    %5485 = vmatprep.subr.mxu0 0.0
    %5486 = vmatpush1.msra.mxu0 0.0
    %5487 = vmatprep.subr.mxu0 0.0
    %5488 = vmatpush1.msra.mxu0 0.0
    %5489 = vmatprep.subr.mxu0 0.0
    %5490 = vmatpush1.msra.mxu0 0.0
    %5491 = vmatprep.subr.mxu0 0.0
    %5492 = vmatpush1.msra.mxu0 0.0
    %5493 = vmatprep.subr.mxu0 0.0
    %5494 = vmatpush1.msra.mxu0 0.0
    %5495 = vmatprep.subr.mxu0 0.0
    %5496 = vmatpush1.msra.mxu0 0.0
    %5497 = vmatprep.subr.mxu0 0.0
    %5498 = vmatpush1.msra.mxu0 0.0
    %5499 = vmatprep.subr.mxu0 0.0
    %5500 = vmatpush1.msra.mxu0 0.0
    %5501 = vmatprep.subr.mxu0 0.0
    %5502 = vmatpush1.msra.mxu0 0.0
    %5503 = vmatprep.subr.mxu0 0.0
    %5504 = vmatpush1.msra.mxu0 0.0
    %5505 = vmatprep.subr.mxu0 0.0
    %5506 = vmatpush1.msra.mxu0 0.0
    %5507 = vmatprep.subr.mxu0 0.0
    %5508 = vmatpush1.msra.mxu0 0.0
    %5509 = vmatprep.subr.mxu0 0.0
    %5510 = vmatpush1.msra.mxu0 0.0
    %5511 = vmatprep.subr.mxu0 0.0
    %5512 = vmatpush1.msra.mxu0 0.0
    %5513 = vmatprep.mubr.f32.mxu0 0.0
    %5514 = vmatmul.mubr.f32.gmra.mrb[0].mxu0 %v5425
    %v5515 = vpop.f32.mrb[0].mxu0
    %v5516 = vadd.f32 %v5447, %v5515
    %v5517 = vpop.f32.mrb[0].mxu0
    %5518 = vdwg.mxu0
    %5519 = vst [vmem:[#allocation2] sm:$0x3] %v5516
    // Predicated region
    $region62: #{pigs_forward.1} parent=1 // pred_check
      _
    $region63: #{pigs_forward.1} parent=1 // pred_check_branch
      %5521 = sbr.rel (0) target = $region65
    $region64: #{pigs_forward.1} parent=1 // pred_region
      %s5523 = ssub.s32 32, 32
      %5524 = vsyncadd [#allocation3], %s5523
      %s5526 = sshll.u32 [#allocation2], 4
      %s5527 = int_to_ptr.vmem [resolvable:$true] %s5526
      %5529 = dma.vmem_to_hbm [thread:$0]  %s5527, 32, %s15, [#allocation3]
    $region65: #{pigs_forward.1} parent=1 // pred_fallthru
      _
    // Predicated region
    $region66: #{pigs_forward.1} parent=1 // pred_check
      _
    $region67: #{pigs_forward.1} parent=1 // pred_check_branch
      %5531 = sbr.rel (0) target = $region69
    $region68: #{pigs_forward.1} parent=1 // pred_region
      %5532 = dma.done [#allocation3], 32
    $region69: #{pigs_forward.1} parent=1 // pred_fallthru
      _
    %5533 = vsyncpa [#allocation3], 1

</llo_original>
